<compile_context>
chip_gen: v7x
topology: tpu7x:2x2x1
jax: 0.10.0
libtpu: 0.0.40
codegen_flags: <defaults>
</compile_context>

<pallas_src>
import functools

import jax
import jax.numpy as jnp
from jax import lax
from jax.experimental import pallas as pl
from jax.experimental.pallas import tpu as pltpu


def _full_spec(a):
    # whole-array block, same tile for every grid step
    return pl.BlockSpec(a.shape, lambda b, _nd=a.ndim: (0,) * _nd)


def _choose_block_b(B, per_row_bytes, fixed_bytes,
                    budget=40 * 1024 * 1024, cap=256):
    divisors = [d for d in range(1, B + 1) if B % d == 0]
    fitting = [d for d in divisors
               if d <= cap and fixed_bytes + d * per_row_bytes <= budget]
    if not fitting:
        return 1
    mult8 = [d for d in fitting if d % 8 == 0]
    return max(mult8) if mult8 else max(fitting)


# ---------------------------------------------------------------------------
# Fused kernel: bi-GRU recurrence + masked pooling + convs + feature concat
#   len_ref : (Bb, 1)   f32 lengths
#   x_ref   : (T, Bb, D) time-major input
#   org_ref : (Bb, D)    videos_origin
#   out_ref : (Bb, 2H + n_win*Cout [+ D])
# ---------------------------------------------------------------------------
def _fused_video_kernel(len_ref, x_ref, org_ref, wih_ref, gib_ref, whh_ref,
                        bhn_ref, *rest, hidden, wins, pool, concate,
                        compute_dtype):
    n_win = len(wins)
    w_refs = [rest[2 * i] for i in range(n_win)]
    b_refs = [rest[2 * i + 1] for i in range(n_win)]
    out_ref = rest[2 * n_win]
    gi_ref = rest[2 * n_win + 1]
    xpf_ref = rest[2 * n_win + 2]          # zero-padded masked fwd hidden states
    xpb_ref = rest[2 * n_win + 3]          # zero-padded masked bwd hidden states

    T, Bb, D = x_ref.shape
    H = hidden
    cd = compute_dtype
    wmax = max(wins)
    pad = wmax - 1
    Tp = T + 2 * pad

    lenv = len_ref[...]                    # (Bb, 1) f32

    # ---- zero only the pad rows of the conv buffers (data region is fully
    #      overwritten by the recurrence every grid step)
    if pad > 0:
        zf = jnp.zeros((pad, Bb, H), jnp.float32)
        xpf_ref[0:pad] = zf
        xpb_ref[0:pad] = zf
        xpf_ref[pad + T:Tp] = zf
        xpb_ref[pad + T:Tp] = zf

    # ---- hoisted input projection (both directions, biases folded), chunked
    wih = wih_ref[...].astype(cd)          # (D, 6H) = [fwd | bwd]
    gib = gib_ref[...]                     # (1, 6H)  b_ih + [b_hr, b_hz, 0]
    tc = min(T, 16)
    for t0 in range(0, T, tc):
        tcur = min(tc, T - t0)
        xc = x_ref[t0:t0 + tcur].reshape(tcur * Bb, D).astype(cd)
        gi = jnp.dot(xc, wih, preferred_element_type=jnp.float32) + gib
        gi_ref[t0:t0 + tcur] = gi.reshape(tcur, Bb, 6 * H)

    # ---- recurrence: one block-diagonal matmul per step for both directions
    whh = whh_ref[...].astype(cd)          # (2H, 6H) block-diagonal
    bhn = bhn_ref[...]                     # (1, 2H)  [b_hn_f | b_hn_b]
    bhn_f = bhn[:, 0:H]
    bhn_b = bhn[:, H:2 * H]

    h0 = jnp.zeros((Bb, 2 * H), jnp.float32)

    def step(i, h):
        tf = i
        tb = T - 1 - i
        gh = jnp.dot(h.astype(cd), whh,
                     preferred_element_type=jnp.float32)        # (Bb, 6H)
        gi_f = gi_ref[tf, :, 0:3 * H]
        gi_b = gi_ref[tb, :, 3 * H:6 * H]
        h_f = h[:, 0:H]
        h_b = h[:, H:2 * H]
        # PyTorch GRU gate order r, z, n ; n uses r * (W_hn h + b_hn)
        r_f = jax.nn.sigmoid(gi_f[:, 0:H] + gh[:, 0:H])
        z_f = jax.nn.sigmoid(gi_f[:, H:2 * H] + gh[:, H:2 * H])
        n_f = jnp.tanh(gi_f[:, 2 * H:3 * H] + r_f * (gh[:, 2 * H:3 * H] + bhn_f))
        hf_new = (1.0 - z_f) * n_f + z_f * h_f
        r_b = jax.nn.sigmoid(gi_b[:, 0:H] + gh[:, 3 * H:4 * H])
        z_b = jax.nn.sigmoid(gi_b[:, H:2 * H] + gh[:, 4 * H:5 * H])
        n_b = jnp.tanh(gi_b[:, 2 * H:3 * H] + r_b * (gh[:, 5 * H:6 * H] + bhn_b))
        hb_new = (1.0 - z_b) * n_b + z_b * h_b
        # masked, lane-dense, direction-separate stores straight into pad buffers
        tf_f = lax.convert_element_type(tf, jnp.float32)
        tb_f = lax.convert_element_type(tb, jnp.float32)
        mf = (lenv > tf_f).astype(jnp.float32)                  # (Bb, 1)
        mb = (lenv > tb_f).astype(jnp.float32)
        xpf_ref[pad + tf] = hf_new * mf
        xpb_ref[pad + tb] = hb_new * mb
        return jnp.concatenate([hf_new, hb_new], axis=1)

    lax.fori_loop(0, T, step, h0, unroll=True if T <= 32 else 8)

    # ---- masked GRU temporal pooling (nn.GRU layout: [fwd | bwd])
    gm_f = xpf_ref[pad:pad + T]            # (T, Bb, H) already masked
    gm_b = xpb_ref[pad:pad + T]
    if pool == 'mean':
        pool_f = jnp.sum(gm_f, axis=0) / lenv
        pool_b = jnp.sum(gm_b, axis=0) / lenv
    else:                                  # 'max': torch.max(g*mask, 1)[0]
        pool_f = jnp.max(gm_f, axis=0)
        pool_b = jnp.max(gm_b, axis=0)
    pieces = [pool_f, pool_b]

    # ---- per window size: im2col matmul + bias + ReLU + global time max-pool
    for wi, win in enumerate(wins):
        w = w_refs[wi][...].astype(cd)     # (2*win*H, Cout), direction-major K
        bias = b_refs[wi][...]             # (1, Cout)
        cout = w.shape[1]
        tout = T + win - 1                 # PyTorch Conv2d output length
        start = pad - (win - 1)            # align shared max-padding
        cols = ([xpf_ref[start + k:start + k + tout] for k in range(win)]
                + [xpb_ref[start + k:start + k + tout] for k in range(win)])
        slab = jnp.concatenate(cols, axis=-1).reshape(
            tout * Bb, 2 * win * H).astype(cd)
        acc = jnp.dot(slab, w, preferred_element_type=jnp.float32)
        acc = jax.nn.relu(acc + bias).reshape(tout, Bb, cout)
        pieces.append(jnp.max(acc, axis=0))

    if concate == 'full':
        pieces.append(org_ref[...])        # org_out appended in-kernel

    # nn.Dropout: identity at inference time.
    out_ref[...] = jnp.concatenate(pieces, axis=1)   # one wide store


# ---------------------------------------------------------------------------
# Full forward (mirrors Video_multilevel_encoding.forward)
# ---------------------------------------------------------------------------
def video_multilevel_encoding(videos, videos_origin, lengths, videos_mask, params,
                              *, gru_pool='mean', concate='full',
                              block_b=None, compute_dtype=jnp.float32):
    # videos_mask is the prefix mask derived from lengths; the kernel rebuilds it
    # in-place from `lengths`, so the (B,T) mask tensor is never DMA'd.
    del videos_mask
    B, T, D = videos.shape
    H = params['bhn'].shape[1] // 2
    wins = params['kernel_sizes']
    cout = params['conv_b'][0].shape[1]
    wmax = max(wins)
    C2 = 2 * H
    Tp = T + 2 * (wmax - 1)
    out_dim = C2 + len(wins) * cout + (D if concate == 'full' else 0)

    if block_b is None:
        # bytes per batch row (double-buffered I/O tiles + scratch)
        per_row = 4 * (2 * T * D + 2 * D + 2 * out_dim + T * 6 * H
                       + 2 * Tp * H + 2)
        fixed = 4 * 2 * (D * 6 * H + 2 * H * 6 * H
                         + sum(2 * w * H * cout for w in wins)
                         + 8 * H + len(wins) * cout)
        block_b = _choose_block_b(B, per_row, fixed)
    assert B % block_b == 0

    x_tbd = jnp.transpose(videos, (1, 0, 2))                 # (T, B, D)
    len_f = lengths.astype(jnp.float32).reshape(B, 1)

    in_specs = [pl.BlockSpec((block_b, 1), lambda b: (b, 0)),
                pl.BlockSpec((T, block_b, D), lambda b: (0, b, 0)),
                pl.BlockSpec((block_b, D), lambda b: (b, 0)),
                _full_spec(params['wih']), _full_spec(params['gib']),
                _full_spec(params['whh']), _full_spec(params['bhn'])]
    args = [len_f, x_tbd, videos_origin, params['wih'], params['gib'],
            params['whh'], params['bhn']]
    for w, bb in zip(params['conv_w'], params['conv_b']):
        in_specs += [_full_spec(w), _full_spec(bb)]
        args += [w, bb]

    return pl.pallas_call(
        functools.partial(_fused_video_kernel, hidden=H, wins=wins,
                          pool=gru_pool, concate=concate,
                          compute_dtype=compute_dtype),
        out_shape=jax.ShapeDtypeStruct((B, out_dim), jnp.float32),
        grid=(B // block_b,),
        in_specs=in_specs,
        out_specs=pl.BlockSpec((block_b, out_dim), lambda b: (b, 0)),
        scratch_shapes=[pltpu.VMEM((T, block_b, 6 * H), jnp.float32),
                        pltpu.VMEM((Tp, block_b, H), jnp.float32),
                        pltpu.VMEM((Tp, block_b, H), jnp.float32)],
        compiler_params=pltpu.CompilerParams(
            dimension_semantics=("parallel",),
            vmem_limit_bytes=64 * 1024 * 1024),
    )(*args)


# ---------------------------------------------------------------------------
# Parameter construction: "raw" PyTorch-style params + fused kernel layouts
# ---------------------------------------------------------------------------
def init_params(key, visual_feat_dim, visual_rnn_size, visual_kernel_num,
                kernel_sizes):
    D, H = visual_feat_dim, visual_rnn_size
    C2 = 2 * H
    n = len(kernel_sizes)
    keys = jax.random.split(key, 8 + 2 * n)
    s = 1.0 / float(H) ** 0.5

    def u(k, shape, scale):
        return jax.random.uniform(k, shape, jnp.float32, -scale, scale)

    raw = dict(
        wih_f=u(keys[0], (D, 3 * H), s), whh_f=u(keys[1], (H, 3 * H), s),
        bih_f=u(keys[2], (3 * H,), s),   bhh_f=u(keys[3], (3 * H,), s),
        wih_b=u(keys[4], (D, 3 * H), s), whh_b=u(keys[5], (H, 3 * H), s),
        bih_b=u(keys[6], (3 * H,), s),   bhh_b=u(keys[7], (3 * H,), s),
        conv_w=[], conv_b=[], kernel_sizes=tuple(kernel_sizes),
    )
    for i, win in enumerate(kernel_sizes):
        cs = 1.0 / float(win * C2) ** 0.5
        # Conv2d weight (Cout, 1, win, 2H) stored as (win, 2H, Cout)
        raw['conv_w'].append(u(keys[8 + 2 * i], (win, C2, visual_kernel_num), cs))
        raw['conv_b'].append(u(keys[9 + 2 * i], (visual_kernel_num,), cs))
    return raw


def fuse_params(raw):
    """Build the fused layouts the kernel consumes."""
    H = raw['whh_f'].shape[0]
    wih = jnp.concatenate([raw['wih_f'], raw['wih_b']], axis=1)     # (D, 6H)

    def fold_bias(bih, bhh):
        # fold b_hr, b_hz into the input-projection bias (b_hn stays separate)
        return bih + jnp.concatenate([bhh[:2 * H], jnp.zeros((H,), jnp.float32)])

    gib = jnp.concatenate([fold_bias(raw['bih_f'], raw['bhh_f']),
                           fold_bias(raw['bih_b'], raw['bhh_b'])])[None, :]
    whh = jnp.zeros((2 * H, 6 * H), jnp.float32)
    whh = whh.at[0:H, 0:3 * H].set(raw['whh_f'])
    whh = whh.at[H:2 * H, 3 * H:6 * H].set(raw['whh_b'])
    bhn = jnp.concatenate([raw['bhh_f'][2 * H:], raw['bhh_b'][2 * H:]])[None, :]

    conv_w, conv_b = [], []
    for w, b in zip(raw['conv_w'], raw['conv_b']):
        win, C2, cout = w.shape
        # (win, 2H, Cout) -> direction-major im2col weight (2*win*H, Cout)
        w2 = (w.reshape(win, 2, C2 // 2, cout)
               .transpose(1, 0, 2, 3)
               .reshape(2 * win * (C2 // 2), cout))
        conv_w.append(w2)
        conv_b.append(b[None, :])
    return dict(wih=wih, gib=gib, whh=whh, bhn=bhn,
                conv_w=conv_w, conv_b=conv_b,
                kernel_sizes=raw['kernel_sizes'])


# ---------------------------------------------------------------------------
# Pure-JAX reference (mirrors the PyTorch forward) for validation
# ---------------------------------------------------------------------------
def reference_forward(videos, videos_origin, lengths, videos_mask, raw, *,
                      gru_pool, concate):
    B, T, D = videos.shape
    H = raw['whh_f'].shape[0]
    hp = jax.lax.Precision.HIGHEST

    def run_dir(wih, bih, whh, bhh, reverse):
        xs = jnp.transpose(videos, (1, 0, 2))
        if reverse:
            xs = xs[::-1]

        def cell(h, xt):
            gi = jnp.dot(xt, wih, precision=hp) + bih
            gh = jnp.dot(h, whh, precision=hp) + bhh
            r = jax.nn.sigmoid(gi[:, :H] + gh[:, :H])
            z = jax.nn.sigmoid(gi[:, H:2 * H] + gh[:, H:2 * H])
            n_ = jnp.tanh(gi[:, 2 * H:] + r * gh[:, 2 * H:])
            hn = (1.0 - z) * n_ + z * h
            return hn, hn

        _, hs = lax.scan(cell, jnp.zeros((B, H), jnp.float32), xs)
        if reverse:
            hs = hs[::-1]
        return jnp.transpose(hs, (1, 0, 2))

    g = jnp.concatenate(
        [run_dir(raw['wih_f'], raw['bih_f'], raw['whh_f'], raw['bhh_f'], False),
         run_dir(raw['wih_b'], raw['bih_b'], raw['whh_b'], raw['bhh_b'], True)],
        axis=-1)                                             # (B, T, 2H)
    mask = videos_mask[:, :, None]
    gm = g * mask
    if gru_pool == 'mean':
        gru_out = jnp.sum(gm, 1) / lengths.astype(jnp.float32)[:, None]
    else:
        gru_out = jnp.max(gm, 1)

    cons = []
    for win, w, b in zip(raw['kernel_sizes'], raw['conv_w'], raw['conv_b']):
        C2, cout = w.shape[1], w.shape[2]
        pad = win - 1
        xpad = jnp.pad(gm, ((0, 0), (pad, pad), (0, 0)))
        tout = T + win - 1
        outs = []
        for t in range(tout):
            wind = xpad[:, t:t + win, :].reshape(B, win * C2)
            outs.append(jnp.dot(wind, w.reshape(win * C2, cout), precision=hp) + b)
        c = jax.nn.relu(jnp.stack(outs, 1))                  # (B, tout, Cout)
        cons.append(jnp.max(c, 1))
    feats = [gru_out, jnp.concatenate(cons, 1)]
    if concate == 'full':
        feats.append(videos_origin)
    return jnp.concatenate(feats, 1)


if __name__ == "__main__":
    # opt: visual_feat_dim=32, visual_rnn_size=16, visual_kernel_num=16,
    #      visual_kernel_sizes=(2,3,4), gru_pool='mean', concate='full'
    B, T, D, H, Cout = 2, 8, 32, 16, 16
    kernel_sizes = (2, 3, 4)

    key = jax.random.PRNGKey(0)
    k_param, k_vid = jax.random.split(key)
    raw = init_params(k_param, D, H, Cout, kernel_sizes)
    params = fuse_params(raw)

    lengths = jnp.array([8, 5], dtype=jnp.int32)
    videos_mask = (jnp.arange(T)[None, :] < lengths[:, None]).astype(jnp.float32)
    videos = jax.random.normal(k_vid, (B, T, D), jnp.float32) * videos_mask[:, :, None]
    videos_origin = jnp.sum(videos, axis=1) / jnp.sum(videos_mask, axis=1,
                                                      keepdims=True)

    features = video_multilevel_encoding(videos, videos_origin, lengths,
                                         videos_mask, params,
                                         gru_pool='mean', concate='full')
    features = jax.block_until_ready(features)

    expected_dim = 2 * H + len(kernel_sizes) * Cout + D    # 32 + 48 + 32 = 112
    assert features.shape == (B, expected_dim), features.shape
    assert bool(jnp.all(jnp.isfinite(features)))

    ref = reference_forward(videos, videos_origin, lengths, videos_mask, raw,
                            gru_pool='mean', concate='full')
    err = float(jnp.max(jnp.abs(features - ref)))
    assert err < 1e-2, f"max abs err vs reference: {err}"
    print("KERNEL_OK")
</pallas_src>

<mosaic_0001>
module attributes {stable_mosaic.version = 11 : i64} {
  func.func @_fused_video_kernel(%arg0: i32, %arg1: memref<2x1xf32, #tpu.memory_space<vmem>>, %arg2: memref<8x2x32xf32, #tpu.memory_space<vmem>>, %arg3: memref<2x32xf32, #tpu.memory_space<vmem>>, %arg4: memref<32x96xf32, #tpu.memory_space<vmem>>, %arg5: memref<1x96xf32, #tpu.memory_space<vmem>>, %arg6: memref<32x96xf32, #tpu.memory_space<vmem>>, %arg7: memref<1x32xf32, #tpu.memory_space<vmem>>, %arg8: memref<64x16xf32, #tpu.memory_space<vmem>>, %arg9: memref<1x16xf32, #tpu.memory_space<vmem>>, %arg10: memref<96x16xf32, #tpu.memory_space<vmem>>, %arg11: memref<1x16xf32, #tpu.memory_space<vmem>>, %arg12: memref<128x16xf32, #tpu.memory_space<vmem>>, %arg13: memref<1x16xf32, #tpu.memory_space<vmem>>, %arg14: memref<2x112xf32, #tpu.memory_space<vmem>>, %arg15: memref<8x2x96xf32, #tpu.memory_space<vmem>>, %arg16: memref<14x2x16xf32, #tpu.memory_space<vmem>>, %arg17: memref<14x2x16xf32, #tpu.memory_space<vmem>>) attributes {dimension_semantics = [#tpu.dimension_semantics<parallel>], iteration_bounds = array<i64: 1>, scalar_prefetch = 0 : i64, scratch_operands = 3 : i64, tpu.core_type = #tpu.core_type<tc>, window_params = [{transform_indices = @transform_0, window_bounds = array<i64: 2, 1>}, {transform_indices = @transform_1, window_bounds = array<i64: 8, 2, 32>}, {transform_indices = @transform_2, window_bounds = array<i64: 2, 32>}, {pipeline_mode = #tpu.pipeline_mode<synchronous>, transform_indices = @transform_3, window_bounds = array<i64: 32, 96>}, {pipeline_mode = #tpu.pipeline_mode<synchronous>, transform_indices = @transform_4, window_bounds = array<i64: 1, 96>}, {pipeline_mode = #tpu.pipeline_mode<synchronous>, transform_indices = @transform_5, window_bounds = array<i64: 32, 96>}, {pipeline_mode = #tpu.pipeline_mode<synchronous>, transform_indices = @transform_6, window_bounds = array<i64: 1, 32>}, {pipeline_mode = #tpu.pipeline_mode<synchronous>, transform_indices = @transform_7, window_bounds = array<i64: 64, 16>}, {pipeline_mode = #tpu.pipeline_mode<synchronous>, transform_indices = @transform_8, window_bounds = array<i64: 1, 16>}, {pipeline_mode = #tpu.pipeline_mode<synchronous>, transform_indices = @transform_9, window_bounds = array<i64: 96, 16>}, {pipeline_mode = #tpu.pipeline_mode<synchronous>, transform_indices = @transform_10, window_bounds = array<i64: 1, 16>}, {pipeline_mode = #tpu.pipeline_mode<synchronous>, transform_indices = @transform_11, window_bounds = array<i64: 128, 16>}, {pipeline_mode = #tpu.pipeline_mode<synchronous>, transform_indices = @transform_12, window_bounds = array<i64: 1, 16>}, {transform_indices = @transform_13, window_bounds = array<i64: 2, 112>}]} {
    %c0 = arith.constant 0 : index
    %c0_0 = arith.constant 0 : index
    %0 = vector.load %arg1[%c0, %c0_0] : memref<2x1xf32, #tpu.memory_space<vmem>>, vector<2x1xf32>
    %cst = arith.constant 0.000000e+00 : f32
    %1 = vector.broadcast %cst : f32 to vector<3x2x16xf32>
    %c0_1 = arith.constant 0 : index
    %c0_2 = arith.constant 0 : index
    %c0_3 = arith.constant 0 : index
    %2 = vector.load %arg16[%c0_1, %c0_2, %c0_3] : memref<14x2x16xf32, #tpu.memory_space<vmem>>, vector<3x2x16xf32>
    tpu.vector_store %arg16[%c0_1, %c0_2, %c0_3], %1 {strides = array<i32>} : memref<14x2x16xf32, #tpu.memory_space<vmem>>, vector<3x2x16xf32>,
    %c0_4 = arith.constant 0 : index
    %c0_5 = arith.constant 0 : index
    %c0_6 = arith.constant 0 : index
    %3 = vector.load %arg17[%c0_4, %c0_5, %c0_6] : memref<14x2x16xf32, #tpu.memory_space<vmem>>, vector<3x2x16xf32>
    tpu.vector_store %arg17[%c0_4, %c0_5, %c0_6], %1 {strides = array<i32>} : memref<14x2x16xf32, #tpu.memory_space<vmem>>, vector<3x2x16xf32>,
    %c11 = arith.constant 11 : index
    %c0_7 = arith.constant 0 : index
    %c0_8 = arith.constant 0 : index
    %4 = vector.load %arg16[%c11, %c0_7, %c0_8] : memref<14x2x16xf32, #tpu.memory_space<vmem>>, vector<3x2x16xf32>
    tpu.vector_store %arg16[%c11, %c0_7, %c0_8], %1 {strides = array<i32>} : memref<14x2x16xf32, #tpu.memory_space<vmem>>, vector<3x2x16xf32>,
    %c11_9 = arith.constant 11 : index
    %c0_10 = arith.constant 0 : index
    %c0_11 = arith.constant 0 : index
    %5 = vector.load %arg17[%c11_9, %c0_10, %c0_11] : memref<14x2x16xf32, #tpu.memory_space<vmem>>, vector<3x2x16xf32>
    tpu.vector_store %arg17[%c11_9, %c0_10, %c0_11], %1 {strides = array<i32>} : memref<14x2x16xf32, #tpu.memory_space<vmem>>, vector<3x2x16xf32>,
    %c0_12 = arith.constant 0 : index
    %c0_13 = arith.constant 0 : index
    %6 = vector.load %arg4[%c0_12, %c0_13] : memref<32x96xf32, #tpu.memory_space<vmem>>, vector<32x96xf32>
    %c0_14 = arith.constant 0 : index
    %c0_15 = arith.constant 0 : index
    %7 = vector.load %arg5[%c0_14, %c0_15] : memref<1x96xf32, #tpu.memory_space<vmem>>, vector<1x96xf32>
    %c0_16 = arith.constant 0 : index
    %c0_17 = arith.constant 0 : index
    %c0_18 = arith.constant 0 : index
    %8 = vector.load %arg2[%c0_16, %c0_17, %c0_18] : memref<8x2x32xf32, #tpu.memory_space<vmem>>, vector<8x2x32xf32>
    %9 = vector.shape_cast %8 : vector<8x2x32xf32> to vector<16x32xf32>
    %cst_19 = arith.constant dense<0.000000e+00> : vector<16x96xf32>
    %10 = tpu.matmul %9, %6, %cst_19 {dimension_numbers = #tpu.dot_dimension_numbers<[1], [0], [0], [1], [0, 0, 1, 1], [], []>} : vector<16x32xf32>, vector<32x96xf32>, vector<16x96xf32> -> vector<16x96xf32>
    %11 = vector.broadcast %7 : vector<1x96xf32> to vector<16x96xf32>
    %12 = arith.addf %10, %11 : vector<16x96xf32>
    %13 = vector.shape_cast %12 : vector<16x96xf32> to vector<8x2x96xf32>
    %c0_20 = arith.constant 0 : index
    %c0_21 = arith.constant 0 : index
    %c0_22 = arith.constant 0 : index
    %14 = vector.load %arg15[%c0_20, %c0_21, %c0_22] : memref<8x2x96xf32, #tpu.memory_space<vmem>>, vector<8x2x96xf32>
    tpu.vector_store %arg15[%c0_20, %c0_21, %c0_22], %13 {strides = array<i32>} : memref<8x2x96xf32, #tpu.memory_space<vmem>>, vector<8x2x96xf32>,
    %c0_23 = arith.constant 0 : index
    %c0_24 = arith.constant 0 : index
    %15 = vector.load %arg6[%c0_23, %c0_24] : memref<32x96xf32, #tpu.memory_space<vmem>>, vector<32x96xf32>
    %c0_25 = arith.constant 0 : index
    %c0_26 = arith.constant 0 : index
    %16 = vector.load %arg7[%c0_25, %c0_26] : memref<1x32xf32, #tpu.memory_space<vmem>>, vector<1x32xf32>
    %17 = vector.extract_strided_slice %16 {offsets = [0, 0], sizes = [1, 16], strides = [1, 1]} : vector<1x32xf32> to vector<1x16xf32>
    %18 = vector.extract_strided_slice %16 {offsets = [0, 16], sizes = [1, 16], strides = [1, 1]} : vector<1x32xf32> to vector<1x16xf32>
    %cst_27 = arith.constant 0.000000e+00 : f32
    %19 = vector.broadcast %cst_27 : f32 to vector<2x32xf32>
    %c0_i32 = arith.constant 0 : i32
    %c7_i32 = arith.constant 7 : i32
    %20 = arith.subi %c7_i32, %c0_i32 : i32
    %cst_28 = arith.constant dense<0.000000e+00> : vector<2x96xf32>
    %21 = tpu.matmul %19, %15, %cst_28 {dimension_numbers = #tpu.dot_dimension_numbers<[1], [0], [0], [1], [0, 0, 1, 1], [], []>} : vector<2x32xf32>, vector<32x96xf32>, vector<2x96xf32> -> vector<2x96xf32>
    %22 = arith.index_cast %c0_i32 : i32 to index
    %c0_29 = arith.constant 0 : index
    %c0_30 = arith.constant 0 : index
    %23 = vector.load %arg15[%22, %c0_29, %c0_30] : memref<8x2x96xf32, #tpu.memory_space<vmem>>, vector<1x2x48xf32>
    %24 = vector.shape_cast %23 : vector<1x2x48xf32> to vector<2x48xf32>
    %25 = arith.index_cast %20 : i32 to index
    %c0_31 = arith.constant 0 : index
    %c48 = arith.constant 48 : index
    %26 = vector.load %arg15[%25, %c0_31, %c48] : memref<8x2x96xf32, #tpu.memory_space<vmem>>, vector<1x2x48xf32>
    %27 = vector.shape_cast %26 : vector<1x2x48xf32> to vector<2x48xf32>
    %28 = vector.extract_strided_slice %19 {offsets = [0, 0], sizes = [2, 16], strides = [1, 1]} : vector<2x32xf32> to vector<2x16xf32>
    %29 = vector.extract_strided_slice %19 {offsets = [0, 16], sizes = [2, 16], strides = [1, 1]} : vector<2x32xf32> to vector<2x16xf32>
    %30 = vector.extract_strided_slice %24 {offsets = [0, 0], sizes = [2, 16], strides = [1, 1]} : vector<2x48xf32> to vector<2x16xf32>
    %31 = vector.extract_strided_slice %21 {offsets = [0, 0], sizes = [2, 16], strides = [1, 1]} : vector<2x96xf32> to vector<2x16xf32>
    %32 = arith.addf %30, %31 : vector<2x16xf32>
    %33 = arith.negf %32 : vector<2x16xf32>
    %34 = math.exp %33 : vector<2x16xf32>
    %cst_32 = arith.constant 1.000000e+00 : f32
    %35 = vector.broadcast %cst_32 : f32 to vector<2x16xf32>
    %36 = arith.addf %35, %34 : vector<2x16xf32>
    %37 = arith.divf %35, %36 : vector<2x16xf32>
    %38 = vector.extract_strided_slice %24 {offsets = [0, 16], sizes = [2, 16], strides = [1, 1]} : vector<2x48xf32> to vector<2x16xf32>
    %39 = vector.extract_strided_slice %21 {offsets = [0, 16], sizes = [2, 16], strides = [1, 1]} : vector<2x96xf32> to vector<2x16xf32>
    %40 = arith.addf %38, %39 : vector<2x16xf32>
    %41 = arith.negf %40 : vector<2x16xf32>
    %42 = math.exp %41 : vector<2x16xf32>
    %cst_33 = arith.constant 1.000000e+00 : f32
    %43 = vector.broadcast %cst_33 : f32 to vector<2x16xf32>
    %44 = arith.addf %43, %42 : vector<2x16xf32>
    %45 = arith.divf %43, %44 : vector<2x16xf32>
    %46 = vector.extract_strided_slice %24 {offsets = [0, 32], sizes = [2, 16], strides = [1, 1]} : vector<2x48xf32> to vector<2x16xf32>
    %47 = vector.extract_strided_slice %21 {offsets = [0, 32], sizes = [2, 16], strides = [1, 1]} : vector<2x96xf32> to vector<2x16xf32>
    %48 = vector.broadcast %17 : vector<1x16xf32> to vector<2x16xf32>
    %49 = arith.addf %47, %48 : vector<2x16xf32>
    %50 = arith.mulf %37, %49 : vector<2x16xf32>
    %51 = arith.addf %46, %50 : vector<2x16xf32>
    %52 = math.tanh %51 : vector<2x16xf32>
    %cst_34 = arith.constant 1.000000e+00 : f32
    %53 = vector.broadcast %cst_34 : f32 to vector<2x16xf32>
    %54 = arith.subf %53, %45 : vector<2x16xf32>
    %55 = arith.mulf %54, %52 : vector<2x16xf32>
    %56 = arith.mulf %45, %28 : vector<2x16xf32>
    %57 = arith.addf %55, %56 : vector<2x16xf32>
    %58 = vector.extract_strided_slice %27 {offsets = [0, 0], sizes = [2, 16], strides = [1, 1]} : vector<2x48xf32> to vector<2x16xf32>
    %59 = vector.extract_strided_slice %21 {offsets = [0, 48], sizes = [2, 16], strides = [1, 1]} : vector<2x96xf32> to vector<2x16xf32>
    %60 = arith.addf %58, %59 : vector<2x16xf32>
    %61 = arith.negf %60 : vector<2x16xf32>
    %62 = math.exp %61 : vector<2x16xf32>
    %cst_35 = arith.constant 1.000000e+00 : f32
    %63 = vector.broadcast %cst_35 : f32 to vector<2x16xf32>
    %64 = arith.addf %63, %62 : vector<2x16xf32>
    %65 = arith.divf %63, %64 : vector<2x16xf32>
    %66 = vector.extract_strided_slice %27 {offsets = [0, 16], sizes = [2, 16], strides = [1, 1]} : vector<2x48xf32> to vector<2x16xf32>
    %67 = vector.extract_strided_slice %21 {offsets = [0, 64], sizes = [2, 16], strides = [1, 1]} : vector<2x96xf32> to vector<2x16xf32>
    %68 = arith.addf %66, %67 : vector<2x16xf32>
    %69 = arith.negf %68 : vector<2x16xf32>
    %70 = math.exp %69 : vector<2x16xf32>
    %cst_36 = arith.constant 1.000000e+00 : f32
    %71 = vector.broadcast %cst_36 : f32 to vector<2x16xf32>
    %72 = arith.addf %71, %70 : vector<2x16xf32>
    %73 = arith.divf %71, %72 : vector<2x16xf32>
    %74 = vector.extract_strided_slice %27 {offsets = [0, 32], sizes = [2, 16], strides = [1, 1]} : vector<2x48xf32> to vector<2x16xf32>
    %75 = vector.extract_strided_slice %21 {offsets = [0, 80], sizes = [2, 16], strides = [1, 1]} : vector<2x96xf32> to vector<2x16xf32>
    %76 = vector.broadcast %18 : vector<1x16xf32> to vector<2x16xf32>
    %77 = arith.addf %75, %76 : vector<2x16xf32>
    %78 = arith.mulf %65, %77 : vector<2x16xf32>
    %79 = arith.addf %74, %78 : vector<2x16xf32>
    %80 = math.tanh %79 : vector<2x16xf32>
    %cst_37 = arith.constant 1.000000e+00 : f32
    %81 = vector.broadcast %cst_37 : f32 to vector<2x16xf32>
    %82 = arith.subf %81, %73 : vector<2x16xf32>
    %83 = arith.mulf %82, %80 : vector<2x16xf32>
    %84 = arith.mulf %73, %29 : vector<2x16xf32>
    %85 = arith.addf %83, %84 : vector<2x16xf32>
    %86 = arith.sitofp %c0_i32 : i32 to f32
    %87 = arith.sitofp %20 : i32 to f32
    %88 = vector.broadcast %86 : f32 to vector<2x1xf32>
    %89 = arith.cmpf ogt, %0, %88 : vector<2x1xf32>
    %90 = arith.extui %89 : vector<2x1xi1> to vector<2x1xi32>
    %91 = arith.sitofp %90 : vector<2x1xi32> to vector<2x1xf32>
    %92 = vector.broadcast %87 : f32 to vector<2x1xf32>
    %93 = arith.cmpf ogt, %0, %92 : vector<2x1xf32>
    %94 = arith.extui %93 : vector<2x1xi1> to vector<2x1xi32>
    %95 = arith.sitofp %94 : vector<2x1xi32> to vector<2x1xf32>
    %96 = vector.broadcast %91 : vector<2x1xf32> to vector<2x16xf32>
    %97 = arith.mulf %57, %96 : vector<2x16xf32>
    %c3_i32 = arith.constant 3 : i32
    %98 = arith.addi %c3_i32, %c0_i32 : i32
    %99 = arith.index_cast %98 : i32 to index
    %c0_38 = arith.constant 0 : index
    %c0_39 = arith.constant 0 : index
    %100 = vector.load %arg16[%99, %c0_38, %c0_39] : memref<14x2x16xf32, #tpu.memory_space<vmem>>, vector<1x2x16xf32>
    %101 = vector.shape_cast %100 : vector<1x2x16xf32> to vector<2x16xf32>
    %102 = vector.shape_cast %97 : vector<2x16xf32> to vector<1x2x16xf32>
    tpu.vector_store %arg16[%99, %c0_38, %c0_39], %102 {strides = array<i32>} : memref<14x2x16xf32, #tpu.memory_space<vmem>>, vector<1x2x16xf32>,
    %103 = vector.broadcast %95 : vector<2x1xf32> to vector<2x16xf32>
    %104 = arith.mulf %85, %103 : vector<2x16xf32>
    %c3_i32_40 = arith.constant 3 : i32
    %105 = arith.addi %c3_i32_40, %20 : i32
    %106 = arith.index_cast %105 : i32 to index
    %c0_41 = arith.constant 0 : index
    %c0_42 = arith.constant 0 : index
    %107 = vector.load %arg17[%106, %c0_41, %c0_42] : memref<14x2x16xf32, #tpu.memory_space<vmem>>, vector<1x2x16xf32>
    %108 = vector.shape_cast %107 : vector<1x2x16xf32> to vector<2x16xf32>
    %109 = vector.shape_cast %104 : vector<2x16xf32> to vector<1x2x16xf32>
    tpu.vector_store %arg17[%106, %c0_41, %c0_42], %109 {strides = array<i32>} : memref<14x2x16xf32, #tpu.memory_space<vmem>>, vector<1x2x16xf32>,
    %110 = tpu.concatenate %57, %85 in 1 : vector<2x16xf32>, vector<2x16xf32> -> vector<2x32xf32>
    %c1_i32 = arith.constant 1 : i32
    %c7_i32_43 = arith.constant 7 : i32
    %111 = arith.subi %c7_i32_43, %c1_i32 : i32
    %cst_44 = arith.constant dense<0.000000e+00> : vector<2x96xf32>
    %112 = tpu.matmul %110, %15, %cst_44 {dimension_numbers = #tpu.dot_dimension_numbers<[1], [0], [0], [1], [0, 0, 1, 1], [], []>} : vector<2x32xf32>, vector<32x96xf32>, vector<2x96xf32> -> vector<2x96xf32>
    %113 = arith.index_cast %c1_i32 : i32 to index
    %c0_45 = arith.constant 0 : index
    %c0_46 = arith.constant 0 : index
    %114 = vector.load %arg15[%113, %c0_45, %c0_46] : memref<8x2x96xf32, #tpu.memory_space<vmem>>, vector<1x2x48xf32>
    %115 = vector.shape_cast %114 : vector<1x2x48xf32> to vector<2x48xf32>
    %116 = arith.index_cast %111 : i32 to index
    %c0_47 = arith.constant 0 : index
    %c48_48 = arith.constant 48 : index
    %117 = vector.load %arg15[%116, %c0_47, %c48_48] : memref<8x2x96xf32, #tpu.memory_space<vmem>>, vector<1x2x48xf32>
    %118 = vector.shape_cast %117 : vector<1x2x48xf32> to vector<2x48xf32>
    %119 = vector.extract_strided_slice %110 {offsets = [0, 0], sizes = [2, 16], strides = [1, 1]} : vector<2x32xf32> to vector<2x16xf32>
    %120 = vector.extract_strided_slice %110 {offsets = [0, 16], sizes = [2, 16], strides = [1, 1]} : vector<2x32xf32> to vector<2x16xf32>
    %121 = vector.extract_strided_slice %115 {offsets = [0, 0], sizes = [2, 16], strides = [1, 1]} : vector<2x48xf32> to vector<2x16xf32>
    %122 = vector.extract_strided_slice %112 {offsets = [0, 0], sizes = [2, 16], strides = [1, 1]} : vector<2x96xf32> to vector<2x16xf32>
    %123 = arith.addf %121, %122 : vector<2x16xf32>
    %124 = arith.negf %123 : vector<2x16xf32>
    %125 = math.exp %124 : vector<2x16xf32>
    %cst_49 = arith.constant 1.000000e+00 : f32
    %126 = vector.broadcast %cst_49 : f32 to vector<2x16xf32>
    %127 = arith.addf %126, %125 : vector<2x16xf32>
    %128 = arith.divf %126, %127 : vector<2x16xf32>
    %129 = vector.extract_strided_slice %115 {offsets = [0, 16], sizes = [2, 16], strides = [1, 1]} : vector<2x48xf32> to vector<2x16xf32>
    %130 = vector.extract_strided_slice %112 {offsets = [0, 16], sizes = [2, 16], strides = [1, 1]} : vector<2x96xf32> to vector<2x16xf32>
    %131 = arith.addf %129, %130 : vector<2x16xf32>
    %132 = arith.negf %131 : vector<2x16xf32>
    %133 = math.exp %132 : vector<2x16xf32>
    %cst_50 = arith.constant 1.000000e+00 : f32
    %134 = vector.broadcast %cst_50 : f32 to vector<2x16xf32>
    %135 = arith.addf %134, %133 : vector<2x16xf32>
    %136 = arith.divf %134, %135 : vector<2x16xf32>
    %137 = vector.extract_strided_slice %115 {offsets = [0, 32], sizes = [2, 16], strides = [1, 1]} : vector<2x48xf32> to vector<2x16xf32>
    %138 = vector.extract_strided_slice %112 {offsets = [0, 32], sizes = [2, 16], strides = [1, 1]} : vector<2x96xf32> to vector<2x16xf32>
    %139 = vector.broadcast %17 : vector<1x16xf32> to vector<2x16xf32>
    %140 = arith.addf %138, %139 : vector<2x16xf32>
    %141 = arith.mulf %128, %140 : vector<2x16xf32>
    %142 = arith.addf %137, %141 : vector<2x16xf32>
    %143 = math.tanh %142 : vector<2x16xf32>
    %cst_51 = arith.constant 1.000000e+00 : f32
    %144 = vector.broadcast %cst_51 : f32 to vector<2x16xf32>
    %145 = arith.subf %144, %136 : vector<2x16xf32>
    %146 = arith.mulf %145, %143 : vector<2x16xf32>
    %147 = arith.mulf %136, %119 : vector<2x16xf32>
    %148 = arith.addf %146, %147 : vector<2x16xf32>
    %149 = vector.extract_strided_slice %118 {offsets = [0, 0], sizes = [2, 16], strides = [1, 1]} : vector<2x48xf32> to vector<2x16xf32>
    %150 = vector.extract_strided_slice %112 {offsets = [0, 48], sizes = [2, 16], strides = [1, 1]} : vector<2x96xf32> to vector<2x16xf32>
    %151 = arith.addf %149, %150 : vector<2x16xf32>
    %152 = arith.negf %151 : vector<2x16xf32>
    %153 = math.exp %152 : vector<2x16xf32>
    %cst_52 = arith.constant 1.000000e+00 : f32
    %154 = vector.broadcast %cst_52 : f32 to vector<2x16xf32>
    %155 = arith.addf %154, %153 : vector<2x16xf32>
    %156 = arith.divf %154, %155 : vector<2x16xf32>
    %157 = vector.extract_strided_slice %118 {offsets = [0, 16], sizes = [2, 16], strides = [1, 1]} : vector<2x48xf32> to vector<2x16xf32>
    %158 = vector.extract_strided_slice %112 {offsets = [0, 64], sizes = [2, 16], strides = [1, 1]} : vector<2x96xf32> to vector<2x16xf32>
    %159 = arith.addf %157, %158 : vector<2x16xf32>
    %160 = arith.negf %159 : vector<2x16xf32>
    %161 = math.exp %160 : vector<2x16xf32>
    %cst_53 = arith.constant 1.000000e+00 : f32
    %162 = vector.broadcast %cst_53 : f32 to vector<2x16xf32>
    %163 = arith.addf %162, %161 : vector<2x16xf32>
    %164 = arith.divf %162, %163 : vector<2x16xf32>
    %165 = vector.extract_strided_slice %118 {offsets = [0, 32], sizes = [2, 16], strides = [1, 1]} : vector<2x48xf32> to vector<2x16xf32>
    %166 = vector.extract_strided_slice %112 {offsets = [0, 80], sizes = [2, 16], strides = [1, 1]} : vector<2x96xf32> to vector<2x16xf32>
    %167 = vector.broadcast %18 : vector<1x16xf32> to vector<2x16xf32>
    %168 = arith.addf %166, %167 : vector<2x16xf32>
    %169 = arith.mulf %156, %168 : vector<2x16xf32>
    %170 = arith.addf %165, %169 : vector<2x16xf32>
    %171 = math.tanh %170 : vector<2x16xf32>
    %cst_54 = arith.constant 1.000000e+00 : f32
    %172 = vector.broadcast %cst_54 : f32 to vector<2x16xf32>
    %173 = arith.subf %172, %164 : vector<2x16xf32>
    %174 = arith.mulf %173, %171 : vector<2x16xf32>
    %175 = arith.mulf %164, %120 : vector<2x16xf32>
    %176 = arith.addf %174, %175 : vector<2x16xf32>
    %177 = arith.sitofp %c1_i32 : i32 to f32
    %178 = arith.sitofp %111 : i32 to f32
    %179 = vector.broadcast %177 : f32 to vector<2x1xf32>
    %180 = arith.cmpf ogt, %0, %179 : vector<2x1xf32>
    %181 = arith.extui %180 : vector<2x1xi1> to vector<2x1xi32>
    %182 = arith.sitofp %181 : vector<2x1xi32> to vector<2x1xf32>
    %183 = vector.broadcast %178 : f32 to vector<2x1xf32>
    %184 = arith.cmpf ogt, %0, %183 : vector<2x1xf32>
    %185 = arith.extui %184 : vector<2x1xi1> to vector<2x1xi32>
    %186 = arith.sitofp %185 : vector<2x1xi32> to vector<2x1xf32>
    %187 = vector.broadcast %182 : vector<2x1xf32> to vector<2x16xf32>
    %188 = arith.mulf %148, %187 : vector<2x16xf32>
    %c3_i32_55 = arith.constant 3 : i32
    %189 = arith.addi %c3_i32_55, %c1_i32 : i32
    %190 = arith.index_cast %189 : i32 to index
    %c0_56 = arith.constant 0 : index
    %c0_57 = arith.constant 0 : index
    %191 = vector.load %arg16[%190, %c0_56, %c0_57] : memref<14x2x16xf32, #tpu.memory_space<vmem>>, vector<1x2x16xf32>
    %192 = vector.shape_cast %191 : vector<1x2x16xf32> to vector<2x16xf32>
    %193 = vector.shape_cast %188 : vector<2x16xf32> to vector<1x2x16xf32>
    tpu.vector_store %arg16[%190, %c0_56, %c0_57], %193 {strides = array<i32>} : memref<14x2x16xf32, #tpu.memory_space<vmem>>, vector<1x2x16xf32>,
    %194 = vector.broadcast %186 : vector<2x1xf32> to vector<2x16xf32>
    %195 = arith.mulf %176, %194 : vector<2x16xf32>
    %c3_i32_58 = arith.constant 3 : i32
    %196 = arith.addi %c3_i32_58, %111 : i32
    %197 = arith.index_cast %196 : i32 to index
    %c0_59 = arith.constant 0 : index
    %c0_60 = arith.constant 0 : index
    %198 = vector.load %arg17[%197, %c0_59, %c0_60] : memref<14x2x16xf32, #tpu.memory_space<vmem>>, vector<1x2x16xf32>
    %199 = vector.shape_cast %198 : vector<1x2x16xf32> to vector<2x16xf32>
    %200 = vector.shape_cast %195 : vector<2x16xf32> to vector<1x2x16xf32>
    tpu.vector_store %arg17[%197, %c0_59, %c0_60], %200 {strides = array<i32>} : memref<14x2x16xf32, #tpu.memory_space<vmem>>, vector<1x2x16xf32>,
    %201 = tpu.concatenate %148, %176 in 1 : vector<2x16xf32>, vector<2x16xf32> -> vector<2x32xf32>
    %c2_i32 = arith.constant 2 : i32
    %c7_i32_61 = arith.constant 7 : i32
    %202 = arith.subi %c7_i32_61, %c2_i32 : i32
    %cst_62 = arith.constant dense<0.000000e+00> : vector<2x96xf32>
    %203 = tpu.matmul %201, %15, %cst_62 {dimension_numbers = #tpu.dot_dimension_numbers<[1], [0], [0], [1], [0, 0, 1, 1], [], []>} : vector<2x32xf32>, vector<32x96xf32>, vector<2x96xf32> -> vector<2x96xf32>
    %204 = arith.index_cast %c2_i32 : i32 to index
    %c0_63 = arith.constant 0 : index
    %c0_64 = arith.constant 0 : index
    %205 = vector.load %arg15[%204, %c0_63, %c0_64] : memref<8x2x96xf32, #tpu.memory_space<vmem>>, vector<1x2x48xf32>
    %206 = vector.shape_cast %205 : vector<1x2x48xf32> to vector<2x48xf32>
    %207 = arith.index_cast %202 : i32 to index
    %c0_65 = arith.constant 0 : index
    %c48_66 = arith.constant 48 : index
    %208 = vector.load %arg15[%207, %c0_65, %c48_66] : memref<8x2x96xf32, #tpu.memory_space<vmem>>, vector<1x2x48xf32>
    %209 = vector.shape_cast %208 : vector<1x2x48xf32> to vector<2x48xf32>
    %210 = vector.extract_strided_slice %201 {offsets = [0, 0], sizes = [2, 16], strides = [1, 1]} : vector<2x32xf32> to vector<2x16xf32>
    %211 = vector.extract_strided_slice %201 {offsets = [0, 16], sizes = [2, 16], strides = [1, 1]} : vector<2x32xf32> to vector<2x16xf32>
    %212 = vector.extract_strided_slice %206 {offsets = [0, 0], sizes = [2, 16], strides = [1, 1]} : vector<2x48xf32> to vector<2x16xf32>
    %213 = vector.extract_strided_slice %203 {offsets = [0, 0], sizes = [2, 16], strides = [1, 1]} : vector<2x96xf32> to vector<2x16xf32>
    %214 = arith.addf %212, %213 : vector<2x16xf32>
    %215 = arith.negf %214 : vector<2x16xf32>
    %216 = math.exp %215 : vector<2x16xf32>
    %cst_67 = arith.constant 1.000000e+00 : f32
    %217 = vector.broadcast %cst_67 : f32 to vector<2x16xf32>
    %218 = arith.addf %217, %216 : vector<2x16xf32>
    %219 = arith.divf %217, %218 : vector<2x16xf32>
    %220 = vector.extract_strided_slice %206 {offsets = [0, 16], sizes = [2, 16], strides = [1, 1]} : vector<2x48xf32> to vector<2x16xf32>
    %221 = vector.extract_strided_slice %203 {offsets = [0, 16], sizes = [2, 16], strides = [1, 1]} : vector<2x96xf32> to vector<2x16xf32>
    %222 = arith.addf %220, %221 : vector<2x16xf32>
    %223 = arith.negf %222 : vector<2x16xf32>
    %224 = math.exp %223 : vector<2x16xf32>
    %cst_68 = arith.constant 1.000000e+00 : f32
    %225 = vector.broadcast %cst_68 : f32 to vector<2x16xf32>
    %226 = arith.addf %225, %224 : vector<2x16xf32>
    %227 = arith.divf %225, %226 : vector<2x16xf32>
    %228 = vector.extract_strided_slice %206 {offsets = [0, 32], sizes = [2, 16], strides = [1, 1]} : vector<2x48xf32> to vector<2x16xf32>
    %229 = vector.extract_strided_slice %203 {offsets = [0, 32], sizes = [2, 16], strides = [1, 1]} : vector<2x96xf32> to vector<2x16xf32>
    %230 = vector.broadcast %17 : vector<1x16xf32> to vector<2x16xf32>
    %231 = arith.addf %229, %230 : vector<2x16xf32>
    %232 = arith.mulf %219, %231 : vector<2x16xf32>
    %233 = arith.addf %228, %232 : vector<2x16xf32>
    %234 = math.tanh %233 : vector<2x16xf32>
    %cst_69 = arith.constant 1.000000e+00 : f32
    %235 = vector.broadcast %cst_69 : f32 to vector<2x16xf32>
    %236 = arith.subf %235, %227 : vector<2x16xf32>
    %237 = arith.mulf %236, %234 : vector<2x16xf32>
    %238 = arith.mulf %227, %210 : vector<2x16xf32>
    %239 = arith.addf %237, %238 : vector<2x16xf32>
    %240 = vector.extract_strided_slice %209 {offsets = [0, 0], sizes = [2, 16], strides = [1, 1]} : vector<2x48xf32> to vector<2x16xf32>
    %241 = vector.extract_strided_slice %203 {offsets = [0, 48], sizes = [2, 16], strides = [1, 1]} : vector<2x96xf32> to vector<2x16xf32>
    %242 = arith.addf %240, %241 : vector<2x16xf32>
    %243 = arith.negf %242 : vector<2x16xf32>
    %244 = math.exp %243 : vector<2x16xf32>
    %cst_70 = arith.constant 1.000000e+00 : f32
    %245 = vector.broadcast %cst_70 : f32 to vector<2x16xf32>
    %246 = arith.addf %245, %244 : vector<2x16xf32>
    %247 = arith.divf %245, %246 : vector<2x16xf32>
    %248 = vector.extract_strided_slice %209 {offsets = [0, 16], sizes = [2, 16], strides = [1, 1]} : vector<2x48xf32> to vector<2x16xf32>
    %249 = vector.extract_strided_slice %203 {offsets = [0, 64], sizes = [2, 16], strides = [1, 1]} : vector<2x96xf32> to vector<2x16xf32>
    %250 = arith.addf %248, %249 : vector<2x16xf32>
    %251 = arith.negf %250 : vector<2x16xf32>
    %252 = math.exp %251 : vector<2x16xf32>
    %cst_71 = arith.constant 1.000000e+00 : f32
    %253 = vector.broadcast %cst_71 : f32 to vector<2x16xf32>
    %254 = arith.addf %253, %252 : vector<2x16xf32>
    %255 = arith.divf %253, %254 : vector<2x16xf32>
    %256 = vector.extract_strided_slice %209 {offsets = [0, 32], sizes = [2, 16], strides = [1, 1]} : vector<2x48xf32> to vector<2x16xf32>
    %257 = vector.extract_strided_slice %203 {offsets = [0, 80], sizes = [2, 16], strides = [1, 1]} : vector<2x96xf32> to vector<2x16xf32>
    %258 = vector.broadcast %18 : vector<1x16xf32> to vector<2x16xf32>
    %259 = arith.addf %257, %258 : vector<2x16xf32>
    %260 = arith.mulf %247, %259 : vector<2x16xf32>
    %261 = arith.addf %256, %260 : vector<2x16xf32>
    %262 = math.tanh %261 : vector<2x16xf32>
    %cst_72 = arith.constant 1.000000e+00 : f32
    %263 = vector.broadcast %cst_72 : f32 to vector<2x16xf32>
    %264 = arith.subf %263, %255 : vector<2x16xf32>
    %265 = arith.mulf %264, %262 : vector<2x16xf32>
    %266 = arith.mulf %255, %211 : vector<2x16xf32>
    %267 = arith.addf %265, %266 : vector<2x16xf32>
    %268 = arith.sitofp %c2_i32 : i32 to f32
    %269 = arith.sitofp %202 : i32 to f32
    %270 = vector.broadcast %268 : f32 to vector<2x1xf32>
    %271 = arith.cmpf ogt, %0, %270 : vector<2x1xf32>
    %272 = arith.extui %271 : vector<2x1xi1> to vector<2x1xi32>
    %273 = arith.sitofp %272 : vector<2x1xi32> to vector<2x1xf32>
    %274 = vector.broadcast %269 : f32 to vector<2x1xf32>
    %275 = arith.cmpf ogt, %0, %274 : vector<2x1xf32>
    %276 = arith.extui %275 : vector<2x1xi1> to vector<2x1xi32>
    %277 = arith.sitofp %276 : vector<2x1xi32> to vector<2x1xf32>
    %278 = vector.broadcast %273 : vector<2x1xf32> to vector<2x16xf32>
    %279 = arith.mulf %239, %278 : vector<2x16xf32>
    %c3_i32_73 = arith.constant 3 : i32
    %280 = arith.addi %c3_i32_73, %c2_i32 : i32
    %281 = arith.index_cast %280 : i32 to index
    %c0_74 = arith.constant 0 : index
    %c0_75 = arith.constant 0 : index
    %282 = vector.load %arg16[%281, %c0_74, %c0_75] : memref<14x2x16xf32, #tpu.memory_space<vmem>>, vector<1x2x16xf32>
    %283 = vector.shape_cast %282 : vector<1x2x16xf32> to vector<2x16xf32>
    %284 = vector.shape_cast %279 : vector<2x16xf32> to vector<1x2x16xf32>
    tpu.vector_store %arg16[%281, %c0_74, %c0_75], %284 {strides = array<i32>} : memref<14x2x16xf32, #tpu.memory_space<vmem>>, vector<1x2x16xf32>,
    %285 = vector.broadcast %277 : vector<2x1xf32> to vector<2x16xf32>
    %286 = arith.mulf %267, %285 : vector<2x16xf32>
    %c3_i32_76 = arith.constant 3 : i32
    %287 = arith.addi %c3_i32_76, %202 : i32
    %288 = arith.index_cast %287 : i32 to index
    %c0_77 = arith.constant 0 : index
    %c0_78 = arith.constant 0 : index
    %289 = vector.load %arg17[%288, %c0_77, %c0_78] : memref<14x2x16xf32, #tpu.memory_space<vmem>>, vector<1x2x16xf32>
    %290 = vector.shape_cast %289 : vector<1x2x16xf32> to vector<2x16xf32>
    %291 = vector.shape_cast %286 : vector<2x16xf32> to vector<1x2x16xf32>
    tpu.vector_store %arg17[%288, %c0_77, %c0_78], %291 {strides = array<i32>} : memref<14x2x16xf32, #tpu.memory_space<vmem>>, vector<1x2x16xf32>,
    %292 = tpu.concatenate %239, %267 in 1 : vector<2x16xf32>, vector<2x16xf32> -> vector<2x32xf32>
    %c3_i32_79 = arith.constant 3 : i32
    %c7_i32_80 = arith.constant 7 : i32
    %293 = arith.subi %c7_i32_80, %c3_i32_79 : i32
    %cst_81 = arith.constant dense<0.000000e+00> : vector<2x96xf32>
    %294 = tpu.matmul %292, %15, %cst_81 {dimension_numbers = #tpu.dot_dimension_numbers<[1], [0], [0], [1], [0, 0, 1, 1], [], []>} : vector<2x32xf32>, vector<32x96xf32>, vector<2x96xf32> -> vector<2x96xf32>
    %295 = arith.index_cast %c3_i32_79 : i32 to index
    %c0_82 = arith.constant 0 : index
    %c0_83 = arith.constant 0 : index
    %296 = vector.load %arg15[%295, %c0_82, %c0_83] : memref<8x2x96xf32, #tpu.memory_space<vmem>>, vector<1x2x48xf32>
    %297 = vector.shape_cast %296 : vector<1x2x48xf32> to vector<2x48xf32>
    %298 = arith.index_cast %293 : i32 to index
    %c0_84 = arith.constant 0 : index
    %c48_85 = arith.constant 48 : index
    %299 = vector.load %arg15[%298, %c0_84, %c48_85] : memref<8x2x96xf32, #tpu.memory_space<vmem>>, vector<1x2x48xf32>
    %300 = vector.shape_cast %299 : vector<1x2x48xf32> to vector<2x48xf32>
    %301 = vector.extract_strided_slice %292 {offsets = [0, 0], sizes = [2, 16], strides = [1, 1]} : vector<2x32xf32> to vector<2x16xf32>
    %302 = vector.extract_strided_slice %292 {offsets = [0, 16], sizes = [2, 16], strides = [1, 1]} : vector<2x32xf32> to vector<2x16xf32>
    %303 = vector.extract_strided_slice %297 {offsets = [0, 0], sizes = [2, 16], strides = [1, 1]} : vector<2x48xf32> to vector<2x16xf32>
    %304 = vector.extract_strided_slice %294 {offsets = [0, 0], sizes = [2, 16], strides = [1, 1]} : vector<2x96xf32> to vector<2x16xf32>
    %305 = arith.addf %303, %304 : vector<2x16xf32>
    %306 = arith.negf %305 : vector<2x16xf32>
    %307 = math.exp %306 : vector<2x16xf32>
    %cst_86 = arith.constant 1.000000e+00 : f32
    %308 = vector.broadcast %cst_86 : f32 to vector<2x16xf32>
    %309 = arith.addf %308, %307 : vector<2x16xf32>
    %310 = arith.divf %308, %309 : vector<2x16xf32>
    %311 = vector.extract_strided_slice %297 {offsets = [0, 16], sizes = [2, 16], strides = [1, 1]} : vector<2x48xf32> to vector<2x16xf32>
    %312 = vector.extract_strided_slice %294 {offsets = [0, 16], sizes = [2, 16], strides = [1, 1]} : vector<2x96xf32> to vector<2x16xf32>
    %313 = arith.addf %311, %312 : vector<2x16xf32>
    %314 = arith.negf %313 : vector<2x16xf32>
    %315 = math.exp %314 : vector<2x16xf32>
    %cst_87 = arith.constant 1.000000e+00 : f32
    %316 = vector.broadcast %cst_87 : f32 to vector<2x16xf32>
    %317 = arith.addf %316, %315 : vector<2x16xf32>
    %318 = arith.divf %316, %317 : vector<2x16xf32>
    %319 = vector.extract_strided_slice %297 {offsets = [0, 32], sizes = [2, 16], strides = [1, 1]} : vector<2x48xf32> to vector<2x16xf32>
    %320 = vector.extract_strided_slice %294 {offsets = [0, 32], sizes = [2, 16], strides = [1, 1]} : vector<2x96xf32> to vector<2x16xf32>
    %321 = vector.broadcast %17 : vector<1x16xf32> to vector<2x16xf32>
    %322 = arith.addf %320, %321 : vector<2x16xf32>
    %323 = arith.mulf %310, %322 : vector<2x16xf32>
    %324 = arith.addf %319, %323 : vector<2x16xf32>
    %325 = math.tanh %324 : vector<2x16xf32>
    %cst_88 = arith.constant 1.000000e+00 : f32
    %326 = vector.broadcast %cst_88 : f32 to vector<2x16xf32>
    %327 = arith.subf %326, %318 : vector<2x16xf32>
    %328 = arith.mulf %327, %325 : vector<2x16xf32>
    %329 = arith.mulf %318, %301 : vector<2x16xf32>
    %330 = arith.addf %328, %329 : vector<2x16xf32>
    %331 = vector.extract_strided_slice %300 {offsets = [0, 0], sizes = [2, 16], strides = [1, 1]} : vector<2x48xf32> to vector<2x16xf32>
    %332 = vector.extract_strided_slice %294 {offsets = [0, 48], sizes = [2, 16], strides = [1, 1]} : vector<2x96xf32> to vector<2x16xf32>
    %333 = arith.addf %331, %332 : vector<2x16xf32>
    %334 = arith.negf %333 : vector<2x16xf32>
    %335 = math.exp %334 : vector<2x16xf32>
    %cst_89 = arith.constant 1.000000e+00 : f32
    %336 = vector.broadcast %cst_89 : f32 to vector<2x16xf32>
    %337 = arith.addf %336, %335 : vector<2x16xf32>
    %338 = arith.divf %336, %337 : vector<2x16xf32>
    %339 = vector.extract_strided_slice %300 {offsets = [0, 16], sizes = [2, 16], strides = [1, 1]} : vector<2x48xf32> to vector<2x16xf32>
    %340 = vector.extract_strided_slice %294 {offsets = [0, 64], sizes = [2, 16], strides = [1, 1]} : vector<2x96xf32> to vector<2x16xf32>
    %341 = arith.addf %339, %340 : vector<2x16xf32>
    %342 = arith.negf %341 : vector<2x16xf32>
    %343 = math.exp %342 : vector<2x16xf32>
    %cst_90 = arith.constant 1.000000e+00 : f32
    %344 = vector.broadcast %cst_90 : f32 to vector<2x16xf32>
    %345 = arith.addf %344, %343 : vector<2x16xf32>
    %346 = arith.divf %344, %345 : vector<2x16xf32>
    %347 = vector.extract_strided_slice %300 {offsets = [0, 32], sizes = [2, 16], strides = [1, 1]} : vector<2x48xf32> to vector<2x16xf32>
    %348 = vector.extract_strided_slice %294 {offsets = [0, 80], sizes = [2, 16], strides = [1, 1]} : vector<2x96xf32> to vector<2x16xf32>
    %349 = vector.broadcast %18 : vector<1x16xf32> to vector<2x16xf32>
    %350 = arith.addf %348, %349 : vector<2x16xf32>
    %351 = arith.mulf %338, %350 : vector<2x16xf32>
    %352 = arith.addf %347, %351 : vector<2x16xf32>
    %353 = math.tanh %352 : vector<2x16xf32>
    %cst_91 = arith.constant 1.000000e+00 : f32
    %354 = vector.broadcast %cst_91 : f32 to vector<2x16xf32>
    %355 = arith.subf %354, %346 : vector<2x16xf32>
    %356 = arith.mulf %355, %353 : vector<2x16xf32>
    %357 = arith.mulf %346, %302 : vector<2x16xf32>
    %358 = arith.addf %356, %357 : vector<2x16xf32>
    %359 = arith.sitofp %c3_i32_79 : i32 to f32
    %360 = arith.sitofp %293 : i32 to f32
    %361 = vector.broadcast %359 : f32 to vector<2x1xf32>
    %362 = arith.cmpf ogt, %0, %361 : vector<2x1xf32>
    %363 = arith.extui %362 : vector<2x1xi1> to vector<2x1xi32>
    %364 = arith.sitofp %363 : vector<2x1xi32> to vector<2x1xf32>
    %365 = vector.broadcast %360 : f32 to vector<2x1xf32>
    %366 = arith.cmpf ogt, %0, %365 : vector<2x1xf32>
    %367 = arith.extui %366 : vector<2x1xi1> to vector<2x1xi32>
    %368 = arith.sitofp %367 : vector<2x1xi32> to vector<2x1xf32>
    %369 = vector.broadcast %364 : vector<2x1xf32> to vector<2x16xf32>
    %370 = arith.mulf %330, %369 : vector<2x16xf32>
    %c3_i32_92 = arith.constant 3 : i32
    %371 = arith.addi %c3_i32_92, %c3_i32_79 : i32
    %372 = arith.index_cast %371 : i32 to index
    %c0_93 = arith.constant 0 : index
    %c0_94 = arith.constant 0 : index
    %373 = vector.load %arg16[%372, %c0_93, %c0_94] : memref<14x2x16xf32, #tpu.memory_space<vmem>>, vector<1x2x16xf32>
    %374 = vector.shape_cast %373 : vector<1x2x16xf32> to vector<2x16xf32>
    %375 = vector.shape_cast %370 : vector<2x16xf32> to vector<1x2x16xf32>
    tpu.vector_store %arg16[%372, %c0_93, %c0_94], %375 {strides = array<i32>} : memref<14x2x16xf32, #tpu.memory_space<vmem>>, vector<1x2x16xf32>,
    %376 = vector.broadcast %368 : vector<2x1xf32> to vector<2x16xf32>
    %377 = arith.mulf %358, %376 : vector<2x16xf32>
    %c3_i32_95 = arith.constant 3 : i32
    %378 = arith.addi %c3_i32_95, %293 : i32
    %379 = arith.index_cast %378 : i32 to index
    %c0_96 = arith.constant 0 : index
    %c0_97 = arith.constant 0 : index
    %380 = vector.load %arg17[%379, %c0_96, %c0_97] : memref<14x2x16xf32, #tpu.memory_space<vmem>>, vector<1x2x16xf32>
    %381 = vector.shape_cast %380 : vector<1x2x16xf32> to vector<2x16xf32>
    %382 = vector.shape_cast %377 : vector<2x16xf32> to vector<1x2x16xf32>
    tpu.vector_store %arg17[%379, %c0_96, %c0_97], %382 {strides = array<i32>} : memref<14x2x16xf32, #tpu.memory_space<vmem>>, vector<1x2x16xf32>,
    %383 = tpu.concatenate %330, %358 in 1 : vector<2x16xf32>, vector<2x16xf32> -> vector<2x32xf32>
    %c4_i32 = arith.constant 4 : i32
    %c7_i32_98 = arith.constant 7 : i32
    %384 = arith.subi %c7_i32_98, %c4_i32 : i32
    %cst_99 = arith.constant dense<0.000000e+00> : vector<2x96xf32>
    %385 = tpu.matmul %383, %15, %cst_99 {dimension_numbers = #tpu.dot_dimension_numbers<[1], [0], [0], [1], [0, 0, 1, 1], [], []>} : vector<2x32xf32>, vector<32x96xf32>, vector<2x96xf32> -> vector<2x96xf32>
    %386 = arith.index_cast %c4_i32 : i32 to index
    %c0_100 = arith.constant 0 : index
    %c0_101 = arith.constant 0 : index
    %387 = vector.load %arg15[%386, %c0_100, %c0_101] : memref<8x2x96xf32, #tpu.memory_space<vmem>>, vector<1x2x48xf32>
    %388 = vector.shape_cast %387 : vector<1x2x48xf32> to vector<2x48xf32>
    %389 = arith.index_cast %384 : i32 to index
    %c0_102 = arith.constant 0 : index
    %c48_103 = arith.constant 48 : index
    %390 = vector.load %arg15[%389, %c0_102, %c48_103] : memref<8x2x96xf32, #tpu.memory_space<vmem>>, vector<1x2x48xf32>
    %391 = vector.shape_cast %390 : vector<1x2x48xf32> to vector<2x48xf32>
    %392 = vector.extract_strided_slice %383 {offsets = [0, 0], sizes = [2, 16], strides = [1, 1]} : vector<2x32xf32> to vector<2x16xf32>
    %393 = vector.extract_strided_slice %383 {offsets = [0, 16], sizes = [2, 16], strides = [1, 1]} : vector<2x32xf32> to vector<2x16xf32>
    %394 = vector.extract_strided_slice %388 {offsets = [0, 0], sizes = [2, 16], strides = [1, 1]} : vector<2x48xf32> to vector<2x16xf32>
    %395 = vector.extract_strided_slice %385 {offsets = [0, 0], sizes = [2, 16], strides = [1, 1]} : vector<2x96xf32> to vector<2x16xf32>
    %396 = arith.addf %394, %395 : vector<2x16xf32>
    %397 = arith.negf %396 : vector<2x16xf32>
    %398 = math.exp %397 : vector<2x16xf32>
    %cst_104 = arith.constant 1.000000e+00 : f32
    %399 = vector.broadcast %cst_104 : f32 to vector<2x16xf32>
    %400 = arith.addf %399, %398 : vector<2x16xf32>
    %401 = arith.divf %399, %400 : vector<2x16xf32>
    %402 = vector.extract_strided_slice %388 {offsets = [0, 16], sizes = [2, 16], strides = [1, 1]} : vector<2x48xf32> to vector<2x16xf32>
    %403 = vector.extract_strided_slice %385 {offsets = [0, 16], sizes = [2, 16], strides = [1, 1]} : vector<2x96xf32> to vector<2x16xf32>
    %404 = arith.addf %402, %403 : vector<2x16xf32>
    %405 = arith.negf %404 : vector<2x16xf32>
    %406 = math.exp %405 : vector<2x16xf32>
    %cst_105 = arith.constant 1.000000e+00 : f32
    %407 = vector.broadcast %cst_105 : f32 to vector<2x16xf32>
    %408 = arith.addf %407, %406 : vector<2x16xf32>
    %409 = arith.divf %407, %408 : vector<2x16xf32>
    %410 = vector.extract_strided_slice %388 {offsets = [0, 32], sizes = [2, 16], strides = [1, 1]} : vector<2x48xf32> to vector<2x16xf32>
    %411 = vector.extract_strided_slice %385 {offsets = [0, 32], sizes = [2, 16], strides = [1, 1]} : vector<2x96xf32> to vector<2x16xf32>
    %412 = vector.broadcast %17 : vector<1x16xf32> to vector<2x16xf32>
    %413 = arith.addf %411, %412 : vector<2x16xf32>
    %414 = arith.mulf %401, %413 : vector<2x16xf32>
    %415 = arith.addf %410, %414 : vector<2x16xf32>
    %416 = math.tanh %415 : vector<2x16xf32>
    %cst_106 = arith.constant 1.000000e+00 : f32
    %417 = vector.broadcast %cst_106 : f32 to vector<2x16xf32>
    %418 = arith.subf %417, %409 : vector<2x16xf32>
    %419 = arith.mulf %418, %416 : vector<2x16xf32>
    %420 = arith.mulf %409, %392 : vector<2x16xf32>
    %421 = arith.addf %419, %420 : vector<2x16xf32>
    %422 = vector.extract_strided_slice %391 {offsets = [0, 0], sizes = [2, 16], strides = [1, 1]} : vector<2x48xf32> to vector<2x16xf32>
    %423 = vector.extract_strided_slice %385 {offsets = [0, 48], sizes = [2, 16], strides = [1, 1]} : vector<2x96xf32> to vector<2x16xf32>
    %424 = arith.addf %422, %423 : vector<2x16xf32>
    %425 = arith.negf %424 : vector<2x16xf32>
    %426 = math.exp %425 : vector<2x16xf32>
    %cst_107 = arith.constant 1.000000e+00 : f32
    %427 = vector.broadcast %cst_107 : f32 to vector<2x16xf32>
    %428 = arith.addf %427, %426 : vector<2x16xf32>
    %429 = arith.divf %427, %428 : vector<2x16xf32>
    %430 = vector.extract_strided_slice %391 {offsets = [0, 16], sizes = [2, 16], strides = [1, 1]} : vector<2x48xf32> to vector<2x16xf32>
    %431 = vector.extract_strided_slice %385 {offsets = [0, 64], sizes = [2, 16], strides = [1, 1]} : vector<2x96xf32> to vector<2x16xf32>
    %432 = arith.addf %430, %431 : vector<2x16xf32>
    %433 = arith.negf %432 : vector<2x16xf32>
    %434 = math.exp %433 : vector<2x16xf32>
    %cst_108 = arith.constant 1.000000e+00 : f32
    %435 = vector.broadcast %cst_108 : f32 to vector<2x16xf32>
    %436 = arith.addf %435, %434 : vector<2x16xf32>
    %437 = arith.divf %435, %436 : vector<2x16xf32>
    %438 = vector.extract_strided_slice %391 {offsets = [0, 32], sizes = [2, 16], strides = [1, 1]} : vector<2x48xf32> to vector<2x16xf32>
    %439 = vector.extract_strided_slice %385 {offsets = [0, 80], sizes = [2, 16], strides = [1, 1]} : vector<2x96xf32> to vector<2x16xf32>
    %440 = vector.broadcast %18 : vector<1x16xf32> to vector<2x16xf32>
    %441 = arith.addf %439, %440 : vector<2x16xf32>
    %442 = arith.mulf %429, %441 : vector<2x16xf32>
    %443 = arith.addf %438, %442 : vector<2x16xf32>
    %444 = math.tanh %443 : vector<2x16xf32>
    %cst_109 = arith.constant 1.000000e+00 : f32
    %445 = vector.broadcast %cst_109 : f32 to vector<2x16xf32>
    %446 = arith.subf %445, %437 : vector<2x16xf32>
    %447 = arith.mulf %446, %444 : vector<2x16xf32>
    %448 = arith.mulf %437, %393 : vector<2x16xf32>
    %449 = arith.addf %447, %448 : vector<2x16xf32>
    %450 = arith.sitofp %c4_i32 : i32 to f32
    %451 = arith.sitofp %384 : i32 to f32
    %452 = vector.broadcast %450 : f32 to vector<2x1xf32>
    %453 = arith.cmpf ogt, %0, %452 : vector<2x1xf32>
    %454 = arith.extui %453 : vector<2x1xi1> to vector<2x1xi32>
    %455 = arith.sitofp %454 : vector<2x1xi32> to vector<2x1xf32>
    %456 = vector.broadcast %451 : f32 to vector<2x1xf32>
    %457 = arith.cmpf ogt, %0, %456 : vector<2x1xf32>
    %458 = arith.extui %457 : vector<2x1xi1> to vector<2x1xi32>
    %459 = arith.sitofp %458 : vector<2x1xi32> to vector<2x1xf32>
    %460 = vector.broadcast %455 : vector<2x1xf32> to vector<2x16xf32>
    %461 = arith.mulf %421, %460 : vector<2x16xf32>
    %c3_i32_110 = arith.constant 3 : i32
    %462 = arith.addi %c3_i32_110, %c4_i32 : i32
    %463 = arith.index_cast %462 : i32 to index
    %c0_111 = arith.constant 0 : index
    %c0_112 = arith.constant 0 : index
    %464 = vector.load %arg16[%463, %c0_111, %c0_112] : memref<14x2x16xf32, #tpu.memory_space<vmem>>, vector<1x2x16xf32>
    %465 = vector.shape_cast %464 : vector<1x2x16xf32> to vector<2x16xf32>
    %466 = vector.shape_cast %461 : vector<2x16xf32> to vector<1x2x16xf32>
    tpu.vector_store %arg16[%463, %c0_111, %c0_112], %466 {strides = array<i32>} : memref<14x2x16xf32, #tpu.memory_space<vmem>>, vector<1x2x16xf32>,
    %467 = vector.broadcast %459 : vector<2x1xf32> to vector<2x16xf32>
    %468 = arith.mulf %449, %467 : vector<2x16xf32>
    %c3_i32_113 = arith.constant 3 : i32
    %469 = arith.addi %c3_i32_113, %384 : i32
    %470 = arith.index_cast %469 : i32 to index
    %c0_114 = arith.constant 0 : index
    %c0_115 = arith.constant 0 : index
    %471 = vector.load %arg17[%470, %c0_114, %c0_115] : memref<14x2x16xf32, #tpu.memory_space<vmem>>, vector<1x2x16xf32>
    %472 = vector.shape_cast %471 : vector<1x2x16xf32> to vector<2x16xf32>
    %473 = vector.shape_cast %468 : vector<2x16xf32> to vector<1x2x16xf32>
    tpu.vector_store %arg17[%470, %c0_114, %c0_115], %473 {strides = array<i32>} : memref<14x2x16xf32, #tpu.memory_space<vmem>>, vector<1x2x16xf32>,
    %474 = tpu.concatenate %421, %449 in 1 : vector<2x16xf32>, vector<2x16xf32> -> vector<2x32xf32>
    %c5_i32 = arith.constant 5 : i32
    %c7_i32_116 = arith.constant 7 : i32
    %475 = arith.subi %c7_i32_116, %c5_i32 : i32
    %cst_117 = arith.constant dense<0.000000e+00> : vector<2x96xf32>
    %476 = tpu.matmul %474, %15, %cst_117 {dimension_numbers = #tpu.dot_dimension_numbers<[1], [0], [0], [1], [0, 0, 1, 1], [], []>} : vector<2x32xf32>, vector<32x96xf32>, vector<2x96xf32> -> vector<2x96xf32>
    %477 = arith.index_cast %c5_i32 : i32 to index
    %c0_118 = arith.constant 0 : index
    %c0_119 = arith.constant 0 : index
    %478 = vector.load %arg15[%477, %c0_118, %c0_119] : memref<8x2x96xf32, #tpu.memory_space<vmem>>, vector<1x2x48xf32>
    %479 = vector.shape_cast %478 : vector<1x2x48xf32> to vector<2x48xf32>
    %480 = arith.index_cast %475 : i32 to index
    %c0_120 = arith.constant 0 : index
    %c48_121 = arith.constant 48 : index
    %481 = vector.load %arg15[%480, %c0_120, %c48_121] : memref<8x2x96xf32, #tpu.memory_space<vmem>>, vector<1x2x48xf32>
    %482 = vector.shape_cast %481 : vector<1x2x48xf32> to vector<2x48xf32>
    %483 = vector.extract_strided_slice %474 {offsets = [0, 0], sizes = [2, 16], strides = [1, 1]} : vector<2x32xf32> to vector<2x16xf32>
    %484 = vector.extract_strided_slice %474 {offsets = [0, 16], sizes = [2, 16], strides = [1, 1]} : vector<2x32xf32> to vector<2x16xf32>
    %485 = vector.extract_strided_slice %479 {offsets = [0, 0], sizes = [2, 16], strides = [1, 1]} : vector<2x48xf32> to vector<2x16xf32>
    %486 = vector.extract_strided_slice %476 {offsets = [0, 0], sizes = [2, 16], strides = [1, 1]} : vector<2x96xf32> to vector<2x16xf32>
    %487 = arith.addf %485, %486 : vector<2x16xf32>
    %488 = arith.negf %487 : vector<2x16xf32>
    %489 = math.exp %488 : vector<2x16xf32>
    %cst_122 = arith.constant 1.000000e+00 : f32
    %490 = vector.broadcast %cst_122 : f32 to vector<2x16xf32>
    %491 = arith.addf %490, %489 : vector<2x16xf32>
    %492 = arith.divf %490, %491 : vector<2x16xf32>
    %493 = vector.extract_strided_slice %479 {offsets = [0, 16], sizes = [2, 16], strides = [1, 1]} : vector<2x48xf32> to vector<2x16xf32>
    %494 = vector.extract_strided_slice %476 {offsets = [0, 16], sizes = [2, 16], strides = [1, 1]} : vector<2x96xf32> to vector<2x16xf32>
    %495 = arith.addf %493, %494 : vector<2x16xf32>
    %496 = arith.negf %495 : vector<2x16xf32>
    %497 = math.exp %496 : vector<2x16xf32>
    %cst_123 = arith.constant 1.000000e+00 : f32
    %498 = vector.broadcast %cst_123 : f32 to vector<2x16xf32>
    %499 = arith.addf %498, %497 : vector<2x16xf32>
    %500 = arith.divf %498, %499 : vector<2x16xf32>
    %501 = vector.extract_strided_slice %479 {offsets = [0, 32], sizes = [2, 16], strides = [1, 1]} : vector<2x48xf32> to vector<2x16xf32>
    %502 = vector.extract_strided_slice %476 {offsets = [0, 32], sizes = [2, 16], strides = [1, 1]} : vector<2x96xf32> to vector<2x16xf32>
    %503 = vector.broadcast %17 : vector<1x16xf32> to vector<2x16xf32>
    %504 = arith.addf %502, %503 : vector<2x16xf32>
    %505 = arith.mulf %492, %504 : vector<2x16xf32>
    %506 = arith.addf %501, %505 : vector<2x16xf32>
    %507 = math.tanh %506 : vector<2x16xf32>
    %cst_124 = arith.constant 1.000000e+00 : f32
    %508 = vector.broadcast %cst_124 : f32 to vector<2x16xf32>
    %509 = arith.subf %508, %500 : vector<2x16xf32>
    %510 = arith.mulf %509, %507 : vector<2x16xf32>
    %511 = arith.mulf %500, %483 : vector<2x16xf32>
    %512 = arith.addf %510, %511 : vector<2x16xf32>
    %513 = vector.extract_strided_slice %482 {offsets = [0, 0], sizes = [2, 16], strides = [1, 1]} : vector<2x48xf32> to vector<2x16xf32>
    %514 = vector.extract_strided_slice %476 {offsets = [0, 48], sizes = [2, 16], strides = [1, 1]} : vector<2x96xf32> to vector<2x16xf32>
    %515 = arith.addf %513, %514 : vector<2x16xf32>
    %516 = arith.negf %515 : vector<2x16xf32>
    %517 = math.exp %516 : vector<2x16xf32>
    %cst_125 = arith.constant 1.000000e+00 : f32
    %518 = vector.broadcast %cst_125 : f32 to vector<2x16xf32>
    %519 = arith.addf %518, %517 : vector<2x16xf32>
    %520 = arith.divf %518, %519 : vector<2x16xf32>
    %521 = vector.extract_strided_slice %482 {offsets = [0, 16], sizes = [2, 16], strides = [1, 1]} : vector<2x48xf32> to vector<2x16xf32>
    %522 = vector.extract_strided_slice %476 {offsets = [0, 64], sizes = [2, 16], strides = [1, 1]} : vector<2x96xf32> to vector<2x16xf32>
    %523 = arith.addf %521, %522 : vector<2x16xf32>
    %524 = arith.negf %523 : vector<2x16xf32>
    %525 = math.exp %524 : vector<2x16xf32>
    %cst_126 = arith.constant 1.000000e+00 : f32
    %526 = vector.broadcast %cst_126 : f32 to vector<2x16xf32>
    %527 = arith.addf %526, %525 : vector<2x16xf32>
    %528 = arith.divf %526, %527 : vector<2x16xf32>
    %529 = vector.extract_strided_slice %482 {offsets = [0, 32], sizes = [2, 16], strides = [1, 1]} : vector<2x48xf32> to vector<2x16xf32>
    %530 = vector.extract_strided_slice %476 {offsets = [0, 80], sizes = [2, 16], strides = [1, 1]} : vector<2x96xf32> to vector<2x16xf32>
    %531 = vector.broadcast %18 : vector<1x16xf32> to vector<2x16xf32>
    %532 = arith.addf %530, %531 : vector<2x16xf32>
    %533 = arith.mulf %520, %532 : vector<2x16xf32>
    %534 = arith.addf %529, %533 : vector<2x16xf32>
    %535 = math.tanh %534 : vector<2x16xf32>
    %cst_127 = arith.constant 1.000000e+00 : f32
    %536 = vector.broadcast %cst_127 : f32 to vector<2x16xf32>
    %537 = arith.subf %536, %528 : vector<2x16xf32>
    %538 = arith.mulf %537, %535 : vector<2x16xf32>
    %539 = arith.mulf %528, %484 : vector<2x16xf32>
    %540 = arith.addf %538, %539 : vector<2x16xf32>
    %541 = arith.sitofp %c5_i32 : i32 to f32
    %542 = arith.sitofp %475 : i32 to f32
    %543 = vector.broadcast %541 : f32 to vector<2x1xf32>
    %544 = arith.cmpf ogt, %0, %543 : vector<2x1xf32>
    %545 = arith.extui %544 : vector<2x1xi1> to vector<2x1xi32>
    %546 = arith.sitofp %545 : vector<2x1xi32> to vector<2x1xf32>
    %547 = vector.broadcast %542 : f32 to vector<2x1xf32>
    %548 = arith.cmpf ogt, %0, %547 : vector<2x1xf32>
    %549 = arith.extui %548 : vector<2x1xi1> to vector<2x1xi32>
    %550 = arith.sitofp %549 : vector<2x1xi32> to vector<2x1xf32>
    %551 = vector.broadcast %546 : vector<2x1xf32> to vector<2x16xf32>
    %552 = arith.mulf %512, %551 : vector<2x16xf32>
    %c3_i32_128 = arith.constant 3 : i32
    %553 = arith.addi %c3_i32_128, %c5_i32 : i32
    %554 = arith.index_cast %553 : i32 to index
    %c0_129 = arith.constant 0 : index
    %c0_130 = arith.constant 0 : index
    %555 = vector.load %arg16[%554, %c0_129, %c0_130] : memref<14x2x16xf32, #tpu.memory_space<vmem>>, vector<1x2x16xf32>
    %556 = vector.shape_cast %555 : vector<1x2x16xf32> to vector<2x16xf32>
    %557 = vector.shape_cast %552 : vector<2x16xf32> to vector<1x2x16xf32>
    tpu.vector_store %arg16[%554, %c0_129, %c0_130], %557 {strides = array<i32>} : memref<14x2x16xf32, #tpu.memory_space<vmem>>, vector<1x2x16xf32>,
    %558 = vector.broadcast %550 : vector<2x1xf32> to vector<2x16xf32>
    %559 = arith.mulf %540, %558 : vector<2x16xf32>
    %c3_i32_131 = arith.constant 3 : i32
    %560 = arith.addi %c3_i32_131, %475 : i32
    %561 = arith.index_cast %560 : i32 to index
    %c0_132 = arith.constant 0 : index
    %c0_133 = arith.constant 0 : index
    %562 = vector.load %arg17[%561, %c0_132, %c0_133] : memref<14x2x16xf32, #tpu.memory_space<vmem>>, vector<1x2x16xf32>
    %563 = vector.shape_cast %562 : vector<1x2x16xf32> to vector<2x16xf32>
    %564 = vector.shape_cast %559 : vector<2x16xf32> to vector<1x2x16xf32>
    tpu.vector_store %arg17[%561, %c0_132, %c0_133], %564 {strides = array<i32>} : memref<14x2x16xf32, #tpu.memory_space<vmem>>, vector<1x2x16xf32>,
    %565 = tpu.concatenate %512, %540 in 1 : vector<2x16xf32>, vector<2x16xf32> -> vector<2x32xf32>
    %c6_i32 = arith.constant 6 : i32
    %c7_i32_134 = arith.constant 7 : i32
    %566 = arith.subi %c7_i32_134, %c6_i32 : i32
    %cst_135 = arith.constant dense<0.000000e+00> : vector<2x96xf32>
    %567 = tpu.matmul %565, %15, %cst_135 {dimension_numbers = #tpu.dot_dimension_numbers<[1], [0], [0], [1], [0, 0, 1, 1], [], []>} : vector<2x32xf32>, vector<32x96xf32>, vector<2x96xf32> -> vector<2x96xf32>
    %568 = arith.index_cast %c6_i32 : i32 to index
    %c0_136 = arith.constant 0 : index
    %c0_137 = arith.constant 0 : index
    %569 = vector.load %arg15[%568, %c0_136, %c0_137] : memref<8x2x96xf32, #tpu.memory_space<vmem>>, vector<1x2x48xf32>
    %570 = vector.shape_cast %569 : vector<1x2x48xf32> to vector<2x48xf32>
    %571 = arith.index_cast %566 : i32 to index
    %c0_138 = arith.constant 0 : index
    %c48_139 = arith.constant 48 : index
    %572 = vector.load %arg15[%571, %c0_138, %c48_139] : memref<8x2x96xf32, #tpu.memory_space<vmem>>, vector<1x2x48xf32>
    %573 = vector.shape_cast %572 : vector<1x2x48xf32> to vector<2x48xf32>
    %574 = vector.extract_strided_slice %565 {offsets = [0, 0], sizes = [2, 16], strides = [1, 1]} : vector<2x32xf32> to vector<2x16xf32>
    %575 = vector.extract_strided_slice %565 {offsets = [0, 16], sizes = [2, 16], strides = [1, 1]} : vector<2x32xf32> to vector<2x16xf32>
    %576 = vector.extract_strided_slice %570 {offsets = [0, 0], sizes = [2, 16], strides = [1, 1]} : vector<2x48xf32> to vector<2x16xf32>
    %577 = vector.extract_strided_slice %567 {offsets = [0, 0], sizes = [2, 16], strides = [1, 1]} : vector<2x96xf32> to vector<2x16xf32>
    %578 = arith.addf %576, %577 : vector<2x16xf32>
    %579 = arith.negf %578 : vector<2x16xf32>
    %580 = math.exp %579 : vector<2x16xf32>
    %cst_140 = arith.constant 1.000000e+00 : f32
    %581 = vector.broadcast %cst_140 : f32 to vector<2x16xf32>
    %582 = arith.addf %581, %580 : vector<2x16xf32>
    %583 = arith.divf %581, %582 : vector<2x16xf32>
    %584 = vector.extract_strided_slice %570 {offsets = [0, 16], sizes = [2, 16], strides = [1, 1]} : vector<2x48xf32> to vector<2x16xf32>
    %585 = vector.extract_strided_slice %567 {offsets = [0, 16], sizes = [2, 16], strides = [1, 1]} : vector<2x96xf32> to vector<2x16xf32>
    %586 = arith.addf %584, %585 : vector<2x16xf32>
    %587 = arith.negf %586 : vector<2x16xf32>
    %588 = math.exp %587 : vector<2x16xf32>
    %cst_141 = arith.constant 1.000000e+00 : f32
    %589 = vector.broadcast %cst_141 : f32 to vector<2x16xf32>
    %590 = arith.addf %589, %588 : vector<2x16xf32>
    %591 = arith.divf %589, %590 : vector<2x16xf32>
    %592 = vector.extract_strided_slice %570 {offsets = [0, 32], sizes = [2, 16], strides = [1, 1]} : vector<2x48xf32> to vector<2x16xf32>
    %593 = vector.extract_strided_slice %567 {offsets = [0, 32], sizes = [2, 16], strides = [1, 1]} : vector<2x96xf32> to vector<2x16xf32>
    %594 = vector.broadcast %17 : vector<1x16xf32> to vector<2x16xf32>
    %595 = arith.addf %593, %594 : vector<2x16xf32>
    %596 = arith.mulf %583, %595 : vector<2x16xf32>
    %597 = arith.addf %592, %596 : vector<2x16xf32>
    %598 = math.tanh %597 : vector<2x16xf32>
    %cst_142 = arith.constant 1.000000e+00 : f32
    %599 = vector.broadcast %cst_142 : f32 to vector<2x16xf32>
    %600 = arith.subf %599, %591 : vector<2x16xf32>
    %601 = arith.mulf %600, %598 : vector<2x16xf32>
    %602 = arith.mulf %591, %574 : vector<2x16xf32>
    %603 = arith.addf %601, %602 : vector<2x16xf32>
    %604 = vector.extract_strided_slice %573 {offsets = [0, 0], sizes = [2, 16], strides = [1, 1]} : vector<2x48xf32> to vector<2x16xf32>
    %605 = vector.extract_strided_slice %567 {offsets = [0, 48], sizes = [2, 16], strides = [1, 1]} : vector<2x96xf32> to vector<2x16xf32>
    %606 = arith.addf %604, %605 : vector<2x16xf32>
    %607 = arith.negf %606 : vector<2x16xf32>
    %608 = math.exp %607 : vector<2x16xf32>
    %cst_143 = arith.constant 1.000000e+00 : f32
    %609 = vector.broadcast %cst_143 : f32 to vector<2x16xf32>
    %610 = arith.addf %609, %608 : vector<2x16xf32>
    %611 = arith.divf %609, %610 : vector<2x16xf32>
    %612 = vector.extract_strided_slice %573 {offsets = [0, 16], sizes = [2, 16], strides = [1, 1]} : vector<2x48xf32> to vector<2x16xf32>
    %613 = vector.extract_strided_slice %567 {offsets = [0, 64], sizes = [2, 16], strides = [1, 1]} : vector<2x96xf32> to vector<2x16xf32>
    %614 = arith.addf %612, %613 : vector<2x16xf32>
    %615 = arith.negf %614 : vector<2x16xf32>
    %616 = math.exp %615 : vector<2x16xf32>
    %cst_144 = arith.constant 1.000000e+00 : f32
    %617 = vector.broadcast %cst_144 : f32 to vector<2x16xf32>
    %618 = arith.addf %617, %616 : vector<2x16xf32>
    %619 = arith.divf %617, %618 : vector<2x16xf32>
    %620 = vector.extract_strided_slice %573 {offsets = [0, 32], sizes = [2, 16], strides = [1, 1]} : vector<2x48xf32> to vector<2x16xf32>
    %621 = vector.extract_strided_slice %567 {offsets = [0, 80], sizes = [2, 16], strides = [1, 1]} : vector<2x96xf32> to vector<2x16xf32>
    %622 = vector.broadcast %18 : vector<1x16xf32> to vector<2x16xf32>
    %623 = arith.addf %621, %622 : vector<2x16xf32>
    %624 = arith.mulf %611, %623 : vector<2x16xf32>
    %625 = arith.addf %620, %624 : vector<2x16xf32>
    %626 = math.tanh %625 : vector<2x16xf32>
    %cst_145 = arith.constant 1.000000e+00 : f32
    %627 = vector.broadcast %cst_145 : f32 to vector<2x16xf32>
    %628 = arith.subf %627, %619 : vector<2x16xf32>
    %629 = arith.mulf %628, %626 : vector<2x16xf32>
    %630 = arith.mulf %619, %575 : vector<2x16xf32>
    %631 = arith.addf %629, %630 : vector<2x16xf32>
    %632 = arith.sitofp %c6_i32 : i32 to f32
    %633 = arith.sitofp %566 : i32 to f32
    %634 = vector.broadcast %632 : f32 to vector<2x1xf32>
    %635 = arith.cmpf ogt, %0, %634 : vector<2x1xf32>
    %636 = arith.extui %635 : vector<2x1xi1> to vector<2x1xi32>
    %637 = arith.sitofp %636 : vector<2x1xi32> to vector<2x1xf32>
    %638 = vector.broadcast %633 : f32 to vector<2x1xf32>
    %639 = arith.cmpf ogt, %0, %638 : vector<2x1xf32>
    %640 = arith.extui %639 : vector<2x1xi1> to vector<2x1xi32>
    %641 = arith.sitofp %640 : vector<2x1xi32> to vector<2x1xf32>
    %642 = vector.broadcast %637 : vector<2x1xf32> to vector<2x16xf32>
    %643 = arith.mulf %603, %642 : vector<2x16xf32>
    %c3_i32_146 = arith.constant 3 : i32
    %644 = arith.addi %c3_i32_146, %c6_i32 : i32
    %645 = arith.index_cast %644 : i32 to index
    %c0_147 = arith.constant 0 : index
    %c0_148 = arith.constant 0 : index
    %646 = vector.load %arg16[%645, %c0_147, %c0_148] : memref<14x2x16xf32, #tpu.memory_space<vmem>>, vector<1x2x16xf32>
    %647 = vector.shape_cast %646 : vector<1x2x16xf32> to vector<2x16xf32>
    %648 = vector.shape_cast %643 : vector<2x16xf32> to vector<1x2x16xf32>
    tpu.vector_store %arg16[%645, %c0_147, %c0_148], %648 {strides = array<i32>} : memref<14x2x16xf32, #tpu.memory_space<vmem>>, vector<1x2x16xf32>,
    %649 = vector.broadcast %641 : vector<2x1xf32> to vector<2x16xf32>
    %650 = arith.mulf %631, %649 : vector<2x16xf32>
    %c3_i32_149 = arith.constant 3 : i32
    %651 = arith.addi %c3_i32_149, %566 : i32
    %652 = arith.index_cast %651 : i32 to index
    %c0_150 = arith.constant 0 : index
    %c0_151 = arith.constant 0 : index
    %653 = vector.load %arg17[%652, %c0_150, %c0_151] : memref<14x2x16xf32, #tpu.memory_space<vmem>>, vector<1x2x16xf32>
    %654 = vector.shape_cast %653 : vector<1x2x16xf32> to vector<2x16xf32>
    %655 = vector.shape_cast %650 : vector<2x16xf32> to vector<1x2x16xf32>
    tpu.vector_store %arg17[%652, %c0_150, %c0_151], %655 {strides = array<i32>} : memref<14x2x16xf32, #tpu.memory_space<vmem>>, vector<1x2x16xf32>,
    %656 = tpu.concatenate %603, %631 in 1 : vector<2x16xf32>, vector<2x16xf32> -> vector<2x32xf32>
    %c7_i32_152 = arith.constant 7 : i32
    %c7_i32_153 = arith.constant 7 : i32
    %657 = arith.subi %c7_i32_153, %c7_i32_152 : i32
    %cst_154 = arith.constant dense<0.000000e+00> : vector<2x96xf32>
    %658 = tpu.matmul %656, %15, %cst_154 {dimension_numbers = #tpu.dot_dimension_numbers<[1], [0], [0], [1], [0, 0, 1, 1], [], []>} : vector<2x32xf32>, vector<32x96xf32>, vector<2x96xf32> -> vector<2x96xf32>
    %659 = arith.index_cast %c7_i32_152 : i32 to index
    %c0_155 = arith.constant 0 : index
    %c0_156 = arith.constant 0 : index
    %660 = vector.load %arg15[%659, %c0_155, %c0_156] : memref<8x2x96xf32, #tpu.memory_space<vmem>>, vector<1x2x48xf32>
    %661 = vector.shape_cast %660 : vector<1x2x48xf32> to vector<2x48xf32>
    %662 = arith.index_cast %657 : i32 to index
    %c0_157 = arith.constant 0 : index
    %c48_158 = arith.constant 48 : index
    %663 = vector.load %arg15[%662, %c0_157, %c48_158] : memref<8x2x96xf32, #tpu.memory_space<vmem>>, vector<1x2x48xf32>
    %664 = vector.shape_cast %663 : vector<1x2x48xf32> to vector<2x48xf32>
    %665 = vector.extract_strided_slice %656 {offsets = [0, 0], sizes = [2, 16], strides = [1, 1]} : vector<2x32xf32> to vector<2x16xf32>
    %666 = vector.extract_strided_slice %656 {offsets = [0, 16], sizes = [2, 16], strides = [1, 1]} : vector<2x32xf32> to vector<2x16xf32>
    %667 = vector.extract_strided_slice %661 {offsets = [0, 0], sizes = [2, 16], strides = [1, 1]} : vector<2x48xf32> to vector<2x16xf32>
    %668 = vector.extract_strided_slice %658 {offsets = [0, 0], sizes = [2, 16], strides = [1, 1]} : vector<2x96xf32> to vector<2x16xf32>
    %669 = arith.addf %667, %668 : vector<2x16xf32>
    %670 = arith.negf %669 : vector<2x16xf32>
    %671 = math.exp %670 : vector<2x16xf32>
    %cst_159 = arith.constant 1.000000e+00 : f32
    %672 = vector.broadcast %cst_159 : f32 to vector<2x16xf32>
    %673 = arith.addf %672, %671 : vector<2x16xf32>
    %674 = arith.divf %672, %673 : vector<2x16xf32>
    %675 = vector.extract_strided_slice %661 {offsets = [0, 16], sizes = [2, 16], strides = [1, 1]} : vector<2x48xf32> to vector<2x16xf32>
    %676 = vector.extract_strided_slice %658 {offsets = [0, 16], sizes = [2, 16], strides = [1, 1]} : vector<2x96xf32> to vector<2x16xf32>
    %677 = arith.addf %675, %676 : vector<2x16xf32>
    %678 = arith.negf %677 : vector<2x16xf32>
    %679 = math.exp %678 : vector<2x16xf32>
    %cst_160 = arith.constant 1.000000e+00 : f32
    %680 = vector.broadcast %cst_160 : f32 to vector<2x16xf32>
    %681 = arith.addf %680, %679 : vector<2x16xf32>
    %682 = arith.divf %680, %681 : vector<2x16xf32>
    %683 = vector.extract_strided_slice %661 {offsets = [0, 32], sizes = [2, 16], strides = [1, 1]} : vector<2x48xf32> to vector<2x16xf32>
    %684 = vector.extract_strided_slice %658 {offsets = [0, 32], sizes = [2, 16], strides = [1, 1]} : vector<2x96xf32> to vector<2x16xf32>
    %685 = vector.broadcast %17 : vector<1x16xf32> to vector<2x16xf32>
    %686 = arith.addf %684, %685 : vector<2x16xf32>
    %687 = arith.mulf %674, %686 : vector<2x16xf32>
    %688 = arith.addf %683, %687 : vector<2x16xf32>
    %689 = math.tanh %688 : vector<2x16xf32>
    %cst_161 = arith.constant 1.000000e+00 : f32
    %690 = vector.broadcast %cst_161 : f32 to vector<2x16xf32>
    %691 = arith.subf %690, %682 : vector<2x16xf32>
    %692 = arith.mulf %691, %689 : vector<2x16xf32>
    %693 = arith.mulf %682, %665 : vector<2x16xf32>
    %694 = arith.addf %692, %693 : vector<2x16xf32>
    %695 = vector.extract_strided_slice %664 {offsets = [0, 0], sizes = [2, 16], strides = [1, 1]} : vector<2x48xf32> to vector<2x16xf32>
    %696 = vector.extract_strided_slice %658 {offsets = [0, 48], sizes = [2, 16], strides = [1, 1]} : vector<2x96xf32> to vector<2x16xf32>
    %697 = arith.addf %695, %696 : vector<2x16xf32>
    %698 = arith.negf %697 : vector<2x16xf32>
    %699 = math.exp %698 : vector<2x16xf32>
    %cst_162 = arith.constant 1.000000e+00 : f32
    %700 = vector.broadcast %cst_162 : f32 to vector<2x16xf32>
    %701 = arith.addf %700, %699 : vector<2x16xf32>
    %702 = arith.divf %700, %701 : vector<2x16xf32>
    %703 = vector.extract_strided_slice %664 {offsets = [0, 16], sizes = [2, 16], strides = [1, 1]} : vector<2x48xf32> to vector<2x16xf32>
    %704 = vector.extract_strided_slice %658 {offsets = [0, 64], sizes = [2, 16], strides = [1, 1]} : vector<2x96xf32> to vector<2x16xf32>
    %705 = arith.addf %703, %704 : vector<2x16xf32>
    %706 = arith.negf %705 : vector<2x16xf32>
    %707 = math.exp %706 : vector<2x16xf32>
    %cst_163 = arith.constant 1.000000e+00 : f32
    %708 = vector.broadcast %cst_163 : f32 to vector<2x16xf32>
    %709 = arith.addf %708, %707 : vector<2x16xf32>
    %710 = arith.divf %708, %709 : vector<2x16xf32>
    %711 = vector.extract_strided_slice %664 {offsets = [0, 32], sizes = [2, 16], strides = [1, 1]} : vector<2x48xf32> to vector<2x16xf32>
    %712 = vector.extract_strided_slice %658 {offsets = [0, 80], sizes = [2, 16], strides = [1, 1]} : vector<2x96xf32> to vector<2x16xf32>
    %713 = vector.broadcast %18 : vector<1x16xf32> to vector<2x16xf32>
    %714 = arith.addf %712, %713 : vector<2x16xf32>
    %715 = arith.mulf %702, %714 : vector<2x16xf32>
    %716 = arith.addf %711, %715 : vector<2x16xf32>
    %717 = math.tanh %716 : vector<2x16xf32>
    %cst_164 = arith.constant 1.000000e+00 : f32
    %718 = vector.broadcast %cst_164 : f32 to vector<2x16xf32>
    %719 = arith.subf %718, %710 : vector<2x16xf32>
    %720 = arith.mulf %719, %717 : vector<2x16xf32>
    %721 = arith.mulf %710, %666 : vector<2x16xf32>
    %722 = arith.addf %720, %721 : vector<2x16xf32>
    %723 = arith.sitofp %c7_i32_152 : i32 to f32
    %724 = arith.sitofp %657 : i32 to f32
    %725 = vector.broadcast %723 : f32 to vector<2x1xf32>
    %726 = arith.cmpf ogt, %0, %725 : vector<2x1xf32>
    %727 = arith.extui %726 : vector<2x1xi1> to vector<2x1xi32>
    %728 = arith.sitofp %727 : vector<2x1xi32> to vector<2x1xf32>
    %729 = vector.broadcast %724 : f32 to vector<2x1xf32>
    %730 = arith.cmpf ogt, %0, %729 : vector<2x1xf32>
    %731 = arith.extui %730 : vector<2x1xi1> to vector<2x1xi32>
    %732 = arith.sitofp %731 : vector<2x1xi32> to vector<2x1xf32>
    %733 = vector.broadcast %728 : vector<2x1xf32> to vector<2x16xf32>
    %734 = arith.mulf %694, %733 : vector<2x16xf32>
    %c3_i32_165 = arith.constant 3 : i32
    %735 = arith.addi %c3_i32_165, %c7_i32_152 : i32
    %736 = arith.index_cast %735 : i32 to index
    %c0_166 = arith.constant 0 : index
    %c0_167 = arith.constant 0 : index
    %737 = vector.load %arg16[%736, %c0_166, %c0_167] : memref<14x2x16xf32, #tpu.memory_space<vmem>>, vector<1x2x16xf32>
    %738 = vector.shape_cast %737 : vector<1x2x16xf32> to vector<2x16xf32>
    %739 = vector.shape_cast %734 : vector<2x16xf32> to vector<1x2x16xf32>
    tpu.vector_store %arg16[%736, %c0_166, %c0_167], %739 {strides = array<i32>} : memref<14x2x16xf32, #tpu.memory_space<vmem>>, vector<1x2x16xf32>,
    %740 = vector.broadcast %732 : vector<2x1xf32> to vector<2x16xf32>
    %741 = arith.mulf %722, %740 : vector<2x16xf32>
    %c3_i32_168 = arith.constant 3 : i32
    %742 = arith.addi %c3_i32_168, %657 : i32
    %743 = arith.index_cast %742 : i32 to index
    %c0_169 = arith.constant 0 : index
    %c0_170 = arith.constant 0 : index
    %744 = vector.load %arg17[%743, %c0_169, %c0_170] : memref<14x2x16xf32, #tpu.memory_space<vmem>>, vector<1x2x16xf32>
    %745 = vector.shape_cast %744 : vector<1x2x16xf32> to vector<2x16xf32>
    %746 = vector.shape_cast %741 : vector<2x16xf32> to vector<1x2x16xf32>
    tpu.vector_store %arg17[%743, %c0_169, %c0_170], %746 {strides = array<i32>} : memref<14x2x16xf32, #tpu.memory_space<vmem>>, vector<1x2x16xf32>,
    %747 = tpu.concatenate %694, %722 in 1 : vector<2x16xf32>, vector<2x16xf32> -> vector<2x32xf32>
    %c8_i32 = arith.constant 8 : i32
    %c3 = arith.constant 3 : index
    %c0_171 = arith.constant 0 : index
    %c0_172 = arith.constant 0 : index
    %748 = vector.load %arg16[%c3, %c0_171, %c0_172] : memref<14x2x16xf32, #tpu.memory_space<vmem>>, vector<8x2x16xf32>
    %c3_173 = arith.constant 3 : index
    %c0_174 = arith.constant 0 : index
    %c0_175 = arith.constant 0 : index
    %749 = vector.load %arg17[%c3_173, %c0_174, %c0_175] : memref<14x2x16xf32, #tpu.memory_space<vmem>>, vector<8x2x16xf32>
    %cst_176 = arith.constant dense<0.000000e+00> : vector<2x16xf32>
    %750 = vector.multi_reduction <add>, %748, %cst_176 [0] : vector<8x2x16xf32> to vector<2x16xf32>
    %751 = vector.broadcast %0 : vector<2x1xf32> to vector<2x16xf32>
    %752 = arith.divf %750, %751 : vector<2x16xf32>
    %cst_177 = arith.constant dense<0.000000e+00> : vector<2x16xf32>
    %753 = vector.multi_reduction <add>, %749, %cst_177 [0] : vector<8x2x16xf32> to vector<2x16xf32>
    %754 = vector.broadcast %0 : vector<2x1xf32> to vector<2x16xf32>
    %755 = arith.divf %753, %754 : vector<2x16xf32>
    %c0_178 = arith.constant 0 : index
    %c0_179 = arith.constant 0 : index
    %756 = vector.load %arg8[%c0_178, %c0_179] : memref<64x16xf32, #tpu.memory_space<vmem>>, vector<64x16xf32>
    %c0_180 = arith.constant 0 : index
    %c0_181 = arith.constant 0 : index
    %757 = vector.load %arg9[%c0_180, %c0_181] : memref<1x16xf32, #tpu.memory_space<vmem>>, vector<1x16xf32>
    %c2 = arith.constant 2 : index
    %c0_182 = arith.constant 0 : index
    %c0_183 = arith.constant 0 : index
    %758 = vector.load %arg16[%c2, %c0_182, %c0_183] : memref<14x2x16xf32, #tpu.memory_space<vmem>>, vector<9x2x16xf32>
    %c3_184 = arith.constant 3 : index
    %c0_185 = arith.constant 0 : index
    %c0_186 = arith.constant 0 : index
    %759 = vector.load %arg16[%c3_184, %c0_185, %c0_186] : memref<14x2x16xf32, #tpu.memory_space<vmem>>, vector<9x2x16xf32>
    %c2_187 = arith.constant 2 : index
    %c0_188 = arith.constant 0 : index
    %c0_189 = arith.constant 0 : index
    %760 = vector.load %arg17[%c2_187, %c0_188, %c0_189] : memref<14x2x16xf32, #tpu.memory_space<vmem>>, vector<9x2x16xf32>
    %c3_190 = arith.constant 3 : index
    %c0_191 = arith.constant 0 : index
    %c0_192 = arith.constant 0 : index
    %761 = vector.load %arg17[%c3_190, %c0_191, %c0_192] : memref<14x2x16xf32, #tpu.memory_space<vmem>>, vector<9x2x16xf32>
    %762 = tpu.concatenate %758, %759, %760, %761 in 2 : vector<9x2x16xf32>, vector<9x2x16xf32>, vector<9x2x16xf32>, vector<9x2x16xf32> -> vector<9x2x64xf32>
    %763 = vector.shape_cast %762 : vector<9x2x64xf32> to vector<18x64xf32>
    %cst_193 = arith.constant dense<0.000000e+00> : vector<18x16xf32>
    %764 = tpu.matmul %763, %756, %cst_193 {dimension_numbers = #tpu.dot_dimension_numbers<[1], [0], [0], [1], [0, 0, 1, 1], [], []>} : vector<18x64xf32>, vector<64x16xf32>, vector<18x16xf32> -> vector<18x16xf32>
    %765 = vector.broadcast %757 : vector<1x16xf32> to vector<18x16xf32>
    %766 = arith.addf %764, %765 : vector<18x16xf32>
    %cst_194 = arith.constant 0.000000e+00 : f32
    %767 = vector.broadcast %cst_194 : f32 to vector<18x16xf32>
    %768 = arith.maximumf %766, %767 : vector<18x16xf32>
    %769 = vector.shape_cast %768 : vector<18x16xf32> to vector<9x2x16xf32>
    %cst_195 = arith.constant dense<0xFF800000> : vector<2x16xf32>
    %770 = vector.multi_reduction <maximumf>, %769, %cst_195 [0] : vector<9x2x16xf32> to vector<2x16xf32>
    %c0_196 = arith.constant 0 : index
    %c0_197 = arith.constant 0 : index
    %771 = vector.load %arg10[%c0_196, %c0_197] : memref<96x16xf32, #tpu.memory_space<vmem>>, vector<96x16xf32>
    %c0_198 = arith.constant 0 : index
    %c0_199 = arith.constant 0 : index
    %772 = vector.load %arg11[%c0_198, %c0_199] : memref<1x16xf32, #tpu.memory_space<vmem>>, vector<1x16xf32>
    %c1 = arith.constant 1 : index
    %c0_200 = arith.constant 0 : index
    %c0_201 = arith.constant 0 : index
    %773 = vector.load %arg16[%c1, %c0_200, %c0_201] : memref<14x2x16xf32, #tpu.memory_space<vmem>>, vector<10x2x16xf32>
    %c2_202 = arith.constant 2 : index
    %c0_203 = arith.constant 0 : index
    %c0_204 = arith.constant 0 : index
    %774 = vector.load %arg16[%c2_202, %c0_203, %c0_204] : memref<14x2x16xf32, #tpu.memory_space<vmem>>, vector<10x2x16xf32>
    %c3_205 = arith.constant 3 : index
    %c0_206 = arith.constant 0 : index
    %c0_207 = arith.constant 0 : index
    %775 = vector.load %arg16[%c3_205, %c0_206, %c0_207] : memref<14x2x16xf32, #tpu.memory_space<vmem>>, vector<10x2x16xf32>
    %c1_208 = arith.constant 1 : index
    %c0_209 = arith.constant 0 : index
    %c0_210 = arith.constant 0 : index
    %776 = vector.load %arg17[%c1_208, %c0_209, %c0_210] : memref<14x2x16xf32, #tpu.memory_space<vmem>>, vector<10x2x16xf32>
    %c2_211 = arith.constant 2 : index
    %c0_212 = arith.constant 0 : index
    %c0_213 = arith.constant 0 : index
    %777 = vector.load %arg17[%c2_211, %c0_212, %c0_213] : memref<14x2x16xf32, #tpu.memory_space<vmem>>, vector<10x2x16xf32>
    %c3_214 = arith.constant 3 : index
    %c0_215 = arith.constant 0 : index
    %c0_216 = arith.constant 0 : index
    %778 = vector.load %arg17[%c3_214, %c0_215, %c0_216] : memref<14x2x16xf32, #tpu.memory_space<vmem>>, vector<10x2x16xf32>
    %779 = tpu.concatenate %773, %774, %775, %776, %777, %778 in 2 : vector<10x2x16xf32>, vector<10x2x16xf32>, vector<10x2x16xf32>, vector<10x2x16xf32>, vector<10x2x16xf32>, vector<10x2x16xf32> -> vector<10x2x96xf32>
    %780 = vector.shape_cast %779 : vector<10x2x96xf32> to vector<20x96xf32>
    %cst_217 = arith.constant dense<0.000000e+00> : vector<20x16xf32>
    %781 = tpu.matmul %780, %771, %cst_217 {dimension_numbers = #tpu.dot_dimension_numbers<[1], [0], [0], [1], [0, 0, 1, 1], [], []>} : vector<20x96xf32>, vector<96x16xf32>, vector<20x16xf32> -> vector<20x16xf32>
    %782 = vector.broadcast %772 : vector<1x16xf32> to vector<20x16xf32>
    %783 = arith.addf %781, %782 : vector<20x16xf32>
    %cst_218 = arith.constant 0.000000e+00 : f32
    %784 = vector.broadcast %cst_218 : f32 to vector<20x16xf32>
    %785 = arith.maximumf %783, %784 : vector<20x16xf32>
    %786 = vector.shape_cast %785 : vector<20x16xf32> to vector<10x2x16xf32>
    %cst_219 = arith.constant dense<0xFF800000> : vector<2x16xf32>
    %787 = vector.multi_reduction <maximumf>, %786, %cst_219 [0] : vector<10x2x16xf32> to vector<2x16xf32>
    %c0_220 = arith.constant 0 : index
    %c0_221 = arith.constant 0 : index
    %788 = vector.load %arg12[%c0_220, %c0_221] : memref<128x16xf32, #tpu.memory_space<vmem>>, vector<128x16xf32>
    %c0_222 = arith.constant 0 : index
    %c0_223 = arith.constant 0 : index
    %789 = vector.load %arg13[%c0_222, %c0_223] : memref<1x16xf32, #tpu.memory_space<vmem>>, vector<1x16xf32>
    %c0_224 = arith.constant 0 : index
    %c0_225 = arith.constant 0 : index
    %c0_226 = arith.constant 0 : index
    %790 = vector.load %arg16[%c0_224, %c0_225, %c0_226] : memref<14x2x16xf32, #tpu.memory_space<vmem>>, vector<11x2x16xf32>
    %c1_227 = arith.constant 1 : index
    %c0_228 = arith.constant 0 : index
    %c0_229 = arith.constant 0 : index
    %791 = vector.load %arg16[%c1_227, %c0_228, %c0_229] : memref<14x2x16xf32, #tpu.memory_space<vmem>>, vector<11x2x16xf32>
    %c2_230 = arith.constant 2 : index
    %c0_231 = arith.constant 0 : index
    %c0_232 = arith.constant 0 : index
    %792 = vector.load %arg16[%c2_230, %c0_231, %c0_232] : memref<14x2x16xf32, #tpu.memory_space<vmem>>, vector<11x2x16xf32>
    %c3_233 = arith.constant 3 : index
    %c0_234 = arith.constant 0 : index
    %c0_235 = arith.constant 0 : index
    %793 = vector.load %arg16[%c3_233, %c0_234, %c0_235] : memref<14x2x16xf32, #tpu.memory_space<vmem>>, vector<11x2x16xf32>
    %c0_236 = arith.constant 0 : index
    %c0_237 = arith.constant 0 : index
    %c0_238 = arith.constant 0 : index
    %794 = vector.load %arg17[%c0_236, %c0_237, %c0_238] : memref<14x2x16xf32, #tpu.memory_space<vmem>>, vector<11x2x16xf32>
    %c1_239 = arith.constant 1 : index
    %c0_240 = arith.constant 0 : index
    %c0_241 = arith.constant 0 : index
    %795 = vector.load %arg17[%c1_239, %c0_240, %c0_241] : memref<14x2x16xf32, #tpu.memory_space<vmem>>, vector<11x2x16xf32>
    %c2_242 = arith.constant 2 : index
    %c0_243 = arith.constant 0 : index
    %c0_244 = arith.constant 0 : index
    %796 = vector.load %arg17[%c2_242, %c0_243, %c0_244] : memref<14x2x16xf32, #tpu.memory_space<vmem>>, vector<11x2x16xf32>
    %c3_245 = arith.constant 3 : index
    %c0_246 = arith.constant 0 : index
    %c0_247 = arith.constant 0 : index
    %797 = vector.load %arg17[%c3_245, %c0_246, %c0_247] : memref<14x2x16xf32, #tpu.memory_space<vmem>>, vector<11x2x16xf32>
    %798 = tpu.concatenate %790, %791, %792, %793, %794, %795, %796, %797 in 2 : vector<11x2x16xf32>, vector<11x2x16xf32>, vector<11x2x16xf32>, vector<11x2x16xf32>, vector<11x2x16xf32>, vector<11x2x16xf32>, vector<11x2x16xf32>, vector<11x2x16xf32> -> vector<11x2x128xf32>
    %799 = vector.shape_cast %798 : vector<11x2x128xf32> to vector<22x128xf32>
    %cst_248 = arith.constant dense<0.000000e+00> : vector<22x16xf32>
    %800 = tpu.matmul %799, %788, %cst_248 {dimension_numbers = #tpu.dot_dimension_numbers<[1], [0], [0], [1], [0, 0, 1, 1], [], []>} : vector<22x128xf32>, vector<128x16xf32>, vector<22x16xf32> -> vector<22x16xf32>
    %801 = vector.broadcast %789 : vector<1x16xf32> to vector<22x16xf32>
    %802 = arith.addf %800, %801 : vector<22x16xf32>
    %cst_249 = arith.constant 0.000000e+00 : f32
    %803 = vector.broadcast %cst_249 : f32 to vector<22x16xf32>
    %804 = arith.maximumf %802, %803 : vector<22x16xf32>
    %805 = vector.shape_cast %804 : vector<22x16xf32> to vector<11x2x16xf32>
    %cst_250 = arith.constant dense<0xFF800000> : vector<2x16xf32>
    %806 = vector.multi_reduction <maximumf>, %805, %cst_250 [0] : vector<11x2x16xf32> to vector<2x16xf32>
    %c0_251 = arith.constant 0 : index
    %c0_252 = arith.constant 0 : index
    %807 = vector.load %arg3[%c0_251, %c0_252] : memref<2x32xf32, #tpu.memory_space<vmem>>, vector<2x32xf32>
    %808 = tpu.concatenate %752, %755, %770, %787, %806, %807 in 1 : vector<2x16xf32>, vector<2x16xf32>, vector<2x16xf32>, vector<2x16xf32>, vector<2x16xf32>, vector<2x32xf32> -> vector<2x112xf32>
    %c0_253 = arith.constant 0 : index
    %c0_254 = arith.constant 0 : index
    %809 = vector.load %arg14[%c0_253, %c0_254] : memref<2x112xf32, #tpu.memory_space<vmem>>, vector<2x112xf32>
    tpu.vector_store %arg14[%c0_253, %c0_254], %808 {strides = array<i32>} : memref<2x112xf32, #tpu.memory_space<vmem>>, vector<2x112xf32>,
    return
  }
  func.func @transform_0(%arg0: i32) -> (i32, i32) {
    %c0_i32 = arith.constant 0 : i32
    %c0_i32_0 = arith.constant 0 : i32
    return %arg0, %c0_i32 : i32, i32
  }
  func.func @transform_1(%arg0: i32) -> (i32, i32, i32) {
    %c0_i32 = arith.constant 0 : i32
    %c0_i32_0 = arith.constant 0 : i32
    %c0_i32_1 = arith.constant 0 : i32
    return %c0_i32, %arg0, %c0_i32_0 : i32, i32, i32
  }
  func.func @transform_2(%arg0: i32) -> (i32, i32) {
    %c0_i32 = arith.constant 0 : i32
    %c0_i32_0 = arith.constant 0 : i32
    return %arg0, %c0_i32 : i32, i32
  }
  func.func @transform_3(%arg0: i32) -> (i32, i32) {
    %c0_i32 = arith.constant 0 : i32
    %c0_i32_0 = arith.constant 0 : i32
    %c0_i32_1 = arith.constant 0 : i32
    return %c0_i32, %c0_i32_0 : i32, i32
  }
  func.func @transform_4(%arg0: i32) -> (i32, i32) {
    %c0_i32 = arith.constant 0 : i32
    %c0_i32_0 = arith.constant 0 : i32
    %c0_i32_1 = arith.constant 0 : i32
    return %c0_i32, %c0_i32_0 : i32, i32
  }
  func.func @transform_5(%arg0: i32) -> (i32, i32) {
    %c0_i32 = arith.constant 0 : i32
    %c0_i32_0 = arith.constant 0 : i32
    %c0_i32_1 = arith.constant 0 : i32
    return %c0_i32, %c0_i32_0 : i32, i32
  }
  func.func @transform_6(%arg0: i32) -> (i32, i32) {
    %c0_i32 = arith.constant 0 : i32
    %c0_i32_0 = arith.constant 0 : i32
    %c0_i32_1 = arith.constant 0 : i32
    return %c0_i32, %c0_i32_0 : i32, i32
  }
  func.func @transform_7(%arg0: i32) -> (i32, i32) {
    %c0_i32 = arith.constant 0 : i32
    %c0_i32_0 = arith.constant 0 : i32
    %c0_i32_1 = arith.constant 0 : i32
    return %c0_i32, %c0_i32_0 : i32, i32
  }
  func.func @transform_8(%arg0: i32) -> (i32, i32) {
    %c0_i32 = arith.constant 0 : i32
    %c0_i32_0 = arith.constant 0 : i32
    %c0_i32_1 = arith.constant 0 : i32
    return %c0_i32, %c0_i32_0 : i32, i32
  }
  func.func @transform_9(%arg0: i32) -> (i32, i32) {
    %c0_i32 = arith.constant 0 : i32
    %c0_i32_0 = arith.constant 0 : i32
    %c0_i32_1 = arith.constant 0 : i32
    return %c0_i32, %c0_i32_0 : i32, i32
  }
  func.func @transform_10(%arg0: i32) -> (i32, i32) {
    %c0_i32 = arith.constant 0 : i32
    %c0_i32_0 = arith.constant 0 : i32
    %c0_i32_1 = arith.constant 0 : i32
    return %c0_i32, %c0_i32_0 : i32, i32
  }
  func.func @transform_11(%arg0: i32) -> (i32, i32) {
    %c0_i32 = arith.constant 0 : i32
    %c0_i32_0 = arith.constant 0 : i32
    %c0_i32_1 = arith.constant 0 : i32
    return %c0_i32, %c0_i32_0 : i32, i32
  }
  func.func @transform_12(%arg0: i32) -> (i32, i32) {
    %c0_i32 = arith.constant 0 : i32
    %c0_i32_0 = arith.constant 0 : i32
    %c0_i32_1 = arith.constant 0 : i32
    return %c0_i32, %c0_i32_0 : i32, i32
  }
  func.func @transform_13(%arg0: i32) -> (i32, i32) {
    %c0_i32 = arith.constant 0 : i32
    %c0_i32_0 = arith.constant 0 : i32
    return %arg0, %c0_i32 : i32, i32
  }
}

</mosaic_0001>

<llo_original>
// kernel: tpu_custom_call.1
$region0: #{tpu_custom_call.1}
  #allocation0 [shape = 'u32[]', space=smem, size = 0x4, offset = 0x4, fixed_abs, tag = 'smem constant byte address 0x4 - core index']
  #allocation1 [shape = 'u32[144,128]{1,0:T(1,128)}', space=vmem, size = 0x12000, scoped, tag = 'internal scratch']
  #allocation2 [shape = 'f32[8,2,96]{2,1,0:T(2,128)}', space=vmem, size = 0x2000, scoped, tag = 'scratch operand']
  #allocation3 [shape = 'f32[14,2,16]{2,1,0:T(2,128)}', space=vmem, size = 0x3800, scoped, tag = 'scratch operand']
  #allocation4 [shape = 'f32[14,2,16]{2,1,0:T(2,128)}', space=vmem, size = 0x3800, scoped, tag = 'scratch operand']
  %s0 = inlined_call_operand.hbm [shape: f32[2,1], index: 0, kind: input, shape index: {}]
  %s1 = inlined_call_operand.hbm [shape: f32[8,2,32], index: 1, kind: input, shape index: {}]
  %s2 = inlined_call_operand.hbm [shape: f32[2,32], index: 2, kind: input, shape index: {}]
  %s3 = inlined_call_operand.hbm [shape: f32[32,96], index: 3, kind: input, shape index: {}]
  %s4 = inlined_call_operand.hbm [shape: f32[1,96], index: 4, kind: input, shape index: {}]
  %s5 = inlined_call_operand.hbm [shape: f32[32,96], index: 5, kind: input, shape index: {}]
  %s6 = inlined_call_operand.hbm [shape: f32[1,32], index: 6, kind: input, shape index: {}]
  %s7 = inlined_call_operand.hbm [shape: f32[64,16], index: 7, kind: input, shape index: {}]
  %s8 = inlined_call_operand.hbm [shape: f32[1,16], index: 8, kind: input, shape index: {}]
  %s9 = inlined_call_operand.hbm [shape: f32[96,16], index: 9, kind: input, shape index: {}]
  %s10 = inlined_call_operand.hbm [shape: f32[1,16], index: 10, kind: input, shape index: {}]
  %s11 = inlined_call_operand.hbm [shape: f32[128,16], index: 11, kind: input, shape index: {}]
  %s12 = inlined_call_operand.hbm [shape: f32[1,16], index: 12, kind: input, shape index: {}]
  %s13 = inlined_call_operand.hbm [shape: f32[2,112], index: 13, kind: output, shape index: {}]
  %s14 = sld [smem:[#allocation0]]
  $region114: #{tpu_custom_call.1} parent=0
    _
  %s16 = ssub.s32 1, %s14
  %s17 = scalar_select 0, %s16, %s14
  $region1: #{tpu_custom_call.1} parent=0
    #allocation5 [shape = 'u8[1024]{0}', space=vmem, size = 0x400, scoped, tag = 'input window, operand 0, single buffered']
    #allocation6 [shape = 's32[1]{0}', space=sflag, size = 0x4, scoped, tag = 'scoped memory for tpu_custom_call.1']
    #allocation7 [shape = 's32[1]{0}', space=sflag, size = 0x4, scoped, tag = 'scoped memory for tpu_custom_call.1']
    #allocation8 [shape = 'u8[8192]{0}', space=vmem, size = 0x2000, scoped, tag = 'input window, operand 1, single buffered']
    #allocation9 [shape = 's32[1]{0}', space=sflag, size = 0x4, scoped, tag = 'scoped memory for tpu_custom_call.1']
    #allocation10 [shape = 'u8[1024]{0}', space=vmem, size = 0x400, scoped, tag = 'input window, operand 2, single buffered']
    #allocation11 [shape = 'u8[16384]{0}', space=vmem, size = 0x4000, scoped, tag = 'input window, operand 3, single buffered']
    #allocation12 [shape = 's32[1]{0}', space=sflag, size = 0x4, scoped, tag = 'scoped memory for tpu_custom_call.1']
    #allocation13 [shape = 'u8[512]{0}', space=vmem, size = 0x400, scoped, tag = 'input window, operand 4, single buffered']
    #allocation14 [shape = 'u8[16384]{0}', space=vmem, size = 0x4000, scoped, tag = 'input window, operand 5, single buffered']
    #allocation15 [shape = 's32[1]{0}', space=sflag, size = 0x4, scoped, tag = 'scoped memory for tpu_custom_call.1']
    #allocation16 [shape = 'u8[512]{0}', space=vmem, size = 0x400, scoped, tag = 'input window, operand 6, single buffered']
    #allocation17 [shape = 'u8[32768]{0}', space=vmem, size = 0x8000, scoped, tag = 'input window, operand 7, single buffered']
    #allocation18 [shape = 's32[1]{0}', space=sflag, size = 0x4, scoped, tag = 'scoped memory for tpu_custom_call.1']
    #allocation19 [shape = 'u8[512]{0}', space=vmem, size = 0x400, scoped, tag = 'input window, operand 8, single buffered']
    #allocation20 [shape = 'u8[49152]{0}', space=vmem, size = 0xc000, scoped, tag = 'input window, operand 9, single buffered']
    #allocation21 [shape = 's32[1]{0}', space=sflag, size = 0x4, scoped, tag = 'scoped memory for tpu_custom_call.1']
    #allocation22 [shape = 'u8[512]{0}', space=vmem, size = 0x400, scoped, tag = 'input window, operand 10, single buffered']
    #allocation23 [shape = 'u8[65536]{0}', space=vmem, size = 0x10000, scoped, tag = 'input window, operand 11, single buffered']
    #allocation24 [shape = 's32[1]{0}', space=sflag, size = 0x4, scoped, tag = 'scoped memory for tpu_custom_call.1']
    #allocation25 [shape = 'u8[512]{0}', space=vmem, size = 0x400, scoped, tag = 'input window, operand 12, single buffered']
    #allocation26 [shape = 'u8[1024]{0}', space=vmem, size = 0x400, scoped, tag = 'output window, operand 0, single buffered']
    %18 = vsyncpa [#allocation6], 0
    %19 = vsyncpa [#allocation9], 0
    %20 = vsyncpa [#allocation12], 0
    %21 = vsyncpa [#allocation15], 0
    %22 = vsyncpa [#allocation18], 0
    %23 = vsyncpa [#allocation21], 0
    %24 = vsyncpa [#allocation24], 0
    %25 = vsyncpa [#allocation7], 0
    // Predicated region
    $region2: #{tpu_custom_call.1} parent=1 // pred_check
      _
    $region3: #{tpu_custom_call.1} parent=1 // pred_check_branch
      %27 = sbr.rel (0) target = $region5
    $region4: #{tpu_custom_call.1} parent=1 // pred_region
      %s29 = ssub.s32 32, 32
      %30 = vsyncadd [#allocation6], %s29
      %s32 = sshll.u32 [#allocation5], 4
      %s33 = int_to_ptr.vmem [resolvable:$true] %s32
      %35 = dma.hbm_to_vmem [thread:$0]  %s0, 32, %s33, [#allocation6]
    $region5: #{tpu_custom_call.1} parent=1 // pred_fallthru
      _
    // Predicated region
    $region6: #{tpu_custom_call.1} parent=1 // pred_check
      _
    $region7: #{tpu_custom_call.1} parent=1 // pred_check_branch
      %37 = sbr.rel (0) target = $region9
    $region8: #{tpu_custom_call.1} parent=1 // pred_region
      %s39 = ssub.s32 256, 256
      %40 = vsyncadd [#allocation9], %s39
      %s41 = sshll.u32 [#allocation8], 4
      %s42 = int_to_ptr.vmem [resolvable:$true] %s41
      %47 = dma.hbm_to_vmem [thread:$0]  %s1, 256, %s42, [#allocation9], 32, 32, 2
    $region9: #{tpu_custom_call.1} parent=1 // pred_fallthru
      _
    // Predicated region
    $region10: #{tpu_custom_call.1} parent=1 // pred_check
      _
    $region11: #{tpu_custom_call.1} parent=1 // pred_check_branch
      %49 = sbr.rel (0) target = $region13
    $region12: #{tpu_custom_call.1} parent=1 // pred_region
      %s51 = ssub.s32 32, 32
      %52 = vsyncadd [#allocation9], %s51
      %s54 = sshll.u32 [#allocation10], 4
      %s55 = int_to_ptr.vmem [resolvable:$true] %s54
      %57 = dma.hbm_to_vmem [thread:$0]  %s2, 32, %s55, [#allocation9]
    $region13: #{tpu_custom_call.1} parent=1 // pred_fallthru
      _
    // Predicated region
    $region14: #{tpu_custom_call.1} parent=1 // pred_check
      _
    $region15: #{tpu_custom_call.1} parent=1 // pred_check_branch
      %59 = sbr.rel (0) target = $region17
    $region16: #{tpu_custom_call.1} parent=1 // pred_region
      %s61 = ssub.s32 512, 512
      %62 = vsyncadd [#allocation12], %s61
      %s63 = sshll.u32 [#allocation11], 4
      %s64 = int_to_ptr.vmem [resolvable:$true] %s63
      %69 = dma.hbm_to_vmem [thread:$0]  %s3, 512, %s64, [#allocation12], 128, 128, 8
    $region17: #{tpu_custom_call.1} parent=1 // pred_fallthru
      _
    // Predicated region
    $region18: #{tpu_custom_call.1} parent=1 // pred_check
      _
    $region19: #{tpu_custom_call.1} parent=1 // pred_check_branch
      %71 = sbr.rel (0) target = $region21
    $region20: #{tpu_custom_call.1} parent=1 // pred_region
      %s73 = ssub.s32 16, 16
      %74 = vsyncadd [#allocation12], %s73
      %s76 = sshll.u32 [#allocation13], 4
      %s77 = int_to_ptr.vmem [resolvable:$true] %s76
      %79 = dma.hbm_to_vmem [thread:$0]  %s4, 16, %s77, [#allocation12]
    $region21: #{tpu_custom_call.1} parent=1 // pred_fallthru
      _
    // Predicated region
    $region22: #{tpu_custom_call.1} parent=1 // pred_check
      _
    $region23: #{tpu_custom_call.1} parent=1 // pred_check_branch
      %81 = sbr.rel (0) target = $region25
    $region24: #{tpu_custom_call.1} parent=1 // pred_region
      %s83 = ssub.s32 512, 512
      %84 = vsyncadd [#allocation15], %s83
      %s85 = sshll.u32 [#allocation14], 4
      %s86 = int_to_ptr.vmem [resolvable:$true] %s85
      %91 = dma.hbm_to_vmem [thread:$0]  %s5, 512, %s86, [#allocation15], 128, 128, 8
    $region25: #{tpu_custom_call.1} parent=1 // pred_fallthru
      _
    // Predicated region
    $region26: #{tpu_custom_call.1} parent=1 // pred_check
      _
    $region27: #{tpu_custom_call.1} parent=1 // pred_check_branch
      %93 = sbr.rel (0) target = $region29
    $region28: #{tpu_custom_call.1} parent=1 // pred_region
      %s95 = ssub.s32 16, 16
      %96 = vsyncadd [#allocation15], %s95
      %s98 = sshll.u32 [#allocation16], 4
      %s99 = int_to_ptr.vmem [resolvable:$true] %s98
      %101 = dma.hbm_to_vmem [thread:$0]  %s6, 16, %s99, [#allocation15]
    $region29: #{tpu_custom_call.1} parent=1 // pred_fallthru
      _
    // Predicated region
    $region30: #{tpu_custom_call.1} parent=1 // pred_check
      _
    $region31: #{tpu_custom_call.1} parent=1 // pred_check_branch
      %103 = sbr.rel (0) target = $region33
    $region32: #{tpu_custom_call.1} parent=1 // pred_region
      %s105 = ssub.s32 1024, 1024
      %106 = vsyncadd [#allocation18], %s105
      %s107 = sshll.u32 [#allocation17], 4
      %s108 = int_to_ptr.vmem [resolvable:$true] %s107
      %113 = dma.hbm_to_vmem [thread:$0]  %s7, 1024, %s108, [#allocation18], 128, 128, 8
    $region33: #{tpu_custom_call.1} parent=1 // pred_fallthru
      _
    // Predicated region
    $region34: #{tpu_custom_call.1} parent=1 // pred_check
      _
    $region35: #{tpu_custom_call.1} parent=1 // pred_check_branch
      %115 = sbr.rel (0) target = $region37
    $region36: #{tpu_custom_call.1} parent=1 // pred_region
      %s117 = ssub.s32 16, 16
      %118 = vsyncadd [#allocation18], %s117
      %s120 = sshll.u32 [#allocation19], 4
      %s121 = int_to_ptr.vmem [resolvable:$true] %s120
      %123 = dma.hbm_to_vmem [thread:$0]  %s8, 16, %s121, [#allocation18]
    $region37: #{tpu_custom_call.1} parent=1 // pred_fallthru
      _
    // Predicated region
    $region38: #{tpu_custom_call.1} parent=1 // pred_check
      _
    $region39: #{tpu_custom_call.1} parent=1 // pred_check_branch
      %125 = sbr.rel (0) target = $region41
    $region40: #{tpu_custom_call.1} parent=1 // pred_region
      %s127 = ssub.s32 1536, 1536
      %128 = vsyncadd [#allocation21], %s127
      %s129 = sshll.u32 [#allocation20], 4
      %s130 = int_to_ptr.vmem [resolvable:$true] %s129
      %135 = dma.hbm_to_vmem [thread:$0]  %s9, 1536, %s130, [#allocation21], 128, 128, 8
    $region41: #{tpu_custom_call.1} parent=1 // pred_fallthru
      _
    // Predicated region
    $region42: #{tpu_custom_call.1} parent=1 // pred_check
      _
    $region43: #{tpu_custom_call.1} parent=1 // pred_check_branch
      %137 = sbr.rel (0) target = $region45
    $region44: #{tpu_custom_call.1} parent=1 // pred_region
      %s139 = ssub.s32 16, 16
      %140 = vsyncadd [#allocation21], %s139
      %s142 = sshll.u32 [#allocation22], 4
      %s143 = int_to_ptr.vmem [resolvable:$true] %s142
      %145 = dma.hbm_to_vmem [thread:$0]  %s10, 16, %s143, [#allocation21]
    $region45: #{tpu_custom_call.1} parent=1 // pred_fallthru
      _
    // Predicated region
    $region46: #{tpu_custom_call.1} parent=1 // pred_check
      _
    $region47: #{tpu_custom_call.1} parent=1 // pred_check_branch
      %147 = sbr.rel (0) target = $region49
    $region48: #{tpu_custom_call.1} parent=1 // pred_region
      %s149 = ssub.s32 2048, 2048
      %150 = vsyncadd [#allocation24], %s149
      %s151 = sshll.u32 [#allocation23], 4
      %s152 = int_to_ptr.vmem [resolvable:$true] %s151
      %157 = dma.hbm_to_vmem [thread:$0]  %s11, 2048, %s152, [#allocation24], 128, 128, 8
    $region49: #{tpu_custom_call.1} parent=1 // pred_fallthru
      _
    // Predicated region
    $region50: #{tpu_custom_call.1} parent=1 // pred_check
      _
    $region51: #{tpu_custom_call.1} parent=1 // pred_check_branch
      %159 = sbr.rel (0) target = $region53
    $region52: #{tpu_custom_call.1} parent=1 // pred_region
      %s161 = ssub.s32 16, 16
      %162 = vsyncadd [#allocation24], %s161
      %s164 = sshll.u32 [#allocation25], 4
      %s165 = int_to_ptr.vmem [resolvable:$true] %s164
      %167 = dma.hbm_to_vmem [thread:$0]  %s12, 16, %s165, [#allocation24]
    $region53: #{tpu_custom_call.1} parent=1 // pred_fallthru
      _
    // Predicated region
    $region54: #{tpu_custom_call.1} parent=1 // pred_check
      _
    $region55: #{tpu_custom_call.1} parent=1 // pred_check_branch
      %169 = sbr.rel (0) target = $region57
    $region56: #{tpu_custom_call.1} parent=1 // pred_region
      %170 = dma.done [#allocation6], 32
    $region57: #{tpu_custom_call.1} parent=1 // pred_fallthru
      _
    // Predicated region
    $region58: #{tpu_custom_call.1} parent=1 // pred_check
      _
    $region59: #{tpu_custom_call.1} parent=1 // pred_check_branch
      %172 = sbr.rel (0) target = $region61
    $region60: #{tpu_custom_call.1} parent=1 // pred_region
      %173 = dma.done [#allocation9], 256
    $region61: #{tpu_custom_call.1} parent=1 // pred_fallthru
      _
    // Predicated region
    $region62: #{tpu_custom_call.1} parent=1 // pred_check
      _
    $region63: #{tpu_custom_call.1} parent=1 // pred_check_branch
      %175 = sbr.rel (0) target = $region65
    $region64: #{tpu_custom_call.1} parent=1 // pred_region
      %176 = dma.done [#allocation9], 32
    $region65: #{tpu_custom_call.1} parent=1 // pred_fallthru
      _
    // Predicated region
    $region66: #{tpu_custom_call.1} parent=1 // pred_check
      _
    $region67: #{tpu_custom_call.1} parent=1 // pred_check_branch
      %178 = sbr.rel (0) target = $region69
    $region68: #{tpu_custom_call.1} parent=1 // pred_region
      %179 = dma.done [#allocation12], 512
    $region69: #{tpu_custom_call.1} parent=1 // pred_fallthru
      _
    // Predicated region
    $region70: #{tpu_custom_call.1} parent=1 // pred_check
      _
    $region71: #{tpu_custom_call.1} parent=1 // pred_check_branch
      %181 = sbr.rel (0) target = $region73
    $region72: #{tpu_custom_call.1} parent=1 // pred_region
      %182 = dma.done [#allocation12], 16
    $region73: #{tpu_custom_call.1} parent=1 // pred_fallthru
      _
    // Predicated region
    $region74: #{tpu_custom_call.1} parent=1 // pred_check
      _
    $region75: #{tpu_custom_call.1} parent=1 // pred_check_branch
      %184 = sbr.rel (0) target = $region77
    $region76: #{tpu_custom_call.1} parent=1 // pred_region
      %185 = dma.done [#allocation15], 512
    $region77: #{tpu_custom_call.1} parent=1 // pred_fallthru
      _
    // Predicated region
    $region78: #{tpu_custom_call.1} parent=1 // pred_check
      _
    $region79: #{tpu_custom_call.1} parent=1 // pred_check_branch
      %187 = sbr.rel (0) target = $region81
    $region80: #{tpu_custom_call.1} parent=1 // pred_region
      %188 = dma.done [#allocation15], 16
    $region81: #{tpu_custom_call.1} parent=1 // pred_fallthru
      _
    // Predicated region
    $region82: #{tpu_custom_call.1} parent=1 // pred_check
      _
    $region83: #{tpu_custom_call.1} parent=1 // pred_check_branch
      %190 = sbr.rel (0) target = $region85
    $region84: #{tpu_custom_call.1} parent=1 // pred_region
      %191 = dma.done [#allocation18], 1024
    $region85: #{tpu_custom_call.1} parent=1 // pred_fallthru
      _
    // Predicated region
    $region86: #{tpu_custom_call.1} parent=1 // pred_check
      _
    $region87: #{tpu_custom_call.1} parent=1 // pred_check_branch
      %193 = sbr.rel (0) target = $region89
    $region88: #{tpu_custom_call.1} parent=1 // pred_region
      %194 = dma.done [#allocation18], 16
    $region89: #{tpu_custom_call.1} parent=1 // pred_fallthru
      _
    // Predicated region
    $region90: #{tpu_custom_call.1} parent=1 // pred_check
      _
    $region91: #{tpu_custom_call.1} parent=1 // pred_check_branch
      %196 = sbr.rel (0) target = $region93
    $region92: #{tpu_custom_call.1} parent=1 // pred_region
      %197 = dma.done [#allocation21], 1536
    $region93: #{tpu_custom_call.1} parent=1 // pred_fallthru
      _
    // Predicated region
    $region94: #{tpu_custom_call.1} parent=1 // pred_check
      _
    $region95: #{tpu_custom_call.1} parent=1 // pred_check_branch
      %199 = sbr.rel (0) target = $region97
    $region96: #{tpu_custom_call.1} parent=1 // pred_region
      %200 = dma.done [#allocation21], 16
    $region97: #{tpu_custom_call.1} parent=1 // pred_fallthru
      _
    // Predicated region
    $region98: #{tpu_custom_call.1} parent=1 // pred_check
      _
    $region99: #{tpu_custom_call.1} parent=1 // pred_check_branch
      %202 = sbr.rel (0) target = $region101
    $region100: #{tpu_custom_call.1} parent=1 // pred_region
      %203 = dma.done [#allocation24], 2048
    $region101: #{tpu_custom_call.1} parent=1 // pred_fallthru
      _
    // Predicated region
    $region102: #{tpu_custom_call.1} parent=1 // pred_check
      _
    $region103: #{tpu_custom_call.1} parent=1 // pred_check_branch
      %205 = sbr.rel (0) target = $region105
    $region104: #{tpu_custom_call.1} parent=1 // pred_region
      %206 = dma.done [#allocation24], 16
    $region105: #{tpu_custom_call.1} parent=1 // pred_fallthru
      _
    %v207 = vld [vmem:[#allocation5] sm:$0x3]
    %vm208 = vcmask 123904
    %209 = vst.msk [vmem:[#allocation3] sm:$0x3] %vm208, 0.0
    %210 = vst.msk [vmem:[#allocation3 + $0x2] sm:$0x3] %vm208, 0.0
    %211 = vst.msk [vmem:[#allocation3 + $0x4] sm:$0x3] %vm208, 0.0
    %212 = vst.msk [vmem:[#allocation4] sm:$0x3] %vm208, 0.0
    %213 = vst.msk [vmem:[#allocation4 + $0x2] sm:$0x3] %vm208, 0.0
    %214 = vst.msk [vmem:[#allocation4 + $0x4] sm:$0x3] %vm208, 0.0
    %s215 = scalar_lea.vmem [#allocation3], 22
    %216 = vst.msk [vmem:[%s215] sm:$0x3] %vm208, 0.0
    %217 = vst.msk [vmem:[%s215 + $0x2] sm:$0x3] %vm208, 0.0
    %218 = vst.msk [vmem:[%s215 + $0x4] sm:$0x3] %vm208, 0.0
    %s219 = scalar_lea.vmem [#allocation4], 22
    %220 = vst.msk [vmem:[%s219] sm:$0x3] %vm208, 0.0
    %221 = vst.msk [vmem:[%s219 + $0x2] sm:$0x3] %vm208, 0.0
    %222 = vst.msk [vmem:[%s219 + $0x4] sm:$0x3] %vm208, 0.0
    %v223 = vld [vmem:[#allocation11] sm:$0xff]
    %v224 = vld [vmem:[#allocation11 + $0x8] sm:$0xff]
    %v225 = vld [vmem:[#allocation11 + $0x10] sm:$0xff]
    %v226 = vld [vmem:[#allocation11 + $0x18] sm:$0xff]
    %v227 = vld [vmem:[#allocation13] sm:$0x1]
    %v228 = vld [vmem:[#allocation8] sm:$0x3]
    %v229 = vld [vmem:[#allocation8 + $0x2] sm:$0x3]
    %v230 = vld [vmem:[#allocation8 + $0x4] sm:$0x3]
    %v231 = vld [vmem:[#allocation8 + $0x6] sm:$0x3]
    %v232 = vld [vmem:[#allocation8 + $0x8] sm:$0x3]
    %v233 = vld [vmem:[#allocation8 + $0xa] sm:$0x3]
    %v234 = vld [vmem:[#allocation8 + $0xc] sm:$0x3]
    %v235 = vld [vmem:[#allocation8 + $0xe] sm:$0x3]
    %v237 = vlaneseq
    %v238 = vshrl.u32 %v237, 7
    %v239 = vsub.s32 0, %v238
    %v240 = vrot.slane %v227, %v239
    %v250 = vcombine.low %v228, %v229
    %v251 = vcombine.low %v230, %v231
    %v253 = vunpack.c.l.s4 1983009808
    %v254 = vunpack.c.0.s8 %v253
    %v255 = vlaneseq
    %v256 = vshrl.u32 %v255, 7
    %v257 = vsub.s32 %v254, %v256
    %v258 = vrot.slane %v250, %v257
    %v260 = vunpack.c.l.s4 1983009808
    %v261 = vunpack.c.0.s8 %v260
    %v262 = vlaneseq
    %v263 = vshrl.u32 %v262, 7
    %v264 = vsub.s32 %v261, %v263
    %v265 = vrot.slane %v251, %v264
    %v266 = vcombine.low %v258, %v265
    %v267 = vcombine.low %v232, %v233
    %v268 = vcombine.low %v234, %v235
    %v270 = vunpack.c.l.s4 1983009808
    %v271 = vunpack.c.0.s8 %v270
    %v272 = vlaneseq
    %v273 = vshrl.u32 %v272, 7
    %v274 = vsub.s32 %v271, %v273
    %v275 = vrot.slane %v267, %v274
    %v277 = vunpack.c.l.s4 1983009808
    %v278 = vunpack.c.0.s8 %v277
    %v279 = vlaneseq
    %v280 = vshrl.u32 %v279, 7
    %v281 = vsub.s32 %v278, %v280
    %v282 = vrot.slane %v268, %v281
    %v283 = vcombine.low %v275, %v282
    %vm284 = vcmask 261120
    %v285 = vsel %vm284, %v266, 0
    %v287 = vsel %vm284, %v283, 0
    %289 = vmatprep.subr.mxu0 0.0
    %290 = vmatpush1.msra.mxu0 %v223
    %291 = vmatprep.subr.mxu0 0.0
    %292 = vmatpush1.msra.mxu0 %v224
    %293 = vmatprep.subr.mxu0 0.0
    %294 = vmatpush1.msra.mxu0 %v225
    %295 = vmatprep.subr.mxu0 0.0
    %296 = vmatpush1.msra.mxu0 %v226
    %297 = vmatprep.subr.mxu0 0.0
    %298 = vmatpush1.msra.mxu0 0.0
    %299 = vmatprep.subr.mxu0 0.0
    %300 = vmatpush1.msra.mxu0 0.0
    %301 = vmatprep.subr.mxu0 0.0
    %302 = vmatpush1.msra.mxu0 0.0
    %303 = vmatprep.subr.mxu0 0.0
    %304 = vmatpush1.msra.mxu0 0.0
    %305 = vmatprep.subr.mxu0 0.0
    %306 = vmatpush1.msra.mxu0 0.0
    %307 = vmatprep.subr.mxu0 0.0
    %308 = vmatpush1.msra.mxu0 0.0
    %309 = vmatprep.subr.mxu0 0.0
    %310 = vmatpush1.msra.mxu0 0.0
    %311 = vmatprep.subr.mxu0 0.0
    %312 = vmatpush1.msra.mxu0 0.0
    %313 = vmatprep.subr.mxu0 0.0
    %314 = vmatpush1.msra.mxu0 0.0
    %315 = vmatprep.subr.mxu0 0.0
    %316 = vmatpush1.msra.mxu0 0.0
    %317 = vmatprep.subr.mxu0 0.0
    %318 = vmatpush1.msra.mxu0 0.0
    %319 = vmatprep.subr.mxu0 0.0
    %320 = vmatpush1.msra.mxu0 0.0
    %321 = vmatprep.subr.mxu0 0.0
    %322 = vmatpush1.msra.mxu0 0.0
    %323 = vmatprep.subr.mxu0 0.0
    %324 = vmatpush1.msra.mxu0 0.0
    %325 = vmatprep.subr.mxu0 0.0
    %326 = vmatpush1.msra.mxu0 0.0
    %327 = vmatprep.subr.mxu0 0.0
    %328 = vmatpush1.msra.mxu0 0.0
    %329 = vmatprep.subr.mxu0 0.0
    %330 = vmatpush1.msra.mxu0 0.0
    %331 = vmatprep.subr.mxu0 0.0
    %332 = vmatpush1.msra.mxu0 0.0
    %333 = vmatprep.subr.mxu0 0.0
    %334 = vmatpush1.msra.mxu0 0.0
    %335 = vmatprep.subr.mxu0 0.0
    %336 = vmatpush1.msra.mxu0 0.0
    %337 = vmatprep.subr.mxu0 0.0
    %338 = vmatpush1.msra.mxu0 0.0
    %339 = vmatprep.subr.mxu0 0.0
    %340 = vmatpush1.msra.mxu0 0.0
    %341 = vmatprep.subr.mxu0 0.0
    %342 = vmatpush1.msra.mxu0 0.0
    %343 = vmatprep.subr.mxu0 0.0
    %344 = vmatpush1.msra.mxu0 0.0
    %345 = vmatprep.subr.mxu0 0.0
    %346 = vmatpush1.msra.mxu0 0.0
    %347 = vmatprep.subr.mxu0 0.0
    %348 = vmatpush1.msra.mxu0 0.0
    %349 = vmatprep.subr.mxu0 0.0
    %350 = vmatpush1.msra.mxu0 0.0
    %351 = vmatprep.subr.mxu0 0.0
    %352 = vmatpush1.msra.mxu0 0.0
    %353 = vmatprep.mubr.f32.mxu0 0.0
    %354 = vmatmul.mubr.f32.gmra.mrb[0].mxu0 %v285
    %v355 = vpop.f32.mrb[0].mxu0
    %v356 = vadd.f32 %v240, %v355
    %v357 = vpop.f32.mrb[0].mxu0
    %358 = vmatprep.mubr.f32.mxu0 0.0
    %359 = vmatmul.mubr.f32.gmra.mrb[0].mxu0 %v287
    %v360 = vpop.f32.mrb[0].mxu0
    %v361 = vadd.f32 %v240, %v360
    %v362 = vpop.f32.mrb[0].mxu0
    %363 = vdwg.mxu0
    %v366 = vcombine.high %v356, %v356
    %v368 = vunpack.c.l.s4 1983009808
    %v369 = vunpack.c.0.s8 %v368
    %v370 = vlaneseq
    %v371 = vshrl.u32 %v370, 7
    %v372 = vsub.s32 %v369, %v371
    %v373 = vrot.slane %v356, %v372
    %v375 = vunpack.c.l.s4 1983009808
    %v376 = vunpack.c.0.s8 %v375
    %v377 = vlaneseq
    %v378 = vshrl.u32 %v377, 7
    %v379 = vsub.s32 %v376, %v378
    %v380 = vrot.slane %v366, %v379
    %v381 = vcombine.high %v373, %v373
    %v382 = vcombine.high %v380, %v380
    %v383 = vcombine.high %v361, %v361
    %v385 = vunpack.c.l.s4 1983009808
    %v386 = vunpack.c.0.s8 %v385
    %v387 = vlaneseq
    %v388 = vshrl.u32 %v387, 7
    %v389 = vsub.s32 %v386, %v388
    %v390 = vrot.slane %v361, %v389
    %v392 = vunpack.c.l.s4 1983009808
    %v393 = vunpack.c.0.s8 %v392
    %v394 = vlaneseq
    %v395 = vshrl.u32 %v394, 7
    %v396 = vsub.s32 %v393, %v395
    %v397 = vrot.slane %v383, %v396
    %v398 = vcombine.high %v390, %v390
    %v399 = vcombine.high %v397, %v397
    %vm408 = vcmask 779264
    %409 = vst.msk [vmem:[#allocation2] sm:$0x3] %vm408, %v373
    %410 = vst.msk [vmem:[#allocation2 + $0x2] sm:$0x3] %vm408, %v381
    %411 = vst.msk [vmem:[#allocation2 + $0x4] sm:$0x3] %vm408, %v380
    %412 = vst.msk [vmem:[#allocation2 + $0x6] sm:$0x3] %vm408, %v382
    %413 = vst.msk [vmem:[#allocation2 + $0x8] sm:$0x3] %vm408, %v390
    %414 = vst.msk [vmem:[#allocation2 + $0xa] sm:$0x3] %vm408, %v398
    %415 = vst.msk [vmem:[#allocation2 + $0xc] sm:$0x3] %vm408, %v397
    %416 = vst.msk [vmem:[#allocation2 + $0xe] sm:$0x3] %vm408, %v399
    %v417 = vld [vmem:[#allocation14] sm:$0xff]
    %v418 = vld [vmem:[#allocation14 + $0x8] sm:$0xff]
    %v419 = vld [vmem:[#allocation14 + $0x10] sm:$0xff]
    %v420 = vld [vmem:[#allocation14 + $0x18] sm:$0xff]
    %v421 = vld [vmem:[#allocation16] sm:$0x1]
    %v423 = vsel %vm284, 0.0, 0
    %425 = vmatprep.subr.mxu0 0.0
    %426 = vmatpush1.msra.mxu0 %v417
    %427 = vmatprep.subr.mxu0 0.0
    %428 = vmatpush1.msra.mxu0 %v418
    %429 = vmatprep.subr.mxu0 0.0
    %430 = vmatpush1.msra.mxu0 %v419
    %431 = vmatprep.subr.mxu0 0.0
    %432 = vmatpush1.msra.mxu0 %v420
    %433 = vmatprep.subr.mxu0 0.0
    %434 = vmatpush1.msra.mxu0 0.0
    %435 = vmatprep.subr.mxu0 0.0
    %436 = vmatpush1.msra.mxu0 0.0
    %437 = vmatprep.subr.mxu0 0.0
    %438 = vmatpush1.msra.mxu0 0.0
    %439 = vmatprep.subr.mxu0 0.0
    %440 = vmatpush1.msra.mxu0 0.0
    %441 = vmatprep.subr.mxu0 0.0
    %442 = vmatpush1.msra.mxu0 0.0
    %443 = vmatprep.subr.mxu0 0.0
    %444 = vmatpush1.msra.mxu0 0.0
    %445 = vmatprep.subr.mxu0 0.0
    %446 = vmatpush1.msra.mxu0 0.0
    %447 = vmatprep.subr.mxu0 0.0
    %448 = vmatpush1.msra.mxu0 0.0
    %449 = vmatprep.subr.mxu0 0.0
    %450 = vmatpush1.msra.mxu0 0.0
    %451 = vmatprep.subr.mxu0 0.0
    %452 = vmatpush1.msra.mxu0 0.0
    %453 = vmatprep.subr.mxu0 0.0
    %454 = vmatpush1.msra.mxu0 0.0
    %455 = vmatprep.subr.mxu0 0.0
    %456 = vmatpush1.msra.mxu0 0.0
    %457 = vmatprep.subr.mxu0 0.0
    %458 = vmatpush1.msra.mxu0 0.0
    %459 = vmatprep.subr.mxu0 0.0
    %460 = vmatpush1.msra.mxu0 0.0
    %461 = vmatprep.subr.mxu0 0.0
    %462 = vmatpush1.msra.mxu0 0.0
    %463 = vmatprep.subr.mxu0 0.0
    %464 = vmatpush1.msra.mxu0 0.0
    %465 = vmatprep.subr.mxu0 0.0
    %466 = vmatpush1.msra.mxu0 0.0
    %467 = vmatprep.subr.mxu0 0.0
    %468 = vmatpush1.msra.mxu0 0.0
    %469 = vmatprep.subr.mxu0 0.0
    %470 = vmatpush1.msra.mxu0 0.0
    %471 = vmatprep.subr.mxu0 0.0
    %472 = vmatpush1.msra.mxu0 0.0
    %473 = vmatprep.subr.mxu0 0.0
    %474 = vmatpush1.msra.mxu0 0.0
    %475 = vmatprep.subr.mxu0 0.0
    %476 = vmatpush1.msra.mxu0 0.0
    %477 = vmatprep.subr.mxu0 0.0
    %478 = vmatpush1.msra.mxu0 0.0
    %479 = vmatprep.subr.mxu0 0.0
    %480 = vmatpush1.msra.mxu0 0.0
    %481 = vmatprep.subr.mxu0 0.0
    %482 = vmatpush1.msra.mxu0 0.0
    %483 = vmatprep.subr.mxu0 0.0
    %484 = vmatpush1.msra.mxu0 0.0
    %485 = vmatprep.subr.mxu0 0.0
    %486 = vmatpush1.msra.mxu0 0.0
    %487 = vmatprep.subr.mxu0 0.0
    %488 = vmatpush1.msra.mxu0 0.0
    %489 = vmatprep.mubr.f32.mxu0 0.0
    %490 = vmatmul.mubr.f32.gmra.mrb[0].mxu0 %v423
    %v491 = vpop.f32.mrb[0].mxu0
    %v492 = vadd.f32 0.0, %v491
    %v493 = vpop.f32.mrb[0].mxu0
    %494 = vdwg.mxu0
    %v495 = vld [vmem:[#allocation2] sm:$0x3]
    %s496 = scalar_lea.vmem [#allocation2], 14
    %v497 = vld [vmem:[%s496] sm:$0x3]
    %v498 = vadd.f32 %v495, %v492
    %v499 = vxor.u32 %v498, 2147483648
    %v500 = vmul.f32 %v499, 1.442695
    %v501 = vpow.pop %v500
    %v502 = vadd.f32 %v501, 1.0
    %v503 = vrcp.pop %v502
    %v504 = vmul.f32 1.0, %v503
    %v506 = vlaneseq
    %v507 = vshrl.u32 %v506, 7
    %v508 = vsub.s32 0, %v507
    %v509 = vrot.slane %v421, %v508
    %510 = vrot.lane.b32.xlu0 %v509, 32
    %v511 = vpop.permute.xlu0 %510
    %v513 = vadd.f32 %v492, %v511
    %515 = vrot.lane.b32.xlu0 %v513, 96
    %v516 = vpop.permute.xlu0 %515
    %v518 = vmul.f32 %v504, %v516
    %520 = vrot.lane.b32.xlu0 %v518, 32
    %v521 = vpop.permute.xlu0 %520
    %v523 = vadd.f32 %v495, %v521
    %v524 = vtanh.pop %v523
    %v525 = vsub.f32 1.0, %v504
    %527 = vrot.lane.b32.xlu0 %v524, 112
    %v528 = vpop.permute.xlu0 %527
    %v530 = vmul.f32 %v525, %v528
    %v531 = vmul.f32 %v504, 0.0
    %v532 = vadd.f32 %v530, %v531
    %v533 = vadd.f32 %v497, %v492
    %v534 = vxor.u32 %v533, 2147483648
    %v535 = vmul.f32 %v534, 1.442695
    %v536 = vpow.pop %v535
    %v537 = vadd.f32 %v536, 1.0
    %v538 = vrcp.pop %v537
    %v539 = vmul.f32 1.0, %v538
    %540 = vrot.lane.b32.xlu0 %v509, 64
    %v541 = vpop.permute.xlu0 %540
    %v543 = vadd.f32 %v492, %v541
    %545 = vrot.lane.b32.xlu0 %v543, 96
    %v546 = vpop.permute.xlu0 %545
    %v548 = vmul.f32 %v539, %v546
    %550 = vrot.lane.b32.xlu0 %v548, 32
    %v551 = vpop.permute.xlu0 %550
    %v553 = vadd.f32 %v497, %v551
    %v554 = vtanh.pop %v553
    %v555 = vsub.f32 1.0, %v539
    %557 = vrot.lane.b32.xlu0 %v554, 112
    %v558 = vpop.permute.xlu0 %557
    %v560 = vmul.f32 %v555, %v558
    %v561 = vmul.f32 %v539, 0.0
    %v562 = vadd.f32 %v560, %v561
    %vm563 = vcmp.gt.f32.partialorder %v207, 0.0
    %v564 = vsel %vm563, 1, 0
    %v565 = vcvt.s32.f32 %v564
    %vm566 = vcmp.gt.f32.partialorder %v207, 7.0
    %v567 = vsel %vm566, 1, 0
    %v568 = vcvt.s32.f32 %v567
    %570 = vset.pattern.permute.xlu0 0
    %571 = vperm.xlu0 %570, %v565
    %v572 = vpop.permute.xlu0 %571
    %v574 = vmul.f32 %v532, %v572
    %576 = vrot.lane.b32.xlu0 %v574, 112
    %v577 = vpop.permute.xlu0 %576
    %s579 = scalar_lea.vmem [#allocation3], 6
    %580 = vst.msk [vmem:[%s579] sm:$0x3] %vm208, %v577
    %582 = vset.pattern.permute.xlu0 0
    %583 = vperm.xlu0 %582, %v568
    %v584 = vpop.permute.xlu0 %583
    %v586 = vmul.f32 %v562, %v584
    %588 = vrot.lane.b32.xlu0 %v586, 64
    %v589 = vpop.permute.xlu0 %588
    %s591 = scalar_lea.vmem [#allocation4], 20
    %592 = vst.msk [vmem:[%s591] sm:$0x3] %vm208, %v589
    %594 = vrot.lane.b32.xlu0 %v532, 112
    %v595 = vpop.permute.xlu0 %594
    %598 = vrot.lane.b32.xlu0 %v562, 80
    %v599 = vpop.permute.xlu0 %598
    %vm601 = vcmask 130048
    %v602 = vsel %vm601, %v595, %v599
    %v604 = vsel %vm284, %v602, 0
    %606 = vmatprep.subr.mxu0 0.0
    %607 = vmatpush1.msra.mxu0 %v417
    %608 = vmatprep.subr.mxu0 0.0
    %609 = vmatpush1.msra.mxu0 %v418
    %610 = vmatprep.subr.mxu0 0.0
    %611 = vmatpush1.msra.mxu0 %v419
    %612 = vmatprep.subr.mxu0 0.0
    %613 = vmatpush1.msra.mxu0 %v420
    %614 = vmatprep.subr.mxu0 0.0
    %615 = vmatpush1.msra.mxu0 0.0
    %616 = vmatprep.subr.mxu0 0.0
    %617 = vmatpush1.msra.mxu0 0.0
    %618 = vmatprep.subr.mxu0 0.0
    %619 = vmatpush1.msra.mxu0 0.0
    %620 = vmatprep.subr.mxu0 0.0
    %621 = vmatpush1.msra.mxu0 0.0
    %622 = vmatprep.subr.mxu0 0.0
    %623 = vmatpush1.msra.mxu0 0.0
    %624 = vmatprep.subr.mxu0 0.0
    %625 = vmatpush1.msra.mxu0 0.0
    %626 = vmatprep.subr.mxu0 0.0
    %627 = vmatpush1.msra.mxu0 0.0
    %628 = vmatprep.subr.mxu0 0.0
    %629 = vmatpush1.msra.mxu0 0.0
    %630 = vmatprep.subr.mxu0 0.0
    %631 = vmatpush1.msra.mxu0 0.0
    %632 = vmatprep.subr.mxu0 0.0
    %633 = vmatpush1.msra.mxu0 0.0
    %634 = vmatprep.subr.mxu0 0.0
    %635 = vmatpush1.msra.mxu0 0.0
    %636 = vmatprep.subr.mxu0 0.0
    %637 = vmatpush1.msra.mxu0 0.0
    %638 = vmatprep.subr.mxu0 0.0
    %639 = vmatpush1.msra.mxu0 0.0
    %640 = vmatprep.subr.mxu0 0.0
    %641 = vmatpush1.msra.mxu0 0.0
    %642 = vmatprep.subr.mxu0 0.0
    %643 = vmatpush1.msra.mxu0 0.0
    %644 = vmatprep.subr.mxu0 0.0
    %645 = vmatpush1.msra.mxu0 0.0
    %646 = vmatprep.subr.mxu0 0.0
    %647 = vmatpush1.msra.mxu0 0.0
    %648 = vmatprep.subr.mxu0 0.0
    %649 = vmatpush1.msra.mxu0 0.0
    %650 = vmatprep.subr.mxu0 0.0
    %651 = vmatpush1.msra.mxu0 0.0
    %652 = vmatprep.subr.mxu0 0.0
    %653 = vmatpush1.msra.mxu0 0.0
    %654 = vmatprep.subr.mxu0 0.0
    %655 = vmatpush1.msra.mxu0 0.0
    %656 = vmatprep.subr.mxu0 0.0
    %657 = vmatpush1.msra.mxu0 0.0
    %658 = vmatprep.subr.mxu0 0.0
    %659 = vmatpush1.msra.mxu0 0.0
    %660 = vmatprep.subr.mxu0 0.0
    %661 = vmatpush1.msra.mxu0 0.0
    %662 = vmatprep.subr.mxu0 0.0
    %663 = vmatpush1.msra.mxu0 0.0
    %664 = vmatprep.subr.mxu0 0.0
    %665 = vmatpush1.msra.mxu0 0.0
    %666 = vmatprep.subr.mxu0 0.0
    %667 = vmatpush1.msra.mxu0 0.0
    %668 = vmatprep.subr.mxu0 0.0
    %669 = vmatpush1.msra.mxu0 0.0
    %670 = vmatprep.mubr.f32.mxu0 0.0
    %671 = vmatmul.mubr.f32.gmra.mrb[0].mxu0 %v604
    %v672 = vpop.f32.mrb[0].mxu0
    %v673 = vadd.f32 0.0, %v672
    %v674 = vpop.f32.mrb[0].mxu0
    %675 = vdwg.mxu0
    %s676 = scalar_lea.vmem [#allocation2], 2
    %v677 = vld [vmem:[%s676] sm:$0x3]
    %s678 = scalar_lea.vmem [#allocation2], 12
    %v679 = vld [vmem:[%s678] sm:$0x3]
    %v680 = vadd.f32 %v677, %v673
    %v681 = vxor.u32 %v680, 2147483648
    %v682 = vmul.f32 %v681, 1.442695
    %v683 = vpow.pop %v682
    %v684 = vadd.f32 %v683, 1.0
    %v685 = vrcp.pop %v684
    %v686 = vmul.f32 1.0, %v685
    %v687 = vadd.f32 %v673, %v511
    %689 = vrot.lane.b32.xlu0 %v687, 96
    %v690 = vpop.permute.xlu0 %689
    %v692 = vmul.f32 %v686, %v690
    %694 = vrot.lane.b32.xlu0 %v692, 32
    %v695 = vpop.permute.xlu0 %694
    %v697 = vadd.f32 %v677, %v695
    %v698 = vtanh.pop %v697
    %v699 = vsub.f32 1.0, %v686
    %701 = vrot.lane.b32.xlu0 %v698, 112
    %v702 = vpop.permute.xlu0 %701
    %v704 = vmul.f32 %v699, %v702
    %705 = vrot.lane.b32.xlu0 %v602, 16
    %v706 = vpop.permute.xlu0 %705
    %v708 = vmul.f32 %v686, %v706
    %v709 = vadd.f32 %v704, %v708
    %v710 = vadd.f32 %v679, %v673
    %v711 = vxor.u32 %v710, 2147483648
    %v712 = vmul.f32 %v711, 1.442695
    %v713 = vpow.pop %v712
    %v714 = vadd.f32 %v713, 1.0
    %v715 = vrcp.pop %v714
    %v716 = vmul.f32 1.0, %v715
    %v717 = vadd.f32 %v673, %v541
    %719 = vrot.lane.b32.xlu0 %v717, 96
    %v720 = vpop.permute.xlu0 %719
    %v722 = vmul.f32 %v716, %v720
    %724 = vrot.lane.b32.xlu0 %v722, 32
    %v725 = vpop.permute.xlu0 %724
    %v727 = vadd.f32 %v679, %v725
    %v728 = vtanh.pop %v727
    %v729 = vsub.f32 1.0, %v716
    %731 = vrot.lane.b32.xlu0 %v728, 112
    %v732 = vpop.permute.xlu0 %731
    %v734 = vmul.f32 %v729, %v732
    %735 = vrot.lane.b32.xlu0 %v602, 48
    %v736 = vpop.permute.xlu0 %735
    %v738 = vmul.f32 %v716, %v736
    %v739 = vadd.f32 %v734, %v738
    %vm740 = vcmp.gt.f32.partialorder %v207, 1.0
    %v741 = vsel %vm740, 1, 0
    %v742 = vcvt.s32.f32 %v741
    %vm743 = vcmp.gt.f32.partialorder %v207, 6.0
    %v744 = vsel %vm743, 1, 0
    %v745 = vcvt.s32.f32 %v744
    %747 = vset.pattern.permute.xlu0 0
    %748 = vperm.xlu0 %747, %v742
    %v749 = vpop.permute.xlu0 %748
    %v751 = vmul.f32 %v709, %v749
    %753 = vrot.lane.b32.xlu0 %v751, 112
    %v754 = vpop.permute.xlu0 %753
    %s756 = scalar_lea.vmem [#allocation3], 8
    %757 = vst.msk [vmem:[%s756] sm:$0x3] %vm208, %v754
    %759 = vset.pattern.permute.xlu0 0
    %760 = vperm.xlu0 %759, %v745
    %v761 = vpop.permute.xlu0 %760
    %v763 = vmul.f32 %v739, %v761
    %765 = vrot.lane.b32.xlu0 %v763, 64
    %v766 = vpop.permute.xlu0 %765
    %s768 = scalar_lea.vmem [#allocation4], 18
    %769 = vst.msk [vmem:[%s768] sm:$0x3] %vm208, %v766
    %771 = vrot.lane.b32.xlu0 %v709, 112
    %v772 = vpop.permute.xlu0 %771
    %775 = vrot.lane.b32.xlu0 %v739, 80
    %v776 = vpop.permute.xlu0 %775
    %v778 = vsel %vm601, %v772, %v776
    %v780 = vsel %vm284, %v778, 0
    %782 = vmatprep.subr.mxu0 0.0
    %783 = vmatpush1.msra.mxu0 %v417
    %784 = vmatprep.subr.mxu0 0.0
    %785 = vmatpush1.msra.mxu0 %v418
    %786 = vmatprep.subr.mxu0 0.0
    %787 = vmatpush1.msra.mxu0 %v419
    %788 = vmatprep.subr.mxu0 0.0
    %789 = vmatpush1.msra.mxu0 %v420
    %790 = vmatprep.subr.mxu0 0.0
    %791 = vmatpush1.msra.mxu0 0.0
    %792 = vmatprep.subr.mxu0 0.0
    %793 = vmatpush1.msra.mxu0 0.0
    %794 = vmatprep.subr.mxu0 0.0
    %795 = vmatpush1.msra.mxu0 0.0
    %796 = vmatprep.subr.mxu0 0.0
    %797 = vmatpush1.msra.mxu0 0.0
    %798 = vmatprep.subr.mxu0 0.0
    %799 = vmatpush1.msra.mxu0 0.0
    %800 = vmatprep.subr.mxu0 0.0
    %801 = vmatpush1.msra.mxu0 0.0
    %802 = vmatprep.subr.mxu0 0.0
    %803 = vmatpush1.msra.mxu0 0.0
    %804 = vmatprep.subr.mxu0 0.0
    %805 = vmatpush1.msra.mxu0 0.0
    %806 = vmatprep.subr.mxu0 0.0
    %807 = vmatpush1.msra.mxu0 0.0
    %808 = vmatprep.subr.mxu0 0.0
    %809 = vmatpush1.msra.mxu0 0.0
    %810 = vmatprep.subr.mxu0 0.0
    %811 = vmatpush1.msra.mxu0 0.0
    %812 = vmatprep.subr.mxu0 0.0
    %813 = vmatpush1.msra.mxu0 0.0
    %814 = vmatprep.subr.mxu0 0.0
    %815 = vmatpush1.msra.mxu0 0.0
    %816 = vmatprep.subr.mxu0 0.0
    %817 = vmatpush1.msra.mxu0 0.0
    %818 = vmatprep.subr.mxu0 0.0
    %819 = vmatpush1.msra.mxu0 0.0
    %820 = vmatprep.subr.mxu0 0.0
    %821 = vmatpush1.msra.mxu0 0.0
    %822 = vmatprep.subr.mxu0 0.0
    %823 = vmatpush1.msra.mxu0 0.0
    %824 = vmatprep.subr.mxu0 0.0
    %825 = vmatpush1.msra.mxu0 0.0
    %826 = vmatprep.subr.mxu0 0.0
    %827 = vmatpush1.msra.mxu0 0.0
    %828 = vmatprep.subr.mxu0 0.0
    %829 = vmatpush1.msra.mxu0 0.0
    %830 = vmatprep.subr.mxu0 0.0
    %831 = vmatpush1.msra.mxu0 0.0
    %832 = vmatprep.subr.mxu0 0.0
    %833 = vmatpush1.msra.mxu0 0.0
    %834 = vmatprep.subr.mxu0 0.0
    %835 = vmatpush1.msra.mxu0 0.0
    %836 = vmatprep.subr.mxu0 0.0
    %837 = vmatpush1.msra.mxu0 0.0
    %838 = vmatprep.subr.mxu0 0.0
    %839 = vmatpush1.msra.mxu0 0.0
    %840 = vmatprep.subr.mxu0 0.0
    %841 = vmatpush1.msra.mxu0 0.0
    %842 = vmatprep.subr.mxu0 0.0
    %843 = vmatpush1.msra.mxu0 0.0
    %844 = vmatprep.subr.mxu0 0.0
    %845 = vmatpush1.msra.mxu0 0.0
    %846 = vmatprep.mubr.f32.mxu0 0.0
    %847 = vmatmul.mubr.f32.gmra.mrb[0].mxu0 %v780
    %v848 = vpop.f32.mrb[0].mxu0
    %v849 = vadd.f32 0.0, %v848
    %v850 = vpop.f32.mrb[0].mxu0
    %851 = vdwg.mxu0
    %s852 = scalar_lea.vmem [#allocation2], 4
    %v853 = vld [vmem:[%s852] sm:$0x3]
    %s854 = scalar_lea.vmem [#allocation2], 10
    %v855 = vld [vmem:[%s854] sm:$0x3]
    %v856 = vadd.f32 %v853, %v849
    %v857 = vxor.u32 %v856, 2147483648
    %v858 = vmul.f32 %v857, 1.442695
    %v859 = vpow.pop %v858
    %v860 = vadd.f32 %v859, 1.0
    %v861 = vrcp.pop %v860
    %v862 = vmul.f32 1.0, %v861
    %v863 = vadd.f32 %v849, %v511
    %865 = vrot.lane.b32.xlu0 %v863, 96
    %v866 = vpop.permute.xlu0 %865
    %v868 = vmul.f32 %v862, %v866
    %870 = vrot.lane.b32.xlu0 %v868, 32
    %v871 = vpop.permute.xlu0 %870
    %v873 = vadd.f32 %v853, %v871
    %v874 = vtanh.pop %v873
    %v875 = vsub.f32 1.0, %v862
    %877 = vrot.lane.b32.xlu0 %v874, 112
    %v878 = vpop.permute.xlu0 %877
    %v880 = vmul.f32 %v875, %v878
    %881 = vrot.lane.b32.xlu0 %v778, 16
    %v882 = vpop.permute.xlu0 %881
    %v884 = vmul.f32 %v862, %v882
    %v885 = vadd.f32 %v880, %v884
    %v886 = vadd.f32 %v855, %v849
    %v887 = vxor.u32 %v886, 2147483648
    %v888 = vmul.f32 %v887, 1.442695
    %v889 = vpow.pop %v888
    %v890 = vadd.f32 %v889, 1.0
    %v891 = vrcp.pop %v890
    %v892 = vmul.f32 1.0, %v891
    %v893 = vadd.f32 %v849, %v541
    %895 = vrot.lane.b32.xlu0 %v893, 96
    %v896 = vpop.permute.xlu0 %895
    %v898 = vmul.f32 %v892, %v896
    %900 = vrot.lane.b32.xlu0 %v898, 32
    %v901 = vpop.permute.xlu0 %900
    %v903 = vadd.f32 %v855, %v901
    %v904 = vtanh.pop %v903
    %v905 = vsub.f32 1.0, %v892
    %907 = vrot.lane.b32.xlu0 %v904, 112
    %v908 = vpop.permute.xlu0 %907
    %v910 = vmul.f32 %v905, %v908
    %911 = vrot.lane.b32.xlu0 %v778, 48
    %v912 = vpop.permute.xlu0 %911
    %v914 = vmul.f32 %v892, %v912
    %v915 = vadd.f32 %v910, %v914
    %vm916 = vcmp.gt.f32.partialorder %v207, 2.0
    %v917 = vsel %vm916, 1, 0
    %v918 = vcvt.s32.f32 %v917
    %vm919 = vcmp.gt.f32.partialorder %v207, 5.0
    %v920 = vsel %vm919, 1, 0
    %v921 = vcvt.s32.f32 %v920
    %923 = vset.pattern.permute.xlu0 0
    %924 = vperm.xlu0 %923, %v918
    %v925 = vpop.permute.xlu0 %924
    %v927 = vmul.f32 %v885, %v925
    %929 = vrot.lane.b32.xlu0 %v927, 112
    %v930 = vpop.permute.xlu0 %929
    %s932 = scalar_lea.vmem [#allocation3], 10
    %933 = vst.msk [vmem:[%s932] sm:$0x3] %vm208, %v930
    %935 = vset.pattern.permute.xlu0 0
    %936 = vperm.xlu0 %935, %v921
    %v937 = vpop.permute.xlu0 %936
    %v939 = vmul.f32 %v915, %v937
    %941 = vrot.lane.b32.xlu0 %v939, 64
    %v942 = vpop.permute.xlu0 %941
    %s944 = scalar_lea.vmem [#allocation4], 16
    %945 = vst.msk [vmem:[%s944] sm:$0x3] %vm208, %v942
    %947 = vrot.lane.b32.xlu0 %v885, 112
    %v948 = vpop.permute.xlu0 %947
    %951 = vrot.lane.b32.xlu0 %v915, 80
    %v952 = vpop.permute.xlu0 %951
    %v954 = vsel %vm601, %v948, %v952
    %v956 = vsel %vm284, %v954, 0
    %958 = vmatprep.subr.mxu0 0.0
    %959 = vmatpush1.msra.mxu0 %v417
    %960 = vmatprep.subr.mxu0 0.0
    %961 = vmatpush1.msra.mxu0 %v418
    %962 = vmatprep.subr.mxu0 0.0
    %963 = vmatpush1.msra.mxu0 %v419
    %964 = vmatprep.subr.mxu0 0.0
    %965 = vmatpush1.msra.mxu0 %v420
    %966 = vmatprep.subr.mxu0 0.0
    %967 = vmatpush1.msra.mxu0 0.0
    %968 = vmatprep.subr.mxu0 0.0
    %969 = vmatpush1.msra.mxu0 0.0
    %970 = vmatprep.subr.mxu0 0.0
    %971 = vmatpush1.msra.mxu0 0.0
    %972 = vmatprep.subr.mxu0 0.0
    %973 = vmatpush1.msra.mxu0 0.0
    %974 = vmatprep.subr.mxu0 0.0
    %975 = vmatpush1.msra.mxu0 0.0
    %976 = vmatprep.subr.mxu0 0.0
    %977 = vmatpush1.msra.mxu0 0.0
    %978 = vmatprep.subr.mxu0 0.0
    %979 = vmatpush1.msra.mxu0 0.0
    %980 = vmatprep.subr.mxu0 0.0
    %981 = vmatpush1.msra.mxu0 0.0
    %982 = vmatprep.subr.mxu0 0.0
    %983 = vmatpush1.msra.mxu0 0.0
    %984 = vmatprep.subr.mxu0 0.0
    %985 = vmatpush1.msra.mxu0 0.0
    %986 = vmatprep.subr.mxu0 0.0
    %987 = vmatpush1.msra.mxu0 0.0
    %988 = vmatprep.subr.mxu0 0.0
    %989 = vmatpush1.msra.mxu0 0.0
    %990 = vmatprep.subr.mxu0 0.0
    %991 = vmatpush1.msra.mxu0 0.0
    %992 = vmatprep.subr.mxu0 0.0
    %993 = vmatpush1.msra.mxu0 0.0
    %994 = vmatprep.subr.mxu0 0.0
    %995 = vmatpush1.msra.mxu0 0.0
    %996 = vmatprep.subr.mxu0 0.0
    %997 = vmatpush1.msra.mxu0 0.0
    %998 = vmatprep.subr.mxu0 0.0
    %999 = vmatpush1.msra.mxu0 0.0
    %1000 = vmatprep.subr.mxu0 0.0
    %1001 = vmatpush1.msra.mxu0 0.0
    %1002 = vmatprep.subr.mxu0 0.0
    %1003 = vmatpush1.msra.mxu0 0.0
    %1004 = vmatprep.subr.mxu0 0.0
    %1005 = vmatpush1.msra.mxu0 0.0
    %1006 = vmatprep.subr.mxu0 0.0
    %1007 = vmatpush1.msra.mxu0 0.0
    %1008 = vmatprep.subr.mxu0 0.0
    %1009 = vmatpush1.msra.mxu0 0.0
    %1010 = vmatprep.subr.mxu0 0.0
    %1011 = vmatpush1.msra.mxu0 0.0
    %1012 = vmatprep.subr.mxu0 0.0
    %1013 = vmatpush1.msra.mxu0 0.0
    %1014 = vmatprep.subr.mxu0 0.0
    %1015 = vmatpush1.msra.mxu0 0.0
    %1016 = vmatprep.subr.mxu0 0.0
    %1017 = vmatpush1.msra.mxu0 0.0
    %1018 = vmatprep.subr.mxu0 0.0
    %1019 = vmatpush1.msra.mxu0 0.0
    %1020 = vmatprep.subr.mxu0 0.0
    %1021 = vmatpush1.msra.mxu0 0.0
    %1022 = vmatprep.mubr.f32.mxu0 0.0
    %1023 = vmatmul.mubr.f32.gmra.mrb[0].mxu0 %v956
    %v1024 = vpop.f32.mrb[0].mxu0
    %v1025 = vadd.f32 0.0, %v1024
    %v1026 = vpop.f32.mrb[0].mxu0
    %1027 = vdwg.mxu0
    %s1028 = scalar_lea.vmem [#allocation2], 6
    %v1029 = vld [vmem:[%s1028] sm:$0x3]
    %s1030 = scalar_lea.vmem [#allocation2], 8
    %v1031 = vld [vmem:[%s1030] sm:$0x3]
    %v1032 = vadd.f32 %v1029, %v1025
    %v1033 = vxor.u32 %v1032, 2147483648
    %v1034 = vmul.f32 %v1033, 1.442695
    %v1035 = vpow.pop %v1034
    %v1036 = vadd.f32 %v1035, 1.0
    %v1037 = vrcp.pop %v1036
    %v1038 = vmul.f32 1.0, %v1037
    %v1039 = vadd.f32 %v1025, %v511
    %1041 = vrot.lane.b32.xlu0 %v1039, 96
    %v1042 = vpop.permute.xlu0 %1041
    %v1044 = vmul.f32 %v1038, %v1042
    %1046 = vrot.lane.b32.xlu0 %v1044, 32
    %v1047 = vpop.permute.xlu0 %1046
    %v1049 = vadd.f32 %v1029, %v1047
    %v1050 = vtanh.pop %v1049
    %v1051 = vsub.f32 1.0, %v1038
    %1053 = vrot.lane.b32.xlu0 %v1050, 112
    %v1054 = vpop.permute.xlu0 %1053
    %v1056 = vmul.f32 %v1051, %v1054
    %1057 = vrot.lane.b32.xlu0 %v954, 16
    %v1058 = vpop.permute.xlu0 %1057
    %v1060 = vmul.f32 %v1038, %v1058
    %v1061 = vadd.f32 %v1056, %v1060
    %v1062 = vadd.f32 %v1031, %v1025
    %v1063 = vxor.u32 %v1062, 2147483648
    %v1064 = vmul.f32 %v1063, 1.442695
    %v1065 = vpow.pop %v1064
    %v1066 = vadd.f32 %v1065, 1.0
    %v1067 = vrcp.pop %v1066
    %v1068 = vmul.f32 1.0, %v1067
    %v1069 = vadd.f32 %v1025, %v541
    %1071 = vrot.lane.b32.xlu0 %v1069, 96
    %v1072 = vpop.permute.xlu0 %1071
    %v1074 = vmul.f32 %v1068, %v1072
    %1076 = vrot.lane.b32.xlu0 %v1074, 32
    %v1077 = vpop.permute.xlu0 %1076
    %v1079 = vadd.f32 %v1031, %v1077
    %v1080 = vtanh.pop %v1079
    %v1081 = vsub.f32 1.0, %v1068
    %1083 = vrot.lane.b32.xlu0 %v1080, 112
    %v1084 = vpop.permute.xlu0 %1083
    %v1086 = vmul.f32 %v1081, %v1084
    %1087 = vrot.lane.b32.xlu0 %v954, 48
    %v1088 = vpop.permute.xlu0 %1087
    %v1090 = vmul.f32 %v1068, %v1088
    %v1091 = vadd.f32 %v1086, %v1090
    %vm1092 = vcmp.gt.f32.partialorder %v207, 3.0
    %v1093 = vsel %vm1092, 1, 0
    %v1094 = vcvt.s32.f32 %v1093
    %vm1095 = vcmp.gt.f32.partialorder %v207, 4.0
    %v1096 = vsel %vm1095, 1, 0
    %v1097 = vcvt.s32.f32 %v1096
    %1099 = vset.pattern.permute.xlu0 0
    %1100 = vperm.xlu0 %1099, %v1094
    %v1101 = vpop.permute.xlu0 %1100
    %v1103 = vmul.f32 %v1061, %v1101
    %1105 = vrot.lane.b32.xlu0 %v1103, 112
    %v1106 = vpop.permute.xlu0 %1105
    %s1108 = scalar_lea.vmem [#allocation3], 12
    %1109 = vst.msk [vmem:[%s1108] sm:$0x3] %vm208, %v1106
    %1111 = vset.pattern.permute.xlu0 0
    %1112 = vperm.xlu0 %1111, %v1097
    %v1113 = vpop.permute.xlu0 %1112
    %v1115 = vmul.f32 %v1091, %v1113
    %1117 = vrot.lane.b32.xlu0 %v1115, 64
    %v1118 = vpop.permute.xlu0 %1117
    %s1120 = scalar_lea.vmem [#allocation4], 14
    %1121 = vst.msk [vmem:[%s1120] sm:$0x3] %vm208, %v1118
    %1123 = vrot.lane.b32.xlu0 %v1061, 112
    %v1124 = vpop.permute.xlu0 %1123
    %1127 = vrot.lane.b32.xlu0 %v1091, 80
    %v1128 = vpop.permute.xlu0 %1127
    %v1130 = vsel %vm601, %v1124, %v1128
    %v1132 = vsel %vm284, %v1130, 0
    %1134 = vmatprep.subr.mxu0 0.0
    %1135 = vmatpush1.msra.mxu0 %v417
    %1136 = vmatprep.subr.mxu0 0.0
    %1137 = vmatpush1.msra.mxu0 %v418
    %1138 = vmatprep.subr.mxu0 0.0
    %1139 = vmatpush1.msra.mxu0 %v419
    %1140 = vmatprep.subr.mxu0 0.0
    %1141 = vmatpush1.msra.mxu0 %v420
    %1142 = vmatprep.subr.mxu0 0.0
    %1143 = vmatpush1.msra.mxu0 0.0
    %1144 = vmatprep.subr.mxu0 0.0
    %1145 = vmatpush1.msra.mxu0 0.0
    %1146 = vmatprep.subr.mxu0 0.0
    %1147 = vmatpush1.msra.mxu0 0.0
    %1148 = vmatprep.subr.mxu0 0.0
    %1149 = vmatpush1.msra.mxu0 0.0
    %1150 = vmatprep.subr.mxu0 0.0
    %1151 = vmatpush1.msra.mxu0 0.0
    %1152 = vmatprep.subr.mxu0 0.0
    %1153 = vmatpush1.msra.mxu0 0.0
    %1154 = vmatprep.subr.mxu0 0.0
    %1155 = vmatpush1.msra.mxu0 0.0
    %1156 = vmatprep.subr.mxu0 0.0
    %1157 = vmatpush1.msra.mxu0 0.0
    %1158 = vmatprep.subr.mxu0 0.0
    %1159 = vmatpush1.msra.mxu0 0.0
    %1160 = vmatprep.subr.mxu0 0.0
    %1161 = vmatpush1.msra.mxu0 0.0
    %1162 = vmatprep.subr.mxu0 0.0
    %1163 = vmatpush1.msra.mxu0 0.0
    %1164 = vmatprep.subr.mxu0 0.0
    %1165 = vmatpush1.msra.mxu0 0.0
    %1166 = vmatprep.subr.mxu0 0.0
    %1167 = vmatpush1.msra.mxu0 0.0
    %1168 = vmatprep.subr.mxu0 0.0
    %1169 = vmatpush1.msra.mxu0 0.0
    %1170 = vmatprep.subr.mxu0 0.0
    %1171 = vmatpush1.msra.mxu0 0.0
    %1172 = vmatprep.subr.mxu0 0.0
    %1173 = vmatpush1.msra.mxu0 0.0
    %1174 = vmatprep.subr.mxu0 0.0
    %1175 = vmatpush1.msra.mxu0 0.0
    %1176 = vmatprep.subr.mxu0 0.0
    %1177 = vmatpush1.msra.mxu0 0.0
    %1178 = vmatprep.subr.mxu0 0.0
    %1179 = vmatpush1.msra.mxu0 0.0
    %1180 = vmatprep.subr.mxu0 0.0
    %1181 = vmatpush1.msra.mxu0 0.0
    %1182 = vmatprep.subr.mxu0 0.0
    %1183 = vmatpush1.msra.mxu0 0.0
    %1184 = vmatprep.subr.mxu0 0.0
    %1185 = vmatpush1.msra.mxu0 0.0
    %1186 = vmatprep.subr.mxu0 0.0
    %1187 = vmatpush1.msra.mxu0 0.0
    %1188 = vmatprep.subr.mxu0 0.0
    %1189 = vmatpush1.msra.mxu0 0.0
    %1190 = vmatprep.subr.mxu0 0.0
    %1191 = vmatpush1.msra.mxu0 0.0
    %1192 = vmatprep.subr.mxu0 0.0
    %1193 = vmatpush1.msra.mxu0 0.0
    %1194 = vmatprep.subr.mxu0 0.0
    %1195 = vmatpush1.msra.mxu0 0.0
    %1196 = vmatprep.subr.mxu0 0.0
    %1197 = vmatpush1.msra.mxu0 0.0
    %1198 = vmatprep.mubr.f32.mxu0 0.0
    %1199 = vmatmul.mubr.f32.gmra.mrb[0].mxu0 %v1132
    %v1200 = vpop.f32.mrb[0].mxu0
    %v1201 = vadd.f32 0.0, %v1200
    %v1202 = vpop.f32.mrb[0].mxu0
    %1203 = vdwg.mxu0
    %v1204 = vld [vmem:[%s1030] sm:$0x3]
    %v1205 = vld [vmem:[%s1028] sm:$0x3]
    %v1206 = vadd.f32 %v1204, %v1201
    %v1207 = vxor.u32 %v1206, 2147483648
    %v1208 = vmul.f32 %v1207, 1.442695
    %v1209 = vpow.pop %v1208
    %v1210 = vadd.f32 %v1209, 1.0
    %v1211 = vrcp.pop %v1210
    %v1212 = vmul.f32 1.0, %v1211
    %v1213 = vadd.f32 %v1201, %v511
    %1215 = vrot.lane.b32.xlu0 %v1213, 96
    %v1216 = vpop.permute.xlu0 %1215
    %v1218 = vmul.f32 %v1212, %v1216
    %1220 = vrot.lane.b32.xlu0 %v1218, 32
    %v1221 = vpop.permute.xlu0 %1220
    %v1223 = vadd.f32 %v1204, %v1221
    %v1224 = vtanh.pop %v1223
    %v1225 = vsub.f32 1.0, %v1212
    %1227 = vrot.lane.b32.xlu0 %v1224, 112
    %v1228 = vpop.permute.xlu0 %1227
    %v1230 = vmul.f32 %v1225, %v1228
    %1231 = vrot.lane.b32.xlu0 %v1130, 16
    %v1232 = vpop.permute.xlu0 %1231
    %v1234 = vmul.f32 %v1212, %v1232
    %v1235 = vadd.f32 %v1230, %v1234
    %v1236 = vadd.f32 %v1205, %v1201
    %v1237 = vxor.u32 %v1236, 2147483648
    %v1238 = vmul.f32 %v1237, 1.442695
    %v1239 = vpow.pop %v1238
    %v1240 = vadd.f32 %v1239, 1.0
    %v1241 = vrcp.pop %v1240
    %v1242 = vmul.f32 1.0, %v1241
    %v1243 = vadd.f32 %v1201, %v541
    %1245 = vrot.lane.b32.xlu0 %v1243, 96
    %v1246 = vpop.permute.xlu0 %1245
    %v1248 = vmul.f32 %v1242, %v1246
    %1250 = vrot.lane.b32.xlu0 %v1248, 32
    %v1251 = vpop.permute.xlu0 %1250
    %v1253 = vadd.f32 %v1205, %v1251
    %v1254 = vtanh.pop %v1253
    %v1255 = vsub.f32 1.0, %v1242
    %1257 = vrot.lane.b32.xlu0 %v1254, 112
    %v1258 = vpop.permute.xlu0 %1257
    %v1260 = vmul.f32 %v1255, %v1258
    %1261 = vrot.lane.b32.xlu0 %v1130, 48
    %v1262 = vpop.permute.xlu0 %1261
    %v1264 = vmul.f32 %v1242, %v1262
    %v1265 = vadd.f32 %v1260, %v1264
    %v1266 = vmul.f32 %v1235, %v1113
    %1268 = vrot.lane.b32.xlu0 %v1266, 112
    %v1269 = vpop.permute.xlu0 %1268
    %s1271 = scalar_lea.vmem [#allocation3], 14
    %1272 = vst.msk [vmem:[%s1271] sm:$0x3] %vm208, %v1269
    %v1273 = vmul.f32 %v1265, %v1101
    %1275 = vrot.lane.b32.xlu0 %v1273, 64
    %v1276 = vpop.permute.xlu0 %1275
    %s1278 = scalar_lea.vmem [#allocation4], 12
    %1279 = vst.msk [vmem:[%s1278] sm:$0x3] %vm208, %v1276
    %1281 = vrot.lane.b32.xlu0 %v1235, 112
    %v1282 = vpop.permute.xlu0 %1281
    %1285 = vrot.lane.b32.xlu0 %v1265, 80
    %v1286 = vpop.permute.xlu0 %1285
    %v1288 = vsel %vm601, %v1282, %v1286
    %v1290 = vsel %vm284, %v1288, 0
    %1292 = vmatprep.subr.mxu0 0.0
    %1293 = vmatpush1.msra.mxu0 %v417
    %1294 = vmatprep.subr.mxu0 0.0
    %1295 = vmatpush1.msra.mxu0 %v418
    %1296 = vmatprep.subr.mxu0 0.0
    %1297 = vmatpush1.msra.mxu0 %v419
    %1298 = vmatprep.subr.mxu0 0.0
    %1299 = vmatpush1.msra.mxu0 %v420
    %1300 = vmatprep.subr.mxu0 0.0
    %1301 = vmatpush1.msra.mxu0 0.0
    %1302 = vmatprep.subr.mxu0 0.0
    %1303 = vmatpush1.msra.mxu0 0.0
    %1304 = vmatprep.subr.mxu0 0.0
    %1305 = vmatpush1.msra.mxu0 0.0
    %1306 = vmatprep.subr.mxu0 0.0
    %1307 = vmatpush1.msra.mxu0 0.0
    %1308 = vmatprep.subr.mxu0 0.0
    %1309 = vmatpush1.msra.mxu0 0.0
    %1310 = vmatprep.subr.mxu0 0.0
    %1311 = vmatpush1.msra.mxu0 0.0
    %1312 = vmatprep.subr.mxu0 0.0
    %1313 = vmatpush1.msra.mxu0 0.0
    %1314 = vmatprep.subr.mxu0 0.0
    %1315 = vmatpush1.msra.mxu0 0.0
    %1316 = vmatprep.subr.mxu0 0.0
    %1317 = vmatpush1.msra.mxu0 0.0
    %1318 = vmatprep.subr.mxu0 0.0
    %1319 = vmatpush1.msra.mxu0 0.0
    %1320 = vmatprep.subr.mxu0 0.0
    %1321 = vmatpush1.msra.mxu0 0.0
    %1322 = vmatprep.subr.mxu0 0.0
    %1323 = vmatpush1.msra.mxu0 0.0
    %1324 = vmatprep.subr.mxu0 0.0
    %1325 = vmatpush1.msra.mxu0 0.0
    %1326 = vmatprep.subr.mxu0 0.0
    %1327 = vmatpush1.msra.mxu0 0.0
    %1328 = vmatprep.subr.mxu0 0.0
    %1329 = vmatpush1.msra.mxu0 0.0
    %1330 = vmatprep.subr.mxu0 0.0
    %1331 = vmatpush1.msra.mxu0 0.0
    %1332 = vmatprep.subr.mxu0 0.0
    %1333 = vmatpush1.msra.mxu0 0.0
    %1334 = vmatprep.subr.mxu0 0.0
    %1335 = vmatpush1.msra.mxu0 0.0
    %1336 = vmatprep.subr.mxu0 0.0
    %1337 = vmatpush1.msra.mxu0 0.0
    %1338 = vmatprep.subr.mxu0 0.0
    %1339 = vmatpush1.msra.mxu0 0.0
    %1340 = vmatprep.subr.mxu0 0.0
    %1341 = vmatpush1.msra.mxu0 0.0
    %1342 = vmatprep.subr.mxu0 0.0
    %1343 = vmatpush1.msra.mxu0 0.0
    %1344 = vmatprep.subr.mxu0 0.0
    %1345 = vmatpush1.msra.mxu0 0.0
    %1346 = vmatprep.subr.mxu0 0.0
    %1347 = vmatpush1.msra.mxu0 0.0
    %1348 = vmatprep.subr.mxu0 0.0
    %1349 = vmatpush1.msra.mxu0 0.0
    %1350 = vmatprep.subr.mxu0 0.0
    %1351 = vmatpush1.msra.mxu0 0.0
    %1352 = vmatprep.subr.mxu0 0.0
    %1353 = vmatpush1.msra.mxu0 0.0
    %1354 = vmatprep.subr.mxu0 0.0
    %1355 = vmatpush1.msra.mxu0 0.0
    %1356 = vmatprep.mubr.f32.mxu0 0.0
    %1357 = vmatmul.mubr.f32.gmra.mrb[0].mxu0 %v1290
    %v1358 = vpop.f32.mrb[0].mxu0
    %v1359 = vadd.f32 0.0, %v1358
    %v1360 = vpop.f32.mrb[0].mxu0
    %1361 = vdwg.mxu0
    %v1362 = vld [vmem:[%s854] sm:$0x3]
    %v1363 = vld [vmem:[%s852] sm:$0x3]
    %v1364 = vadd.f32 %v1362, %v1359
    %v1365 = vxor.u32 %v1364, 2147483648
    %v1366 = vmul.f32 %v1365, 1.442695
    %v1367 = vpow.pop %v1366
    %v1368 = vadd.f32 %v1367, 1.0
    %v1369 = vrcp.pop %v1368
    %v1370 = vmul.f32 1.0, %v1369
    %v1371 = vadd.f32 %v1359, %v511
    %1373 = vrot.lane.b32.xlu0 %v1371, 96
    %v1374 = vpop.permute.xlu0 %1373
    %v1376 = vmul.f32 %v1370, %v1374
    %1378 = vrot.lane.b32.xlu0 %v1376, 32
    %v1379 = vpop.permute.xlu0 %1378
    %v1381 = vadd.f32 %v1362, %v1379
    %v1382 = vtanh.pop %v1381
    %v1383 = vsub.f32 1.0, %v1370
    %1385 = vrot.lane.b32.xlu0 %v1382, 112
    %v1386 = vpop.permute.xlu0 %1385
    %v1388 = vmul.f32 %v1383, %v1386
    %1389 = vrot.lane.b32.xlu0 %v1288, 16
    %v1390 = vpop.permute.xlu0 %1389
    %v1392 = vmul.f32 %v1370, %v1390
    %v1393 = vadd.f32 %v1388, %v1392
    %v1394 = vadd.f32 %v1363, %v1359
    %v1395 = vxor.u32 %v1394, 2147483648
    %v1396 = vmul.f32 %v1395, 1.442695
    %v1397 = vpow.pop %v1396
    %v1398 = vadd.f32 %v1397, 1.0
    %v1399 = vrcp.pop %v1398
    %v1400 = vmul.f32 1.0, %v1399
    %v1401 = vadd.f32 %v1359, %v541
    %1403 = vrot.lane.b32.xlu0 %v1401, 96
    %v1404 = vpop.permute.xlu0 %1403
    %v1406 = vmul.f32 %v1400, %v1404
    %1408 = vrot.lane.b32.xlu0 %v1406, 32
    %v1409 = vpop.permute.xlu0 %1408
    %v1411 = vadd.f32 %v1363, %v1409
    %v1412 = vtanh.pop %v1411
    %v1413 = vsub.f32 1.0, %v1400
    %1415 = vrot.lane.b32.xlu0 %v1412, 112
    %v1416 = vpop.permute.xlu0 %1415
    %v1418 = vmul.f32 %v1413, %v1416
    %1419 = vrot.lane.b32.xlu0 %v1288, 48
    %v1420 = vpop.permute.xlu0 %1419
    %v1422 = vmul.f32 %v1400, %v1420
    %v1423 = vadd.f32 %v1418, %v1422
    %v1424 = vmul.f32 %v1393, %v937
    %1426 = vrot.lane.b32.xlu0 %v1424, 112
    %v1427 = vpop.permute.xlu0 %1426
    %s1429 = scalar_lea.vmem [#allocation3], 16
    %1430 = vst.msk [vmem:[%s1429] sm:$0x3] %vm208, %v1427
    %v1431 = vmul.f32 %v1423, %v925
    %1433 = vrot.lane.b32.xlu0 %v1431, 64
    %v1434 = vpop.permute.xlu0 %1433
    %s1436 = scalar_lea.vmem [#allocation4], 10
    %1437 = vst.msk [vmem:[%s1436] sm:$0x3] %vm208, %v1434
    %1439 = vrot.lane.b32.xlu0 %v1393, 112
    %v1440 = vpop.permute.xlu0 %1439
    %1443 = vrot.lane.b32.xlu0 %v1423, 80
    %v1444 = vpop.permute.xlu0 %1443
    %v1446 = vsel %vm601, %v1440, %v1444
    %v1448 = vsel %vm284, %v1446, 0
    %1450 = vmatprep.subr.mxu0 0.0
    %1451 = vmatpush1.msra.mxu0 %v417
    %1452 = vmatprep.subr.mxu0 0.0
    %1453 = vmatpush1.msra.mxu0 %v418
    %1454 = vmatprep.subr.mxu0 0.0
    %1455 = vmatpush1.msra.mxu0 %v419
    %1456 = vmatprep.subr.mxu0 0.0
    %1457 = vmatpush1.msra.mxu0 %v420
    %1458 = vmatprep.subr.mxu0 0.0
    %1459 = vmatpush1.msra.mxu0 0.0
    %1460 = vmatprep.subr.mxu0 0.0
    %1461 = vmatpush1.msra.mxu0 0.0
    %1462 = vmatprep.subr.mxu0 0.0
    %1463 = vmatpush1.msra.mxu0 0.0
    %1464 = vmatprep.subr.mxu0 0.0
    %1465 = vmatpush1.msra.mxu0 0.0
    %1466 = vmatprep.subr.mxu0 0.0
    %1467 = vmatpush1.msra.mxu0 0.0
    %1468 = vmatprep.subr.mxu0 0.0
    %1469 = vmatpush1.msra.mxu0 0.0
    %1470 = vmatprep.subr.mxu0 0.0
    %1471 = vmatpush1.msra.mxu0 0.0
    %1472 = vmatprep.subr.mxu0 0.0
    %1473 = vmatpush1.msra.mxu0 0.0
    %1474 = vmatprep.subr.mxu0 0.0
    %1475 = vmatpush1.msra.mxu0 0.0
    %1476 = vmatprep.subr.mxu0 0.0
    %1477 = vmatpush1.msra.mxu0 0.0
    %1478 = vmatprep.subr.mxu0 0.0
    %1479 = vmatpush1.msra.mxu0 0.0
    %1480 = vmatprep.subr.mxu0 0.0
    %1481 = vmatpush1.msra.mxu0 0.0
    %1482 = vmatprep.subr.mxu0 0.0
    %1483 = vmatpush1.msra.mxu0 0.0
    %1484 = vmatprep.subr.mxu0 0.0
    %1485 = vmatpush1.msra.mxu0 0.0
    %1486 = vmatprep.subr.mxu0 0.0
    %1487 = vmatpush1.msra.mxu0 0.0
    %1488 = vmatprep.subr.mxu0 0.0
    %1489 = vmatpush1.msra.mxu0 0.0
    %1490 = vmatprep.subr.mxu0 0.0
    %1491 = vmatpush1.msra.mxu0 0.0
    %1492 = vmatprep.subr.mxu0 0.0
    %1493 = vmatpush1.msra.mxu0 0.0
    %1494 = vmatprep.subr.mxu0 0.0
    %1495 = vmatpush1.msra.mxu0 0.0
    %1496 = vmatprep.subr.mxu0 0.0
    %1497 = vmatpush1.msra.mxu0 0.0
    %1498 = vmatprep.subr.mxu0 0.0
    %1499 = vmatpush1.msra.mxu0 0.0
    %1500 = vmatprep.subr.mxu0 0.0
    %1501 = vmatpush1.msra.mxu0 0.0
    %1502 = vmatprep.subr.mxu0 0.0
    %1503 = vmatpush1.msra.mxu0 0.0
    %1504 = vmatprep.subr.mxu0 0.0
    %1505 = vmatpush1.msra.mxu0 0.0
    %1506 = vmatprep.subr.mxu0 0.0
    %1507 = vmatpush1.msra.mxu0 0.0
    %1508 = vmatprep.subr.mxu0 0.0
    %1509 = vmatpush1.msra.mxu0 0.0
    %1510 = vmatprep.subr.mxu0 0.0
    %1511 = vmatpush1.msra.mxu0 0.0
    %1512 = vmatprep.subr.mxu0 0.0
    %1513 = vmatpush1.msra.mxu0 0.0
    %1514 = vmatprep.mubr.f32.mxu0 0.0
    %1515 = vmatmul.mubr.f32.gmra.mrb[0].mxu0 %v1448
    %v1516 = vpop.f32.mrb[0].mxu0
    %v1517 = vadd.f32 0.0, %v1516
    %v1518 = vpop.f32.mrb[0].mxu0
    %1519 = vdwg.mxu0
    %v1520 = vld [vmem:[%s678] sm:$0x3]
    %v1521 = vld [vmem:[%s676] sm:$0x3]
    %v1522 = vadd.f32 %v1520, %v1517
    %v1523 = vxor.u32 %v1522, 2147483648
    %v1524 = vmul.f32 %v1523, 1.442695
    %v1525 = vpow.pop %v1524
    %v1526 = vadd.f32 %v1525, 1.0
    %v1527 = vrcp.pop %v1526
    %v1528 = vmul.f32 1.0, %v1527
    %v1529 = vadd.f32 %v1517, %v511
    %1531 = vrot.lane.b32.xlu0 %v1529, 96
    %v1532 = vpop.permute.xlu0 %1531
    %v1534 = vmul.f32 %v1528, %v1532
    %1536 = vrot.lane.b32.xlu0 %v1534, 32
    %v1537 = vpop.permute.xlu0 %1536
    %v1539 = vadd.f32 %v1520, %v1537
    %v1540 = vtanh.pop %v1539
    %v1541 = vsub.f32 1.0, %v1528
    %1543 = vrot.lane.b32.xlu0 %v1540, 112
    %v1544 = vpop.permute.xlu0 %1543
    %v1546 = vmul.f32 %v1541, %v1544
    %1547 = vrot.lane.b32.xlu0 %v1446, 16
    %v1548 = vpop.permute.xlu0 %1547
    %v1550 = vmul.f32 %v1528, %v1548
    %v1551 = vadd.f32 %v1546, %v1550
    %v1552 = vadd.f32 %v1521, %v1517
    %v1553 = vxor.u32 %v1552, 2147483648
    %v1554 = vmul.f32 %v1553, 1.442695
    %v1555 = vpow.pop %v1554
    %v1556 = vadd.f32 %v1555, 1.0
    %v1557 = vrcp.pop %v1556
    %v1558 = vmul.f32 1.0, %v1557
    %v1559 = vadd.f32 %v1517, %v541
    %1561 = vrot.lane.b32.xlu0 %v1559, 96
    %v1562 = vpop.permute.xlu0 %1561
    %v1564 = vmul.f32 %v1558, %v1562
    %1566 = vrot.lane.b32.xlu0 %v1564, 32
    %v1567 = vpop.permute.xlu0 %1566
    %v1569 = vadd.f32 %v1521, %v1567
    %v1570 = vtanh.pop %v1569
    %v1571 = vsub.f32 1.0, %v1558
    %1573 = vrot.lane.b32.xlu0 %v1570, 112
    %v1574 = vpop.permute.xlu0 %1573
    %v1576 = vmul.f32 %v1571, %v1574
    %1577 = vrot.lane.b32.xlu0 %v1446, 48
    %v1578 = vpop.permute.xlu0 %1577
    %v1580 = vmul.f32 %v1558, %v1578
    %v1581 = vadd.f32 %v1576, %v1580
    %v1582 = vmul.f32 %v1551, %v761
    %1584 = vrot.lane.b32.xlu0 %v1582, 112
    %v1585 = vpop.permute.xlu0 %1584
    %s1587 = scalar_lea.vmem [#allocation3], 18
    %1588 = vst.msk [vmem:[%s1587] sm:$0x3] %vm208, %v1585
    %v1589 = vmul.f32 %v1581, %v749
    %1591 = vrot.lane.b32.xlu0 %v1589, 64
    %v1592 = vpop.permute.xlu0 %1591
    %s1594 = scalar_lea.vmem [#allocation4], 8
    %1595 = vst.msk [vmem:[%s1594] sm:$0x3] %vm208, %v1592
    %1597 = vrot.lane.b32.xlu0 %v1551, 112
    %v1598 = vpop.permute.xlu0 %1597
    %1601 = vrot.lane.b32.xlu0 %v1581, 80
    %v1602 = vpop.permute.xlu0 %1601
    %v1604 = vsel %vm601, %v1598, %v1602
    %v1606 = vsel %vm284, %v1604, 0
    %1608 = vmatprep.subr.mxu0 0.0
    %1609 = vmatpush1.msra.mxu0 %v417
    %1610 = vmatprep.subr.mxu0 0.0
    %1611 = vmatpush1.msra.mxu0 %v418
    %1612 = vmatprep.subr.mxu0 0.0
    %1613 = vmatpush1.msra.mxu0 %v419
    %1614 = vmatprep.subr.mxu0 0.0
    %1615 = vmatpush1.msra.mxu0 %v420
    %1616 = vmatprep.subr.mxu0 0.0
    %1617 = vmatpush1.msra.mxu0 0.0
    %1618 = vmatprep.subr.mxu0 0.0
    %1619 = vmatpush1.msra.mxu0 0.0
    %1620 = vmatprep.subr.mxu0 0.0
    %1621 = vmatpush1.msra.mxu0 0.0
    %1622 = vmatprep.subr.mxu0 0.0
    %1623 = vmatpush1.msra.mxu0 0.0
    %1624 = vmatprep.subr.mxu0 0.0
    %1625 = vmatpush1.msra.mxu0 0.0
    %1626 = vmatprep.subr.mxu0 0.0
    %1627 = vmatpush1.msra.mxu0 0.0
    %1628 = vmatprep.subr.mxu0 0.0
    %1629 = vmatpush1.msra.mxu0 0.0
    %1630 = vmatprep.subr.mxu0 0.0
    %1631 = vmatpush1.msra.mxu0 0.0
    %1632 = vmatprep.subr.mxu0 0.0
    %1633 = vmatpush1.msra.mxu0 0.0
    %1634 = vmatprep.subr.mxu0 0.0
    %1635 = vmatpush1.msra.mxu0 0.0
    %1636 = vmatprep.subr.mxu0 0.0
    %1637 = vmatpush1.msra.mxu0 0.0
    %1638 = vmatprep.subr.mxu0 0.0
    %1639 = vmatpush1.msra.mxu0 0.0
    %1640 = vmatprep.subr.mxu0 0.0
    %1641 = vmatpush1.msra.mxu0 0.0
    %1642 = vmatprep.subr.mxu0 0.0
    %1643 = vmatpush1.msra.mxu0 0.0
    %1644 = vmatprep.subr.mxu0 0.0
    %1645 = vmatpush1.msra.mxu0 0.0
    %1646 = vmatprep.subr.mxu0 0.0
    %1647 = vmatpush1.msra.mxu0 0.0
    %1648 = vmatprep.subr.mxu0 0.0
    %1649 = vmatpush1.msra.mxu0 0.0
    %1650 = vmatprep.subr.mxu0 0.0
    %1651 = vmatpush1.msra.mxu0 0.0
    %1652 = vmatprep.subr.mxu0 0.0
    %1653 = vmatpush1.msra.mxu0 0.0
    %1654 = vmatprep.subr.mxu0 0.0
    %1655 = vmatpush1.msra.mxu0 0.0
    %1656 = vmatprep.subr.mxu0 0.0
    %1657 = vmatpush1.msra.mxu0 0.0
    %1658 = vmatprep.subr.mxu0 0.0
    %1659 = vmatpush1.msra.mxu0 0.0
    %1660 = vmatprep.subr.mxu0 0.0
    %1661 = vmatpush1.msra.mxu0 0.0
    %1662 = vmatprep.subr.mxu0 0.0
    %1663 = vmatpush1.msra.mxu0 0.0
    %1664 = vmatprep.subr.mxu0 0.0
    %1665 = vmatpush1.msra.mxu0 0.0
    %1666 = vmatprep.subr.mxu0 0.0
    %1667 = vmatpush1.msra.mxu0 0.0
    %1668 = vmatprep.subr.mxu0 0.0
    %1669 = vmatpush1.msra.mxu0 0.0
    %1670 = vmatprep.subr.mxu0 0.0
    %1671 = vmatpush1.msra.mxu0 0.0
    %1672 = vmatprep.mubr.f32.mxu0 0.0
    %1673 = vmatmul.mubr.f32.gmra.mrb[0].mxu0 %v1606
    %v1674 = vpop.f32.mrb[0].mxu0
    %v1675 = vadd.f32 0.0, %v1674
    %v1676 = vpop.f32.mrb[0].mxu0
    %1677 = vdwg.mxu0
    %v1678 = vld [vmem:[%s496] sm:$0x3]
    %v1679 = vld [vmem:[#allocation2] sm:$0x3]
    %v1680 = vadd.f32 %v1678, %v1675
    %v1681 = vxor.u32 %v1680, 2147483648
    %v1682 = vmul.f32 %v1681, 1.442695
    %v1683 = vpow.pop %v1682
    %v1684 = vadd.f32 %v1683, 1.0
    %v1685 = vrcp.pop %v1684
    %v1686 = vmul.f32 1.0, %v1685
    %v1687 = vadd.f32 %v1675, %v511
    %1689 = vrot.lane.b32.xlu0 %v1687, 96
    %v1690 = vpop.permute.xlu0 %1689
    %v1692 = vmul.f32 %v1686, %v1690
    %1694 = vrot.lane.b32.xlu0 %v1692, 32
    %v1695 = vpop.permute.xlu0 %1694
    %v1697 = vadd.f32 %v1678, %v1695
    %v1698 = vtanh.pop %v1697
    %v1699 = vsub.f32 1.0, %v1686
    %1701 = vrot.lane.b32.xlu0 %v1698, 112
    %v1702 = vpop.permute.xlu0 %1701
    %v1704 = vmul.f32 %v1699, %v1702
    %1705 = vrot.lane.b32.xlu0 %v1604, 16
    %v1706 = vpop.permute.xlu0 %1705
    %v1708 = vmul.f32 %v1686, %v1706
    %v1709 = vadd.f32 %v1704, %v1708
    %v1710 = vadd.f32 %v1679, %v1675
    %v1711 = vxor.u32 %v1710, 2147483648
    %v1712 = vmul.f32 %v1711, 1.442695
    %v1713 = vpow.pop %v1712
    %v1714 = vadd.f32 %v1713, 1.0
    %v1715 = vrcp.pop %v1714
    %v1716 = vmul.f32 1.0, %v1715
    %v1717 = vadd.f32 %v1675, %v541
    %1719 = vrot.lane.b32.xlu0 %v1717, 96
    %v1720 = vpop.permute.xlu0 %1719
    %v1722 = vmul.f32 %v1716, %v1720
    %1724 = vrot.lane.b32.xlu0 %v1722, 32
    %v1725 = vpop.permute.xlu0 %1724
    %v1727 = vadd.f32 %v1679, %v1725
    %v1728 = vtanh.pop %v1727
    %v1729 = vsub.f32 1.0, %v1716
    %1731 = vrot.lane.b32.xlu0 %v1728, 112
    %v1732 = vpop.permute.xlu0 %1731
    %v1734 = vmul.f32 %v1729, %v1732
    %1735 = vrot.lane.b32.xlu0 %v1604, 48
    %v1736 = vpop.permute.xlu0 %1735
    %v1738 = vmul.f32 %v1716, %v1736
    %v1739 = vadd.f32 %v1734, %v1738
    %v1740 = vmul.f32 %v1709, %v584
    %1742 = vrot.lane.b32.xlu0 %v1740, 112
    %v1743 = vpop.permute.xlu0 %1742
    %s1745 = scalar_lea.vmem [#allocation3], 20
    %1746 = vst.msk [vmem:[%s1745] sm:$0x3] %vm208, %v1743
    %v1747 = vmul.f32 %v1739, %v572
    %1749 = vrot.lane.b32.xlu0 %v1747, 64
    %v1750 = vpop.permute.xlu0 %1749
    %s1752 = scalar_lea.vmem [#allocation4], 6
    %1753 = vst.msk [vmem:[%s1752] sm:$0x3] %vm208, %v1750
    %v1754 = vld [vmem:[%s579] sm:$0x3]
    %v1755 = vld [vmem:[%s579 + $0x2] sm:$0x3]
    %v1756 = vld [vmem:[%s579 + $0x4] sm:$0x3]
    %v1757 = vld [vmem:[%s579 + $0x6] sm:$0x3]
    %v1758 = vld [vmem:[%s579 + $0x8] sm:$0x3]
    %v1759 = vld [vmem:[%s579 + $0xa] sm:$0x3]
    %v1760 = vld [vmem:[%s579 + $0xc] sm:$0x3]
    %v1761 = vld [vmem:[%s579 + $0xe] sm:$0x3]
    %v1762 = vld [vmem:[%s1752] sm:$0x3]
    %v1763 = vld [vmem:[%s1752 + $0x2] sm:$0x3]
    %v1764 = vld [vmem:[%s1752 + $0x4] sm:$0x3]
    %v1765 = vld [vmem:[%s1752 + $0x6] sm:$0x3]
    %v1766 = vld [vmem:[%s1752 + $0x8] sm:$0x3]
    %v1767 = vld [vmem:[%s1752 + $0xa] sm:$0x3]
    %v1768 = vld [vmem:[%s1752 + $0xc] sm:$0x3]
    %v1769 = vld [vmem:[%s1752 + $0xe] sm:$0x3]
    %v1770 = vsel %vm208, %v1754, 0.0
    %v1771 = vsel %vm208, %v1755, 0.0
    %v1772 = vadd.f32 %v1770, %v1771
    %v1773 = vsel %vm208, %v1756, 0.0
    %v1774 = vadd.f32 %v1772, %v1773
    %v1775 = vsel %vm208, %v1757, 0.0
    %v1776 = vadd.f32 %v1774, %v1775
    %v1777 = vsel %vm208, %v1758, 0.0
    %v1778 = vadd.f32 %v1776, %v1777
    %v1779 = vsel %vm208, %v1759, 0.0
    %v1780 = vadd.f32 %v1778, %v1779
    %v1781 = vsel %vm208, %v1760, 0.0
    %v1782 = vadd.f32 %v1780, %v1781
    %v1783 = vsel %vm208, %v1761, 0.0
    %v1784 = vadd.f32 %v1782, %v1783
    %1786 = vset.pattern.permute.xlu0 0
    %1787 = vperm.xlu0 %1786, %v207
    %v1788 = vpop.permute.xlu0 %1787
    %v1790 = vrcp.pop %v1788
    %v1791 = vmul.f32 %v1784, %v1790
    %v1792 = vsel %vm208, %v1762, 0.0
    %v1793 = vsel %vm208, %v1763, 0.0
    %v1794 = vadd.f32 %v1792, %v1793
    %v1795 = vsel %vm208, %v1764, 0.0
    %v1796 = vadd.f32 %v1794, %v1795
    %v1797 = vsel %vm208, %v1765, 0.0
    %v1798 = vadd.f32 %v1796, %v1797
    %v1799 = vsel %vm208, %v1766, 0.0
    %v1800 = vadd.f32 %v1798, %v1799
    %v1801 = vsel %vm208, %v1767, 0.0
    %v1802 = vadd.f32 %v1800, %v1801
    %v1803 = vsel %vm208, %v1768, 0.0
    %v1804 = vadd.f32 %v1802, %v1803
    %v1805 = vsel %vm208, %v1769, 0.0
    %v1806 = vadd.f32 %v1804, %v1805
    %v1807 = vmul.f32 %v1806, %v1790
    %v1808 = vld [vmem:[#allocation17] sm:$0xff]
    %v1809 = vld [vmem:[#allocation17 + $0x8] sm:$0xff]
    %v1810 = vld [vmem:[#allocation17 + $0x10] sm:$0xff]
    %v1811 = vld [vmem:[#allocation17 + $0x18] sm:$0xff]
    %v1812 = vld [vmem:[#allocation17 + $0x20] sm:$0xff]
    %v1813 = vld [vmem:[#allocation17 + $0x28] sm:$0xff]
    %v1814 = vld [vmem:[#allocation17 + $0x30] sm:$0xff]
    %v1815 = vld [vmem:[#allocation17 + $0x38] sm:$0xff]
    %v1816 = vld [vmem:[#allocation19] sm:$0x1]
    %s1817 = scalar_lea.vmem [#allocation3], 4
    %v1818 = vld [vmem:[%s1817] sm:$0x3]
    %v1819 = vld [vmem:[%s1817 + $0x2] sm:$0x3]
    %v1820 = vld [vmem:[%s1817 + $0x4] sm:$0x3]
    %v1821 = vld [vmem:[%s1817 + $0x6] sm:$0x3]
    %v1822 = vld [vmem:[%s1817 + $0x8] sm:$0x3]
    %v1823 = vld [vmem:[%s1817 + $0xa] sm:$0x3]
    %v1824 = vld [vmem:[%s1817 + $0xc] sm:$0x3]
    %v1825 = vld [vmem:[%s1817 + $0xe] sm:$0x3]
    %v1826 = vld [vmem:[%s1817 + $0x10] sm:$0x3]
    %v1827 = vld [vmem:[%s579] sm:$0x3]
    %v1828 = vld [vmem:[%s579 + $0x2] sm:$0x3]
    %v1829 = vld [vmem:[%s579 + $0x4] sm:$0x3]
    %v1830 = vld [vmem:[%s579 + $0x6] sm:$0x3]
    %v1831 = vld [vmem:[%s579 + $0x8] sm:$0x3]
    %v1832 = vld [vmem:[%s579 + $0xa] sm:$0x3]
    %v1833 = vld [vmem:[%s579 + $0xc] sm:$0x3]
    %v1834 = vld [vmem:[%s579 + $0xe] sm:$0x3]
    %v1835 = vld [vmem:[%s579 + $0x10] sm:$0x3]
    %s1836 = scalar_lea.vmem [#allocation4], 4
    %v1837 = vld [vmem:[%s1836] sm:$0x3]
    %v1838 = vld [vmem:[%s1836 + $0x2] sm:$0x3]
    %v1839 = vld [vmem:[%s1836 + $0x4] sm:$0x3]
    %v1840 = vld [vmem:[%s1836 + $0x6] sm:$0x3]
    %v1841 = vld [vmem:[%s1836 + $0x8] sm:$0x3]
    %v1842 = vld [vmem:[%s1836 + $0xa] sm:$0x3]
    %v1843 = vld [vmem:[%s1836 + $0xc] sm:$0x3]
    %v1844 = vld [vmem:[%s1836 + $0xe] sm:$0x3]
    %v1845 = vld [vmem:[%s1836 + $0x10] sm:$0x3]
    %v1846 = vld [vmem:[%s1752] sm:$0x3]
    %v1847 = vld [vmem:[%s1752 + $0x2] sm:$0x3]
    %v1848 = vld [vmem:[%s1752 + $0x4] sm:$0x3]
    %v1849 = vld [vmem:[%s1752 + $0x6] sm:$0x3]
    %v1850 = vld [vmem:[%s1752 + $0x8] sm:$0x3]
    %v1851 = vld [vmem:[%s1752 + $0xa] sm:$0x3]
    %v1852 = vld [vmem:[%s1752 + $0xc] sm:$0x3]
    %v1853 = vld [vmem:[%s1752 + $0xe] sm:$0x3]
    %v1854 = vld [vmem:[%s1752 + $0x10] sm:$0x3]
    %1864 = vrot.lane.b32.xlu0 %v1827, 16
    %v1865 = vpop.permute.xlu0 %1864
    %1866 = vrot.lane.b32.xlu0 %v1828, 16
    %v1867 = vpop.permute.xlu0 %1866
    %1868 = vrot.lane.b32.xlu0 %v1829, 16
    %v1869 = vpop.permute.xlu0 %1868
    %1870 = vrot.lane.b32.xlu0 %v1830, 16
    %v1871 = vpop.permute.xlu0 %1870
    %1872 = vrot.lane.b32.xlu0 %v1831, 16
    %v1873 = vpop.permute.xlu0 %1872
    %1874 = vrot.lane.b32.xlu0 %v1832, 16
    %v1875 = vpop.permute.xlu0 %1874
    %1876 = vrot.lane.b32.xlu0 %v1833, 16
    %v1877 = vpop.permute.xlu0 %1876
    %1878 = vrot.lane.b32.xlu0 %v1834, 16
    %v1879 = vpop.permute.xlu0 %1878
    %1880 = vrot.lane.b32.xlu0 %v1835, 16
    %v1881 = vpop.permute.xlu0 %1880
    %1900 = vrot.lane.b32.xlu0 %v1837, 32
    %v1901 = vpop.permute.xlu0 %1900
    %1902 = vrot.lane.b32.xlu0 %v1838, 32
    %v1903 = vpop.permute.xlu0 %1902
    %1904 = vrot.lane.b32.xlu0 %v1839, 32
    %v1905 = vpop.permute.xlu0 %1904
    %1906 = vrot.lane.b32.xlu0 %v1840, 32
    %v1907 = vpop.permute.xlu0 %1906
    %1908 = vrot.lane.b32.xlu0 %v1841, 32
    %v1909 = vpop.permute.xlu0 %1908
    %1910 = vrot.lane.b32.xlu0 %v1842, 32
    %v1911 = vpop.permute.xlu0 %1910
    %1912 = vrot.lane.b32.xlu0 %v1843, 32
    %v1913 = vpop.permute.xlu0 %1912
    %1914 = vrot.lane.b32.xlu0 %v1844, 32
    %v1915 = vpop.permute.xlu0 %1914
    %1916 = vrot.lane.b32.xlu0 %v1845, 32
    %v1917 = vpop.permute.xlu0 %1916
    %1936 = vrot.lane.b32.xlu0 %v1846, 48
    %v1937 = vpop.permute.xlu0 %1936
    %1938 = vrot.lane.b32.xlu0 %v1847, 48
    %v1939 = vpop.permute.xlu0 %1938
    %1940 = vrot.lane.b32.xlu0 %v1848, 48
    %v1941 = vpop.permute.xlu0 %1940
    %1942 = vrot.lane.b32.xlu0 %v1849, 48
    %v1943 = vpop.permute.xlu0 %1942
    %1944 = vrot.lane.b32.xlu0 %v1850, 48
    %v1945 = vpop.permute.xlu0 %1944
    %1946 = vrot.lane.b32.xlu0 %v1851, 48
    %v1947 = vpop.permute.xlu0 %1946
    %1948 = vrot.lane.b32.xlu0 %v1852, 48
    %v1949 = vpop.permute.xlu0 %1948
    %1950 = vrot.lane.b32.xlu0 %v1853, 48
    %v1951 = vpop.permute.xlu0 %1950
    %1952 = vrot.lane.b32.xlu0 %v1854, 48
    %v1953 = vpop.permute.xlu0 %1952
    %v1963 = vsel %vm601, %v1818, %v1865
    %v1964 = vsel %vm601, %v1819, %v1867
    %v1965 = vsel %vm601, %v1820, %v1869
    %v1966 = vsel %vm601, %v1821, %v1871
    %v1967 = vsel %vm601, %v1822, %v1873
    %v1968 = vsel %vm601, %v1823, %v1875
    %v1969 = vsel %vm601, %v1824, %v1877
    %v1970 = vsel %vm601, %v1825, %v1879
    %v1971 = vsel %vm601, %v1826, %v1881
    %v1972 = vsel %vm284, %v1963, %v1901
    %v1973 = vsel %vm284, %v1964, %v1903
    %v1974 = vsel %vm284, %v1965, %v1905
    %v1975 = vsel %vm284, %v1966, %v1907
    %v1976 = vsel %vm284, %v1967, %v1909
    %v1977 = vsel %vm284, %v1968, %v1911
    %v1978 = vsel %vm284, %v1969, %v1913
    %v1979 = vsel %vm284, %v1970, %v1915
    %v1980 = vsel %vm284, %v1971, %v1917
    %vm1981 = vcmask 392192
    %v1982 = vsel %vm1981, %v1972, %v1937
    %v1983 = vsel %vm1981, %v1973, %v1939
    %v1984 = vsel %vm1981, %v1974, %v1941
    %v1985 = vsel %vm1981, %v1975, %v1943
    %v1986 = vsel %vm1981, %v1976, %v1945
    %v1987 = vsel %vm1981, %v1977, %v1947
    %v1988 = vsel %vm1981, %v1978, %v1949
    %v1989 = vsel %vm1981, %v1979, %v1951
    %v1990 = vsel %vm1981, %v1980, %v1953
    %v1992 = vlaneseq
    %v1993 = vshrl.u32 %v1992, 7
    %v1994 = vsub.s32 0, %v1993
    %v1995 = vrot.slane %v1816, %v1994
    %v2006 = vcombine.low %v1982, %v1983
    %v2007 = vcombine.low %v1984, %v1985
    %v2009 = vunpack.c.l.s4 1983009808
    %v2010 = vunpack.c.0.s8 %v2009
    %v2011 = vlaneseq
    %v2012 = vshrl.u32 %v2011, 7
    %v2013 = vsub.s32 %v2010, %v2012
    %v2014 = vrot.slane %v2006, %v2013
    %v2016 = vunpack.c.l.s4 1983009808
    %v2017 = vunpack.c.0.s8 %v2016
    %v2018 = vlaneseq
    %v2019 = vshrl.u32 %v2018, 7
    %v2020 = vsub.s32 %v2017, %v2019
    %v2021 = vrot.slane %v2007, %v2020
    %v2022 = vcombine.low %v2014, %v2021
    %v2023 = vcombine.low %v1986, %v1987
    %v2024 = vcombine.low %v1988, %v1989
    %v2026 = vunpack.c.l.s4 1983009808
    %v2027 = vunpack.c.0.s8 %v2026
    %v2028 = vlaneseq
    %v2029 = vshrl.u32 %v2028, 7
    %v2030 = vsub.s32 %v2027, %v2029
    %v2031 = vrot.slane %v2023, %v2030
    %v2033 = vunpack.c.l.s4 1983009808
    %v2034 = vunpack.c.0.s8 %v2033
    %v2035 = vlaneseq
    %v2036 = vshrl.u32 %v2035, 7
    %v2037 = vsub.s32 %v2034, %v2036
    %v2038 = vrot.slane %v2024, %v2037
    %v2039 = vcombine.low %v2031, %v2038
    %v2041 = vunpack.c.l.s4 1983009808
    %v2042 = vunpack.c.0.s8 %v2041
    %v2043 = vlaneseq
    %v2044 = vshrl.u32 %v2043, 7
    %v2045 = vsub.s32 %v2042, %v2044
    %v2046 = vrot.slane %v1990, %v2045
    %vm2047 = vcmask 523264
    %v2048 = vsel %vm2047, %v2022, 0
    %v2050 = vsel %vm2047, %v2039, 0
    %v2052 = vsel %vm2047, %v2046, 0
    %2054 = vmatprep.subr.mxu0 0.0
    %2055 = vmatpush1.msra.mxu0 %v1808
    %2056 = vmatprep.subr.mxu0 0.0
    %2057 = vmatpush1.msra.mxu0 %v1809
    %2058 = vmatprep.subr.mxu0 0.0
    %2059 = vmatpush1.msra.mxu0 %v1810
    %2060 = vmatprep.subr.mxu0 0.0
    %2061 = vmatpush1.msra.mxu0 %v1811
    %2062 = vmatprep.subr.mxu0 0.0
    %2063 = vmatpush1.msra.mxu0 %v1812
    %2064 = vmatprep.subr.mxu0 0.0
    %2065 = vmatpush1.msra.mxu0 %v1813
    %2066 = vmatprep.subr.mxu0 0.0
    %2067 = vmatpush1.msra.mxu0 %v1814
    %2068 = vmatprep.subr.mxu0 0.0
    %2069 = vmatpush1.msra.mxu0 %v1815
    %2070 = vmatprep.subr.mxu0 0.0
    %2071 = vmatpush1.msra.mxu0 0.0
    %2072 = vmatprep.subr.mxu0 0.0
    %2073 = vmatpush1.msra.mxu0 0.0
    %2074 = vmatprep.subr.mxu0 0.0
    %2075 = vmatpush1.msra.mxu0 0.0
    %2076 = vmatprep.subr.mxu0 0.0
    %2077 = vmatpush1.msra.mxu0 0.0
    %2078 = vmatprep.subr.mxu0 0.0
    %2079 = vmatpush1.msra.mxu0 0.0
    %2080 = vmatprep.subr.mxu0 0.0
    %2081 = vmatpush1.msra.mxu0 0.0
    %2082 = vmatprep.subr.mxu0 0.0
    %2083 = vmatpush1.msra.mxu0 0.0
    %2084 = vmatprep.subr.mxu0 0.0
    %2085 = vmatpush1.msra.mxu0 0.0
    %2086 = vmatprep.subr.mxu0 0.0
    %2087 = vmatpush1.msra.mxu0 0.0
    %2088 = vmatprep.subr.mxu0 0.0
    %2089 = vmatpush1.msra.mxu0 0.0
    %2090 = vmatprep.subr.mxu0 0.0
    %2091 = vmatpush1.msra.mxu0 0.0
    %2092 = vmatprep.subr.mxu0 0.0
    %2093 = vmatpush1.msra.mxu0 0.0
    %2094 = vmatprep.subr.mxu0 0.0
    %2095 = vmatpush1.msra.mxu0 0.0
    %2096 = vmatprep.subr.mxu0 0.0
    %2097 = vmatpush1.msra.mxu0 0.0
    %2098 = vmatprep.subr.mxu0 0.0
    %2099 = vmatpush1.msra.mxu0 0.0
    %2100 = vmatprep.subr.mxu0 0.0
    %2101 = vmatpush1.msra.mxu0 0.0
    %2102 = vmatprep.subr.mxu0 0.0
    %2103 = vmatpush1.msra.mxu0 0.0
    %2104 = vmatprep.subr.mxu0 0.0
    %2105 = vmatpush1.msra.mxu0 0.0
    %2106 = vmatprep.subr.mxu0 0.0
    %2107 = vmatpush1.msra.mxu0 0.0
    %2108 = vmatprep.subr.mxu0 0.0
    %2109 = vmatpush1.msra.mxu0 0.0
    %2110 = vmatprep.subr.mxu0 0.0
    %2111 = vmatpush1.msra.mxu0 0.0
    %2112 = vmatprep.subr.mxu0 0.0
    %2113 = vmatpush1.msra.mxu0 0.0
    %2114 = vmatprep.subr.mxu0 0.0
    %2115 = vmatpush1.msra.mxu0 0.0
    %2116 = vmatprep.subr.mxu0 0.0
    %2117 = vmatpush1.msra.mxu0 0.0
    %2118 = vmatprep.mubr.f32.mxu0 0.0
    %2119 = vmatmul.mubr.f32.gmra.mrb[0].mxu0 %v2048
    %v2120 = vpop.f32.mrb[0].mxu0
    %v2121 = vadd.f32 %v1995, %v2120
    %v2122 = vpop.f32.mrb[0].mxu0
    %2123 = vmatprep.mubr.f32.mxu0 0.0
    %2124 = vmatmul.mubr.f32.gmra.mrb[0].mxu0 %v2050
    %v2125 = vpop.f32.mrb[0].mxu0
    %v2126 = vadd.f32 %v1995, %v2125
    %v2127 = vpop.f32.mrb[0].mxu0
    %2128 = vmatprep.mubr.f32.mxu0 0.0
    %2129 = vmatmul.mubr.f32.gmra.mrb[0].mxu0 %v2052
    %v2130 = vpop.f32.mrb[0].mxu0
    %v2131 = vadd.f32 %v1995, %v2130
    %v2132 = vpop.f32.mrb[0].mxu0
    %2133 = vdwg.mxu0
    %v2134 = vmax.f32 %v2121, 0.0
    %v2135 = vmax.f32 %v2126, 0.0
    %v2136 = vmax.f32 %v2131, 0.0
    %v2140 = vcombine.high %v2134, %v2134
    %v2142 = vunpack.c.l.s4 1983009808
    %v2143 = vunpack.c.0.s8 %v2142
    %v2144 = vlaneseq
    %v2145 = vshrl.u32 %v2144, 7
    %v2146 = vsub.s32 %v2143, %v2145
    %v2147 = vrot.slane %v2134, %v2146
    %v2149 = vunpack.c.l.s4 1983009808
    %v2150 = vunpack.c.0.s8 %v2149
    %v2151 = vlaneseq
    %v2152 = vshrl.u32 %v2151, 7
    %v2153 = vsub.s32 %v2150, %v2152
    %v2154 = vrot.slane %v2140, %v2153
    %v2155 = vcombine.high %v2147, %v2147
    %v2156 = vcombine.high %v2154, %v2154
    %v2157 = vcombine.high %v2135, %v2135
    %v2159 = vunpack.c.l.s4 1983009808
    %v2160 = vunpack.c.0.s8 %v2159
    %v2161 = vlaneseq
    %v2162 = vshrl.u32 %v2161, 7
    %v2163 = vsub.s32 %v2160, %v2162
    %v2164 = vrot.slane %v2135, %v2163
    %v2166 = vunpack.c.l.s4 1983009808
    %v2167 = vunpack.c.0.s8 %v2166
    %v2168 = vlaneseq
    %v2169 = vshrl.u32 %v2168, 7
    %v2170 = vsub.s32 %v2167, %v2169
    %v2171 = vrot.slane %v2157, %v2170
    %v2172 = vcombine.high %v2164, %v2164
    %v2173 = vcombine.high %v2171, %v2171
    %v2175 = vunpack.c.l.s4 1983009808
    %v2176 = vunpack.c.0.s8 %v2175
    %v2177 = vlaneseq
    %v2178 = vshrl.u32 %v2177, 7
    %v2179 = vsub.s32 %v2176, %v2178
    %v2180 = vrot.slane %v2136, %v2179
    %v2190 = vsel %vm208, %v2147, -inf
    %v2191 = vsel %vm208, %v2155, -inf
    %v2192 = vsel %vm208, %v2154, -inf
    %v2193 = vsel %vm208, %v2156, -inf
    %v2194 = vsel %vm208, %v2164, -inf
    %v2195 = vmax.f32 %v2190, %v2194
    %v2196 = vsel %vm208, %v2172, -inf
    %v2197 = vmax.f32 %v2191, %v2196
    %v2198 = vsel %vm208, %v2171, -inf
    %v2199 = vmax.f32 %v2192, %v2198
    %v2200 = vsel %vm208, %v2173, -inf
    %v2201 = vmax.f32 %v2193, %v2200
    %v2202 = vsel %vm208, %v2180, -inf
    %v2203 = vmax.f32 %v2195, %v2202
    %v2204 = vmax.f32 %v2203, %v2197
    %v2205 = vmax.f32 %v2199, %v2201
    %v2206 = vmax.f32 %v2204, %v2205
    %v2207 = vld [vmem:[#allocation20] sm:$0xff]
    %v2208 = vld [vmem:[#allocation20 + $0x8] sm:$0xff]
    %v2209 = vld [vmem:[#allocation20 + $0x10] sm:$0xff]
    %v2210 = vld [vmem:[#allocation20 + $0x18] sm:$0xff]
    %v2211 = vld [vmem:[#allocation20 + $0x20] sm:$0xff]
    %v2212 = vld [vmem:[#allocation20 + $0x28] sm:$0xff]
    %v2213 = vld [vmem:[#allocation20 + $0x30] sm:$0xff]
    %v2214 = vld [vmem:[#allocation20 + $0x38] sm:$0xff]
    %v2215 = vld [vmem:[#allocation20 + $0x40] sm:$0xff]
    %v2216 = vld [vmem:[#allocation20 + $0x48] sm:$0xff]
    %v2217 = vld [vmem:[#allocation20 + $0x50] sm:$0xff]
    %v2218 = vld [vmem:[#allocation20 + $0x58] sm:$0xff]
    %v2219 = vld [vmem:[#allocation22] sm:$0x1]
    %s2220 = scalar_lea.vmem [#allocation3], 2
    %v2221 = vld [vmem:[%s2220] sm:$0x3]
    %v2222 = vld [vmem:[%s2220 + $0x2] sm:$0x3]
    %v2223 = vld [vmem:[%s2220 + $0x4] sm:$0x3]
    %v2224 = vld [vmem:[%s2220 + $0x6] sm:$0x3]
    %v2225 = vld [vmem:[%s2220 + $0x8] sm:$0x3]
    %v2226 = vld [vmem:[%s2220 + $0xa] sm:$0x3]
    %v2227 = vld [vmem:[%s2220 + $0xc] sm:$0x3]
    %v2228 = vld [vmem:[%s2220 + $0xe] sm:$0x3]
    %v2229 = vld [vmem:[%s2220 + $0x10] sm:$0x3]
    %v2230 = vld [vmem:[%s2220 + $0x12] sm:$0x3]
    %v2231 = vld [vmem:[%s1817] sm:$0x3]
    %v2232 = vld [vmem:[%s1817 + $0x2] sm:$0x3]
    %v2233 = vld [vmem:[%s1817 + $0x4] sm:$0x3]
    %v2234 = vld [vmem:[%s1817 + $0x6] sm:$0x3]
    %v2235 = vld [vmem:[%s1817 + $0x8] sm:$0x3]
    %v2236 = vld [vmem:[%s1817 + $0xa] sm:$0x3]
    %v2237 = vld [vmem:[%s1817 + $0xc] sm:$0x3]
    %v2238 = vld [vmem:[%s1817 + $0xe] sm:$0x3]
    %v2239 = vld [vmem:[%s1817 + $0x10] sm:$0x3]
    %v2240 = vld [vmem:[%s1817 + $0x12] sm:$0x3]
    %v2241 = vld [vmem:[%s579] sm:$0x3]
    %v2242 = vld [vmem:[%s579 + $0x2] sm:$0x3]
    %v2243 = vld [vmem:[%s579 + $0x4] sm:$0x3]
    %v2244 = vld [vmem:[%s579 + $0x6] sm:$0x3]
    %v2245 = vld [vmem:[%s579 + $0x8] sm:$0x3]
    %v2246 = vld [vmem:[%s579 + $0xa] sm:$0x3]
    %v2247 = vld [vmem:[%s579 + $0xc] sm:$0x3]
    %v2248 = vld [vmem:[%s579 + $0xe] sm:$0x3]
    %v2249 = vld [vmem:[%s579 + $0x10] sm:$0x3]
    %v2250 = vld [vmem:[%s579 + $0x12] sm:$0x3]
    %s2251 = scalar_lea.vmem [#allocation4], 2
    %v2252 = vld [vmem:[%s2251] sm:$0x3]
    %v2253 = vld [vmem:[%s2251 + $0x2] sm:$0x3]
    %v2254 = vld [vmem:[%s2251 + $0x4] sm:$0x3]
    %v2255 = vld [vmem:[%s2251 + $0x6] sm:$0x3]
    %v2256 = vld [vmem:[%s2251 + $0x8] sm:$0x3]
    %v2257 = vld [vmem:[%s2251 + $0xa] sm:$0x3]
    %v2258 = vld [vmem:[%s2251 + $0xc] sm:$0x3]
    %v2259 = vld [vmem:[%s2251 + $0xe] sm:$0x3]
    %v2260 = vld [vmem:[%s2251 + $0x10] sm:$0x3]
    %v2261 = vld [vmem:[%s2251 + $0x12] sm:$0x3]
    %v2262 = vld [vmem:[%s1836] sm:$0x3]
    %v2263 = vld [vmem:[%s1836 + $0x2] sm:$0x3]
    %v2264 = vld [vmem:[%s1836 + $0x4] sm:$0x3]
    %v2265 = vld [vmem:[%s1836 + $0x6] sm:$0x3]
    %v2266 = vld [vmem:[%s1836 + $0x8] sm:$0x3]
    %v2267 = vld [vmem:[%s1836 + $0xa] sm:$0x3]
    %v2268 = vld [vmem:[%s1836 + $0xc] sm:$0x3]
    %v2269 = vld [vmem:[%s1836 + $0xe] sm:$0x3]
    %v2270 = vld [vmem:[%s1836 + $0x10] sm:$0x3]
    %v2271 = vld [vmem:[%s1836 + $0x12] sm:$0x3]
    %v2272 = vld [vmem:[%s1752] sm:$0x3]
    %v2273 = vld [vmem:[%s1752 + $0x2] sm:$0x3]
    %v2274 = vld [vmem:[%s1752 + $0x4] sm:$0x3]
    %v2275 = vld [vmem:[%s1752 + $0x6] sm:$0x3]
    %v2276 = vld [vmem:[%s1752 + $0x8] sm:$0x3]
    %v2277 = vld [vmem:[%s1752 + $0xa] sm:$0x3]
    %v2278 = vld [vmem:[%s1752 + $0xc] sm:$0x3]
    %v2279 = vld [vmem:[%s1752 + $0xe] sm:$0x3]
    %v2280 = vld [vmem:[%s1752 + $0x10] sm:$0x3]
    %v2281 = vld [vmem:[%s1752 + $0x12] sm:$0x3]
    %2292 = vrot.lane.b32.xlu0 %v2231, 16
    %v2293 = vpop.permute.xlu0 %2292
    %2294 = vrot.lane.b32.xlu0 %v2232, 16
    %v2295 = vpop.permute.xlu0 %2294
    %2296 = vrot.lane.b32.xlu0 %v2233, 16
    %v2297 = vpop.permute.xlu0 %2296
    %2298 = vrot.lane.b32.xlu0 %v2234, 16
    %v2299 = vpop.permute.xlu0 %2298
    %2300 = vrot.lane.b32.xlu0 %v2235, 16
    %v2301 = vpop.permute.xlu0 %2300
    %2302 = vrot.lane.b32.xlu0 %v2236, 16
    %v2303 = vpop.permute.xlu0 %2302
    %2304 = vrot.lane.b32.xlu0 %v2237, 16
    %v2305 = vpop.permute.xlu0 %2304
    %2306 = vrot.lane.b32.xlu0 %v2238, 16
    %v2307 = vpop.permute.xlu0 %2306
    %2308 = vrot.lane.b32.xlu0 %v2239, 16
    %v2309 = vpop.permute.xlu0 %2308
    %2310 = vrot.lane.b32.xlu0 %v2240, 16
    %v2311 = vpop.permute.xlu0 %2310
    %2332 = vrot.lane.b32.xlu0 %v2241, 32
    %v2333 = vpop.permute.xlu0 %2332
    %2334 = vrot.lane.b32.xlu0 %v2242, 32
    %v2335 = vpop.permute.xlu0 %2334
    %2336 = vrot.lane.b32.xlu0 %v2243, 32
    %v2337 = vpop.permute.xlu0 %2336
    %2338 = vrot.lane.b32.xlu0 %v2244, 32
    %v2339 = vpop.permute.xlu0 %2338
    %2340 = vrot.lane.b32.xlu0 %v2245, 32
    %v2341 = vpop.permute.xlu0 %2340
    %2342 = vrot.lane.b32.xlu0 %v2246, 32
    %v2343 = vpop.permute.xlu0 %2342
    %2344 = vrot.lane.b32.xlu0 %v2247, 32
    %v2345 = vpop.permute.xlu0 %2344
    %2346 = vrot.lane.b32.xlu0 %v2248, 32
    %v2347 = vpop.permute.xlu0 %2346
    %2348 = vrot.lane.b32.xlu0 %v2249, 32
    %v2349 = vpop.permute.xlu0 %2348
    %2350 = vrot.lane.b32.xlu0 %v2250, 32
    %v2351 = vpop.permute.xlu0 %2350
    %2372 = vrot.lane.b32.xlu0 %v2252, 48
    %v2373 = vpop.permute.xlu0 %2372
    %2374 = vrot.lane.b32.xlu0 %v2253, 48
    %v2375 = vpop.permute.xlu0 %2374
    %2376 = vrot.lane.b32.xlu0 %v2254, 48
    %v2377 = vpop.permute.xlu0 %2376
    %2378 = vrot.lane.b32.xlu0 %v2255, 48
    %v2379 = vpop.permute.xlu0 %2378
    %2380 = vrot.lane.b32.xlu0 %v2256, 48
    %v2381 = vpop.permute.xlu0 %2380
    %2382 = vrot.lane.b32.xlu0 %v2257, 48
    %v2383 = vpop.permute.xlu0 %2382
    %2384 = vrot.lane.b32.xlu0 %v2258, 48
    %v2385 = vpop.permute.xlu0 %2384
    %2386 = vrot.lane.b32.xlu0 %v2259, 48
    %v2387 = vpop.permute.xlu0 %2386
    %2388 = vrot.lane.b32.xlu0 %v2260, 48
    %v2389 = vpop.permute.xlu0 %2388
    %2390 = vrot.lane.b32.xlu0 %v2261, 48
    %v2391 = vpop.permute.xlu0 %2390
    %2412 = vrot.lane.b32.xlu0 %v2262, 64
    %v2413 = vpop.permute.xlu0 %2412
    %2414 = vrot.lane.b32.xlu0 %v2263, 64
    %v2415 = vpop.permute.xlu0 %2414
    %2416 = vrot.lane.b32.xlu0 %v2264, 64
    %v2417 = vpop.permute.xlu0 %2416
    %2418 = vrot.lane.b32.xlu0 %v2265, 64
    %v2419 = vpop.permute.xlu0 %2418
    %2420 = vrot.lane.b32.xlu0 %v2266, 64
    %v2421 = vpop.permute.xlu0 %2420
    %2422 = vrot.lane.b32.xlu0 %v2267, 64
    %v2423 = vpop.permute.xlu0 %2422
    %2424 = vrot.lane.b32.xlu0 %v2268, 64
    %v2425 = vpop.permute.xlu0 %2424
    %2426 = vrot.lane.b32.xlu0 %v2269, 64
    %v2427 = vpop.permute.xlu0 %2426
    %2428 = vrot.lane.b32.xlu0 %v2270, 64
    %v2429 = vpop.permute.xlu0 %2428
    %2430 = vrot.lane.b32.xlu0 %v2271, 64
    %v2431 = vpop.permute.xlu0 %2430
    %2452 = vrot.lane.b32.xlu0 %v2272, 80
    %v2453 = vpop.permute.xlu0 %2452
    %2454 = vrot.lane.b32.xlu0 %v2273, 80
    %v2455 = vpop.permute.xlu0 %2454
    %2456 = vrot.lane.b32.xlu0 %v2274, 80
    %v2457 = vpop.permute.xlu0 %2456
    %2458 = vrot.lane.b32.xlu0 %v2275, 80
    %v2459 = vpop.permute.xlu0 %2458
    %2460 = vrot.lane.b32.xlu0 %v2276, 80
    %v2461 = vpop.permute.xlu0 %2460
    %2462 = vrot.lane.b32.xlu0 %v2277, 80
    %v2463 = vpop.permute.xlu0 %2462
    %2464 = vrot.lane.b32.xlu0 %v2278, 80
    %v2465 = vpop.permute.xlu0 %2464
    %2466 = vrot.lane.b32.xlu0 %v2279, 80
    %v2467 = vpop.permute.xlu0 %2466
    %2468 = vrot.lane.b32.xlu0 %v2280, 80
    %v2469 = vpop.permute.xlu0 %2468
    %2470 = vrot.lane.b32.xlu0 %v2281, 80
    %v2471 = vpop.permute.xlu0 %2470
    %v2482 = vsel %vm601, %v2221, %v2293
    %v2483 = vsel %vm601, %v2222, %v2295
    %v2484 = vsel %vm601, %v2223, %v2297
    %v2485 = vsel %vm601, %v2224, %v2299
    %v2486 = vsel %vm601, %v2225, %v2301
    %v2487 = vsel %vm601, %v2226, %v2303
    %v2488 = vsel %vm601, %v2227, %v2305
    %v2489 = vsel %vm601, %v2228, %v2307
    %v2490 = vsel %vm601, %v2229, %v2309
    %v2491 = vsel %vm601, %v2230, %v2311
    %v2492 = vsel %vm284, %v2482, %v2333
    %v2493 = vsel %vm284, %v2483, %v2335
    %v2494 = vsel %vm284, %v2484, %v2337
    %v2495 = vsel %vm284, %v2485, %v2339
    %v2496 = vsel %vm284, %v2486, %v2341
    %v2497 = vsel %vm284, %v2487, %v2343
    %v2498 = vsel %vm284, %v2488, %v2345
    %v2499 = vsel %vm284, %v2489, %v2347
    %v2500 = vsel %vm284, %v2490, %v2349
    %v2501 = vsel %vm284, %v2491, %v2351
    %v2502 = vsel %vm1981, %v2492, %v2373
    %v2503 = vsel %vm1981, %v2493, %v2375
    %v2504 = vsel %vm1981, %v2494, %v2377
    %v2505 = vsel %vm1981, %v2495, %v2379
    %v2506 = vsel %vm1981, %v2496, %v2381
    %v2507 = vsel %vm1981, %v2497, %v2383
    %v2508 = vsel %vm1981, %v2498, %v2385
    %v2509 = vsel %vm1981, %v2499, %v2387
    %v2510 = vsel %vm1981, %v2500, %v2389
    %v2511 = vsel %vm1981, %v2501, %v2391
    %v2512 = vsel %vm2047, %v2502, %v2413
    %v2513 = vsel %vm2047, %v2503, %v2415
    %v2514 = vsel %vm2047, %v2504, %v2417
    %v2515 = vsel %vm2047, %v2505, %v2419
    %v2516 = vsel %vm2047, %v2506, %v2421
    %v2517 = vsel %vm2047, %v2507, %v2423
    %v2518 = vsel %vm2047, %v2508, %v2425
    %v2519 = vsel %vm2047, %v2509, %v2427
    %v2520 = vsel %vm2047, %v2510, %v2429
    %v2521 = vsel %vm2047, %v2511, %v2431
    %vm2522 = vcmask 654336
    %v2523 = vsel %vm2522, %v2512, %v2453
    %v2524 = vsel %vm2522, %v2513, %v2455
    %v2525 = vsel %vm2522, %v2514, %v2457
    %v2526 = vsel %vm2522, %v2515, %v2459
    %v2527 = vsel %vm2522, %v2516, %v2461
    %v2528 = vsel %vm2522, %v2517, %v2463
    %v2529 = vsel %vm2522, %v2518, %v2465
    %v2530 = vsel %vm2522, %v2519, %v2467
    %v2531 = vsel %vm2522, %v2520, %v2469
    %v2532 = vsel %vm2522, %v2521, %v2471
    %v2534 = vlaneseq
    %v2535 = vshrl.u32 %v2534, 7
    %v2536 = vsub.s32 0, %v2535
    %v2537 = vrot.slane %v2219, %v2536
    %v2549 = vcombine.low %v2523, %v2524
    %v2550 = vcombine.low %v2525, %v2526
    %v2552 = vunpack.c.l.s4 1983009808
    %v2553 = vunpack.c.0.s8 %v2552
    %v2554 = vlaneseq
    %v2555 = vshrl.u32 %v2554, 7
    %v2556 = vsub.s32 %v2553, %v2555
    %v2557 = vrot.slane %v2549, %v2556
    %v2559 = vunpack.c.l.s4 1983009808
    %v2560 = vunpack.c.0.s8 %v2559
    %v2561 = vlaneseq
    %v2562 = vshrl.u32 %v2561, 7
    %v2563 = vsub.s32 %v2560, %v2562
    %v2564 = vrot.slane %v2550, %v2563
    %v2565 = vcombine.low %v2557, %v2564
    %v2566 = vcombine.low %v2527, %v2528
    %v2567 = vcombine.low %v2529, %v2530
    %v2569 = vunpack.c.l.s4 1983009808
    %v2570 = vunpack.c.0.s8 %v2569
    %v2571 = vlaneseq
    %v2572 = vshrl.u32 %v2571, 7
    %v2573 = vsub.s32 %v2570, %v2572
    %v2574 = vrot.slane %v2566, %v2573
    %v2576 = vunpack.c.l.s4 1983009808
    %v2577 = vunpack.c.0.s8 %v2576
    %v2578 = vlaneseq
    %v2579 = vshrl.u32 %v2578, 7
    %v2580 = vsub.s32 %v2577, %v2579
    %v2581 = vrot.slane %v2567, %v2580
    %v2582 = vcombine.low %v2574, %v2581
    %v2583 = vcombine.low %v2531, %v2532
    %v2585 = vunpack.c.l.s4 1983009808
    %v2586 = vunpack.c.0.s8 %v2585
    %v2587 = vlaneseq
    %v2588 = vshrl.u32 %v2587, 7
    %v2589 = vsub.s32 %v2586, %v2588
    %v2590 = vrot.slane %v2583, %v2589
    %vm2591 = vcmask 785408
    %v2592 = vsel %vm2591, %v2565, 0
    %v2594 = vsel %vm2591, %v2582, 0
    %v2596 = vsel %vm2591, %v2590, 0
    %2598 = vmatprep.subr.mxu0 0.0
    %2599 = vmatpush1.msra.mxu0 %v2207
    %2600 = vmatprep.subr.mxu0 0.0
    %2601 = vmatpush1.msra.mxu0 %v2208
    %2602 = vmatprep.subr.mxu0 0.0
    %2603 = vmatpush1.msra.mxu0 %v2209
    %2604 = vmatprep.subr.mxu0 0.0
    %2605 = vmatpush1.msra.mxu0 %v2210
    %2606 = vmatprep.subr.mxu0 0.0
    %2607 = vmatpush1.msra.mxu0 %v2211
    %2608 = vmatprep.subr.mxu0 0.0
    %2609 = vmatpush1.msra.mxu0 %v2212
    %2610 = vmatprep.subr.mxu0 0.0
    %2611 = vmatpush1.msra.mxu0 %v2213
    %2612 = vmatprep.subr.mxu0 0.0
    %2613 = vmatpush1.msra.mxu0 %v2214
    %2614 = vmatprep.subr.mxu0 0.0
    %2615 = vmatpush1.msra.mxu0 %v2215
    %2616 = vmatprep.subr.mxu0 0.0
    %2617 = vmatpush1.msra.mxu0 %v2216
    %2618 = vmatprep.subr.mxu0 0.0
    %2619 = vmatpush1.msra.mxu0 %v2217
    %2620 = vmatprep.subr.mxu0 0.0
    %2621 = vmatpush1.msra.mxu0 %v2218
    %2622 = vmatprep.subr.mxu0 0.0
    %2623 = vmatpush1.msra.mxu0 0.0
    %2624 = vmatprep.subr.mxu0 0.0
    %2625 = vmatpush1.msra.mxu0 0.0
    %2626 = vmatprep.subr.mxu0 0.0
    %2627 = vmatpush1.msra.mxu0 0.0
    %2628 = vmatprep.subr.mxu0 0.0
    %2629 = vmatpush1.msra.mxu0 0.0
    %2630 = vmatprep.subr.mxu0 0.0
    %2631 = vmatpush1.msra.mxu0 0.0
    %2632 = vmatprep.subr.mxu0 0.0
    %2633 = vmatpush1.msra.mxu0 0.0
    %2634 = vmatprep.subr.mxu0 0.0
    %2635 = vmatpush1.msra.mxu0 0.0
    %2636 = vmatprep.subr.mxu0 0.0
    %2637 = vmatpush1.msra.mxu0 0.0
    %2638 = vmatprep.subr.mxu0 0.0
    %2639 = vmatpush1.msra.mxu0 0.0
    %2640 = vmatprep.subr.mxu0 0.0
    %2641 = vmatpush1.msra.mxu0 0.0
    %2642 = vmatprep.subr.mxu0 0.0
    %2643 = vmatpush1.msra.mxu0 0.0
    %2644 = vmatprep.subr.mxu0 0.0
    %2645 = vmatpush1.msra.mxu0 0.0
    %2646 = vmatprep.subr.mxu0 0.0
    %2647 = vmatpush1.msra.mxu0 0.0
    %2648 = vmatprep.subr.mxu0 0.0
    %2649 = vmatpush1.msra.mxu0 0.0
    %2650 = vmatprep.subr.mxu0 0.0
    %2651 = vmatpush1.msra.mxu0 0.0
    %2652 = vmatprep.subr.mxu0 0.0
    %2653 = vmatpush1.msra.mxu0 0.0
    %2654 = vmatprep.subr.mxu0 0.0
    %2655 = vmatpush1.msra.mxu0 0.0
    %2656 = vmatprep.subr.mxu0 0.0
    %2657 = vmatpush1.msra.mxu0 0.0
    %2658 = vmatprep.subr.mxu0 0.0
    %2659 = vmatpush1.msra.mxu0 0.0
    %2660 = vmatprep.subr.mxu0 0.0
    %2661 = vmatpush1.msra.mxu0 0.0
    %2662 = vmatprep.mubr.f32.mxu0 0.0
    %2663 = vmatmul.mubr.f32.gmra.mrb[0].mxu0 %v2592
    %v2664 = vpop.f32.mrb[0].mxu0
    %v2665 = vadd.f32 %v2537, %v2664
    %v2666 = vpop.f32.mrb[0].mxu0
    %2667 = vmatprep.mubr.f32.mxu0 0.0
    %2668 = vmatmul.mubr.f32.gmra.mrb[0].mxu0 %v2594
    %v2669 = vpop.f32.mrb[0].mxu0
    %v2670 = vadd.f32 %v2537, %v2669
    %v2671 = vpop.f32.mrb[0].mxu0
    %2672 = vmatprep.mubr.f32.mxu0 0.0
    %2673 = vmatmul.mubr.f32.gmra.mrb[0].mxu0 %v2596
    %v2674 = vpop.f32.mrb[0].mxu0
    %v2675 = vadd.f32 %v2537, %v2674
    %v2676 = vpop.f32.mrb[0].mxu0
    %2677 = vdwg.mxu0
    %v2678 = vmax.f32 %v2665, 0.0
    %v2679 = vmax.f32 %v2670, 0.0
    %v2680 = vmax.f32 %v2675, 0.0
    %v2684 = vcombine.high %v2678, %v2678
    %v2686 = vunpack.c.l.s4 1983009808
    %v2687 = vunpack.c.0.s8 %v2686
    %v2688 = vlaneseq
    %v2689 = vshrl.u32 %v2688, 7
    %v2690 = vsub.s32 %v2687, %v2689
    %v2691 = vrot.slane %v2678, %v2690
    %v2693 = vunpack.c.l.s4 1983009808
    %v2694 = vunpack.c.0.s8 %v2693
    %v2695 = vlaneseq
    %v2696 = vshrl.u32 %v2695, 7
    %v2697 = vsub.s32 %v2694, %v2696
    %v2698 = vrot.slane %v2684, %v2697
    %v2699 = vcombine.high %v2691, %v2691
    %v2700 = vcombine.high %v2698, %v2698
    %v2701 = vcombine.high %v2679, %v2679
    %v2703 = vunpack.c.l.s4 1983009808
    %v2704 = vunpack.c.0.s8 %v2703
    %v2705 = vlaneseq
    %v2706 = vshrl.u32 %v2705, 7
    %v2707 = vsub.s32 %v2704, %v2706
    %v2708 = vrot.slane %v2679, %v2707
    %v2710 = vunpack.c.l.s4 1983009808
    %v2711 = vunpack.c.0.s8 %v2710
    %v2712 = vlaneseq
    %v2713 = vshrl.u32 %v2712, 7
    %v2714 = vsub.s32 %v2711, %v2713
    %v2715 = vrot.slane %v2701, %v2714
    %v2716 = vcombine.high %v2708, %v2708
    %v2717 = vcombine.high %v2715, %v2715
    %v2719 = vunpack.c.l.s4 1983009808
    %v2720 = vunpack.c.0.s8 %v2719
    %v2721 = vlaneseq
    %v2722 = vshrl.u32 %v2721, 7
    %v2723 = vsub.s32 %v2720, %v2722
    %v2724 = vrot.slane %v2680, %v2723
    %v2725 = vcombine.high %v2724, %v2724
    %v2736 = vsel %vm208, %v2691, -inf
    %v2737 = vsel %vm208, %v2699, -inf
    %v2738 = vsel %vm208, %v2698, -inf
    %v2739 = vsel %vm208, %v2700, -inf
    %v2740 = vsel %vm208, %v2708, -inf
    %v2741 = vmax.f32 %v2736, %v2740
    %v2742 = vsel %vm208, %v2716, -inf
    %v2743 = vmax.f32 %v2737, %v2742
    %v2744 = vsel %vm208, %v2715, -inf
    %v2745 = vmax.f32 %v2738, %v2744
    %v2746 = vsel %vm208, %v2717, -inf
    %v2747 = vmax.f32 %v2739, %v2746
    %v2748 = vsel %vm208, %v2724, -inf
    %v2749 = vmax.f32 %v2741, %v2748
    %v2750 = vsel %vm208, %v2725, -inf
    %v2751 = vmax.f32 %v2743, %v2750
    %v2752 = vmax.f32 %v2749, %v2751
    %v2753 = vmax.f32 %v2745, %v2747
    %v2754 = vmax.f32 %v2752, %v2753
    %v2755 = vld [vmem:[#allocation23] sm:$0xff]
    %v2756 = vld [vmem:[#allocation23 + $0x8] sm:$0xff]
    %v2757 = vld [vmem:[#allocation23 + $0x10] sm:$0xff]
    %v2758 = vld [vmem:[#allocation23 + $0x18] sm:$0xff]
    %v2759 = vld [vmem:[#allocation23 + $0x20] sm:$0xff]
    %v2760 = vld [vmem:[#allocation23 + $0x28] sm:$0xff]
    %v2761 = vld [vmem:[#allocation23 + $0x30] sm:$0xff]
    %v2762 = vld [vmem:[#allocation23 + $0x38] sm:$0xff]
    %v2763 = vld [vmem:[#allocation23 + $0x40] sm:$0xff]
    %v2764 = vld [vmem:[#allocation23 + $0x48] sm:$0xff]
    %v2765 = vld [vmem:[#allocation23 + $0x50] sm:$0xff]
    %v2766 = vld [vmem:[#allocation23 + $0x58] sm:$0xff]
    %v2767 = vld [vmem:[#allocation23 + $0x60] sm:$0xff]
    %v2768 = vld [vmem:[#allocation23 + $0x68] sm:$0xff]
    %v2769 = vld [vmem:[#allocation23 + $0x70] sm:$0xff]
    %v2770 = vld [vmem:[#allocation23 + $0x78] sm:$0xff]
    %v2771 = vld [vmem:[#allocation25] sm:$0x1]
    %v2772 = vld [vmem:[#allocation3] sm:$0x3]
    %v2773 = vld [vmem:[#allocation3 + $0x2] sm:$0x3]
    %v2774 = vld [vmem:[#allocation3 + $0x4] sm:$0x3]
    %v2775 = vld [vmem:[#allocation3 + $0x6] sm:$0x3]
    %v2776 = vld [vmem:[#allocation3 + $0x8] sm:$0x3]
    %v2777 = vld [vmem:[#allocation3 + $0xa] sm:$0x3]
    %v2778 = vld [vmem:[#allocation3 + $0xc] sm:$0x3]
    %v2779 = vld [vmem:[#allocation3 + $0xe] sm:$0x3]
    %v2780 = vld [vmem:[#allocation3 + $0x10] sm:$0x3]
    %v2781 = vld [vmem:[#allocation3 + $0x12] sm:$0x3]
    %v2782 = vld [vmem:[#allocation3 + $0x14] sm:$0x3]
    %v2783 = vld [vmem:[%s2220] sm:$0x3]
    %v2784 = vld [vmem:[%s2220 + $0x2] sm:$0x3]
    %v2785 = vld [vmem:[%s2220 + $0x4] sm:$0x3]
    %v2786 = vld [vmem:[%s2220 + $0x6] sm:$0x3]
    %v2787 = vld [vmem:[%s2220 + $0x8] sm:$0x3]
    %v2788 = vld [vmem:[%s2220 + $0xa] sm:$0x3]
    %v2789 = vld [vmem:[%s2220 + $0xc] sm:$0x3]
    %v2790 = vld [vmem:[%s2220 + $0xe] sm:$0x3]
    %v2791 = vld [vmem:[%s2220 + $0x10] sm:$0x3]
    %v2792 = vld [vmem:[%s2220 + $0x12] sm:$0x3]
    %v2793 = vld [vmem:[%s2220 + $0x14] sm:$0x3]
    %v2794 = vld [vmem:[%s1817] sm:$0x3]
    %v2795 = vld [vmem:[%s1817 + $0x2] sm:$0x3]
    %v2796 = vld [vmem:[%s1817 + $0x4] sm:$0x3]
    %v2797 = vld [vmem:[%s1817 + $0x6] sm:$0x3]
    %v2798 = vld [vmem:[%s1817 + $0x8] sm:$0x3]
    %v2799 = vld [vmem:[%s1817 + $0xa] sm:$0x3]
    %v2800 = vld [vmem:[%s1817 + $0xc] sm:$0x3]
    %v2801 = vld [vmem:[%s1817 + $0xe] sm:$0x3]
    %v2802 = vld [vmem:[%s1817 + $0x10] sm:$0x3]
    %v2803 = vld [vmem:[%s1817 + $0x12] sm:$0x3]
    %v2804 = vld [vmem:[%s1817 + $0x14] sm:$0x3]
    %v2805 = vld [vmem:[%s579] sm:$0x3]
    %v2806 = vld [vmem:[%s579 + $0x2] sm:$0x3]
    %v2807 = vld [vmem:[%s579 + $0x4] sm:$0x3]
    %v2808 = vld [vmem:[%s579 + $0x6] sm:$0x3]
    %v2809 = vld [vmem:[%s579 + $0x8] sm:$0x3]
    %v2810 = vld [vmem:[%s579 + $0xa] sm:$0x3]
    %v2811 = vld [vmem:[%s579 + $0xc] sm:$0x3]
    %v2812 = vld [vmem:[%s579 + $0xe] sm:$0x3]
    %v2813 = vld [vmem:[%s579 + $0x10] sm:$0x3]
    %v2814 = vld [vmem:[%s579 + $0x12] sm:$0x3]
    %v2815 = vld [vmem:[%s579 + $0x14] sm:$0x3]
    %v2816 = vld [vmem:[#allocation4] sm:$0x3]
    %v2817 = vld [vmem:[#allocation4 + $0x2] sm:$0x3]
    %v2818 = vld [vmem:[#allocation4 + $0x4] sm:$0x3]
    %v2819 = vld [vmem:[#allocation4 + $0x6] sm:$0x3]
    %v2820 = vld [vmem:[#allocation4 + $0x8] sm:$0x3]
    %v2821 = vld [vmem:[#allocation4 + $0xa] sm:$0x3]
    %v2822 = vld [vmem:[#allocation4 + $0xc] sm:$0x3]
    %v2823 = vld [vmem:[#allocation4 + $0xe] sm:$0x3]
    %v2824 = vld [vmem:[#allocation4 + $0x10] sm:$0x3]
    %v2825 = vld [vmem:[#allocation4 + $0x12] sm:$0x3]
    %v2826 = vld [vmem:[#allocation4 + $0x14] sm:$0x3]
    %v2827 = vld [vmem:[%s2251] sm:$0x3]
    %v2828 = vld [vmem:[%s2251 + $0x2] sm:$0x3]
    %v2829 = vld [vmem:[%s2251 + $0x4] sm:$0x3]
    %v2830 = vld [vmem:[%s2251 + $0x6] sm:$0x3]
    %v2831 = vld [vmem:[%s2251 + $0x8] sm:$0x3]
    %v2832 = vld [vmem:[%s2251 + $0xa] sm:$0x3]
    %v2833 = vld [vmem:[%s2251 + $0xc] sm:$0x3]
    %v2834 = vld [vmem:[%s2251 + $0xe] sm:$0x3]
    %v2835 = vld [vmem:[%s2251 + $0x10] sm:$0x3]
    %v2836 = vld [vmem:[%s2251 + $0x12] sm:$0x3]
    %v2837 = vld [vmem:[%s2251 + $0x14] sm:$0x3]
    %v2838 = vld [vmem:[%s1836] sm:$0x3]
    %v2839 = vld [vmem:[%s1836 + $0x2] sm:$0x3]
    %v2840 = vld [vmem:[%s1836 + $0x4] sm:$0x3]
    %v2841 = vld [vmem:[%s1836 + $0x6] sm:$0x3]
    %v2842 = vld [vmem:[%s1836 + $0x8] sm:$0x3]
    %v2843 = vld [vmem:[%s1836 + $0xa] sm:$0x3]
    %v2844 = vld [vmem:[%s1836 + $0xc] sm:$0x3]
    %v2845 = vld [vmem:[%s1836 + $0xe] sm:$0x3]
    %v2846 = vld [vmem:[%s1836 + $0x10] sm:$0x3]
    %v2847 = vld [vmem:[%s1836 + $0x12] sm:$0x3]
    %v2848 = vld [vmem:[%s1836 + $0x14] sm:$0x3]
    %v2849 = vld [vmem:[%s1752] sm:$0x3]
    %v2850 = vld [vmem:[%s1752 + $0x2] sm:$0x3]
    %v2851 = vld [vmem:[%s1752 + $0x4] sm:$0x3]
    %v2852 = vld [vmem:[%s1752 + $0x6] sm:$0x3]
    %v2853 = vld [vmem:[%s1752 + $0x8] sm:$0x3]
    %v2854 = vld [vmem:[%s1752 + $0xa] sm:$0x3]
    %v2855 = vld [vmem:[%s1752 + $0xc] sm:$0x3]
    %v2856 = vld [vmem:[%s1752 + $0xe] sm:$0x3]
    %v2857 = vld [vmem:[%s1752 + $0x10] sm:$0x3]
    %v2858 = vld [vmem:[%s1752 + $0x12] sm:$0x3]
    %v2859 = vld [vmem:[%s1752 + $0x14] sm:$0x3]
    %2871 = vrot.lane.b32.xlu0 %v2783, 16
    %v2872 = vpop.permute.xlu0 %2871
    %2873 = vrot.lane.b32.xlu0 %v2784, 16
    %v2874 = vpop.permute.xlu0 %2873
    %2875 = vrot.lane.b32.xlu0 %v2785, 16
    %v2876 = vpop.permute.xlu0 %2875
    %2877 = vrot.lane.b32.xlu0 %v2786, 16
    %v2878 = vpop.permute.xlu0 %2877
    %2879 = vrot.lane.b32.xlu0 %v2787, 16
    %v2880 = vpop.permute.xlu0 %2879
    %2881 = vrot.lane.b32.xlu0 %v2788, 16
    %v2882 = vpop.permute.xlu0 %2881
    %2883 = vrot.lane.b32.xlu0 %v2789, 16
    %v2884 = vpop.permute.xlu0 %2883
    %2885 = vrot.lane.b32.xlu0 %v2790, 16
    %v2886 = vpop.permute.xlu0 %2885
    %2887 = vrot.lane.b32.xlu0 %v2791, 16
    %v2888 = vpop.permute.xlu0 %2887
    %2889 = vrot.lane.b32.xlu0 %v2792, 16
    %v2890 = vpop.permute.xlu0 %2889
    %2891 = vrot.lane.b32.xlu0 %v2793, 16
    %v2892 = vpop.permute.xlu0 %2891
    %2915 = vrot.lane.b32.xlu0 %v2794, 32
    %v2916 = vpop.permute.xlu0 %2915
    %2917 = vrot.lane.b32.xlu0 %v2795, 32
    %v2918 = vpop.permute.xlu0 %2917
    %2919 = vrot.lane.b32.xlu0 %v2796, 32
    %v2920 = vpop.permute.xlu0 %2919
    %2921 = vrot.lane.b32.xlu0 %v2797, 32
    %v2922 = vpop.permute.xlu0 %2921
    %2923 = vrot.lane.b32.xlu0 %v2798, 32
    %v2924 = vpop.permute.xlu0 %2923
    %2925 = vrot.lane.b32.xlu0 %v2799, 32
    %v2926 = vpop.permute.xlu0 %2925
    %2927 = vrot.lane.b32.xlu0 %v2800, 32
    %v2928 = vpop.permute.xlu0 %2927
    %2929 = vrot.lane.b32.xlu0 %v2801, 32
    %v2930 = vpop.permute.xlu0 %2929
    %2931 = vrot.lane.b32.xlu0 %v2802, 32
    %v2932 = vpop.permute.xlu0 %2931
    %2933 = vrot.lane.b32.xlu0 %v2803, 32
    %v2934 = vpop.permute.xlu0 %2933
    %2935 = vrot.lane.b32.xlu0 %v2804, 32
    %v2936 = vpop.permute.xlu0 %2935
    %2959 = vrot.lane.b32.xlu0 %v2805, 48
    %v2960 = vpop.permute.xlu0 %2959
    %2961 = vrot.lane.b32.xlu0 %v2806, 48
    %v2962 = vpop.permute.xlu0 %2961
    %2963 = vrot.lane.b32.xlu0 %v2807, 48
    %v2964 = vpop.permute.xlu0 %2963
    %2965 = vrot.lane.b32.xlu0 %v2808, 48
    %v2966 = vpop.permute.xlu0 %2965
    %2967 = vrot.lane.b32.xlu0 %v2809, 48
    %v2968 = vpop.permute.xlu0 %2967
    %2969 = vrot.lane.b32.xlu0 %v2810, 48
    %v2970 = vpop.permute.xlu0 %2969
    %2971 = vrot.lane.b32.xlu0 %v2811, 48
    %v2972 = vpop.permute.xlu0 %2971
    %2973 = vrot.lane.b32.xlu0 %v2812, 48
    %v2974 = vpop.permute.xlu0 %2973
    %2975 = vrot.lane.b32.xlu0 %v2813, 48
    %v2976 = vpop.permute.xlu0 %2975
    %2977 = vrot.lane.b32.xlu0 %v2814, 48
    %v2978 = vpop.permute.xlu0 %2977
    %2979 = vrot.lane.b32.xlu0 %v2815, 48
    %v2980 = vpop.permute.xlu0 %2979
    %3003 = vrot.lane.b32.xlu0 %v2816, 64
    %v3004 = vpop.permute.xlu0 %3003
    %3005 = vrot.lane.b32.xlu0 %v2817, 64
    %v3006 = vpop.permute.xlu0 %3005
    %3007 = vrot.lane.b32.xlu0 %v2818, 64
    %v3008 = vpop.permute.xlu0 %3007
    %3009 = vrot.lane.b32.xlu0 %v2819, 64
    %v3010 = vpop.permute.xlu0 %3009
    %3011 = vrot.lane.b32.xlu0 %v2820, 64
    %v3012 = vpop.permute.xlu0 %3011
    %3013 = vrot.lane.b32.xlu0 %v2821, 64
    %v3014 = vpop.permute.xlu0 %3013
    %3015 = vrot.lane.b32.xlu0 %v2822, 64
    %v3016 = vpop.permute.xlu0 %3015
    %3017 = vrot.lane.b32.xlu0 %v2823, 64
    %v3018 = vpop.permute.xlu0 %3017
    %3019 = vrot.lane.b32.xlu0 %v2824, 64
    %v3020 = vpop.permute.xlu0 %3019
    %3021 = vrot.lane.b32.xlu0 %v2825, 64
    %v3022 = vpop.permute.xlu0 %3021
    %3023 = vrot.lane.b32.xlu0 %v2826, 64
    %v3024 = vpop.permute.xlu0 %3023
    %3047 = vrot.lane.b32.xlu0 %v2827, 80
    %v3048 = vpop.permute.xlu0 %3047
    %3049 = vrot.lane.b32.xlu0 %v2828, 80
    %v3050 = vpop.permute.xlu0 %3049
    %3051 = vrot.lane.b32.xlu0 %v2829, 80
    %v3052 = vpop.permute.xlu0 %3051
    %3053 = vrot.lane.b32.xlu0 %v2830, 80
    %v3054 = vpop.permute.xlu0 %3053
    %3055 = vrot.lane.b32.xlu0 %v2831, 80
    %v3056 = vpop.permute.xlu0 %3055
    %3057 = vrot.lane.b32.xlu0 %v2832, 80
    %v3058 = vpop.permute.xlu0 %3057
    %3059 = vrot.lane.b32.xlu0 %v2833, 80
    %v3060 = vpop.permute.xlu0 %3059
    %3061 = vrot.lane.b32.xlu0 %v2834, 80
    %v3062 = vpop.permute.xlu0 %3061
    %3063 = vrot.lane.b32.xlu0 %v2835, 80
    %v3064 = vpop.permute.xlu0 %3063
    %3065 = vrot.lane.b32.xlu0 %v2836, 80
    %v3066 = vpop.permute.xlu0 %3065
    %3067 = vrot.lane.b32.xlu0 %v2837, 80
    %v3068 = vpop.permute.xlu0 %3067
    %3091 = vrot.lane.b32.xlu0 %v2838, 96
    %v3092 = vpop.permute.xlu0 %3091
    %3093 = vrot.lane.b32.xlu0 %v2839, 96
    %v3094 = vpop.permute.xlu0 %3093
    %3095 = vrot.lane.b32.xlu0 %v2840, 96
    %v3096 = vpop.permute.xlu0 %3095
    %3097 = vrot.lane.b32.xlu0 %v2841, 96
    %v3098 = vpop.permute.xlu0 %3097
    %3099 = vrot.lane.b32.xlu0 %v2842, 96
    %v3100 = vpop.permute.xlu0 %3099
    %3101 = vrot.lane.b32.xlu0 %v2843, 96
    %v3102 = vpop.permute.xlu0 %3101
    %3103 = vrot.lane.b32.xlu0 %v2844, 96
    %v3104 = vpop.permute.xlu0 %3103
    %3105 = vrot.lane.b32.xlu0 %v2845, 96
    %v3106 = vpop.permute.xlu0 %3105
    %3107 = vrot.lane.b32.xlu0 %v2846, 96
    %v3108 = vpop.permute.xlu0 %3107
    %3109 = vrot.lane.b32.xlu0 %v2847, 96
    %v3110 = vpop.permute.xlu0 %3109
    %3111 = vrot.lane.b32.xlu0 %v2848, 96
    %v3112 = vpop.permute.xlu0 %3111
    %3135 = vrot.lane.b32.xlu0 %v2849, 112
    %v3136 = vpop.permute.xlu0 %3135
    %3137 = vrot.lane.b32.xlu0 %v2850, 112
    %v3138 = vpop.permute.xlu0 %3137
    %3139 = vrot.lane.b32.xlu0 %v2851, 112
    %v3140 = vpop.permute.xlu0 %3139
    %3141 = vrot.lane.b32.xlu0 %v2852, 112
    %v3142 = vpop.permute.xlu0 %3141
    %3143 = vrot.lane.b32.xlu0 %v2853, 112
    %v3144 = vpop.permute.xlu0 %3143
    %3145 = vrot.lane.b32.xlu0 %v2854, 112
    %v3146 = vpop.permute.xlu0 %3145
    %3147 = vrot.lane.b32.xlu0 %v2855, 112
    %v3148 = vpop.permute.xlu0 %3147
    %3149 = vrot.lane.b32.xlu0 %v2856, 112
    %v3150 = vpop.permute.xlu0 %3149
    %3151 = vrot.lane.b32.xlu0 %v2857, 112
    %v3152 = vpop.permute.xlu0 %3151
    %3153 = vrot.lane.b32.xlu0 %v2858, 112
    %v3154 = vpop.permute.xlu0 %3153
    %3155 = vrot.lane.b32.xlu0 %v2859, 112
    %v3156 = vpop.permute.xlu0 %3155
    %v3168 = vsel %vm601, %v2772, %v2872
    %v3169 = vsel %vm601, %v2773, %v2874
    %v3170 = vsel %vm601, %v2774, %v2876
    %v3171 = vsel %vm601, %v2775, %v2878
    %v3172 = vsel %vm601, %v2776, %v2880
    %v3173 = vsel %vm601, %v2777, %v2882
    %v3174 = vsel %vm601, %v2778, %v2884
    %v3175 = vsel %vm601, %v2779, %v2886
    %v3176 = vsel %vm601, %v2780, %v2888
    %v3177 = vsel %vm601, %v2781, %v2890
    %v3178 = vsel %vm601, %v2782, %v2892
    %v3179 = vsel %vm284, %v3168, %v2916
    %v3180 = vsel %vm284, %v3169, %v2918
    %v3181 = vsel %vm284, %v3170, %v2920
    %v3182 = vsel %vm284, %v3171, %v2922
    %v3183 = vsel %vm284, %v3172, %v2924
    %v3184 = vsel %vm284, %v3173, %v2926
    %v3185 = vsel %vm284, %v3174, %v2928
    %v3186 = vsel %vm284, %v3175, %v2930
    %v3187 = vsel %vm284, %v3176, %v2932
    %v3188 = vsel %vm284, %v3177, %v2934
    %v3189 = vsel %vm284, %v3178, %v2936
    %v3190 = vsel %vm1981, %v3179, %v2960
    %v3191 = vsel %vm1981, %v3180, %v2962
    %v3192 = vsel %vm1981, %v3181, %v2964
    %v3193 = vsel %vm1981, %v3182, %v2966
    %v3194 = vsel %vm1981, %v3183, %v2968
    %v3195 = vsel %vm1981, %v3184, %v2970
    %v3196 = vsel %vm1981, %v3185, %v2972
    %v3197 = vsel %vm1981, %v3186, %v2974
    %v3198 = vsel %vm1981, %v3187, %v2976
    %v3199 = vsel %vm1981, %v3188, %v2978
    %v3200 = vsel %vm1981, %v3189, %v2980
    %v3201 = vsel %vm2047, %v3190, %v3004
    %v3202 = vsel %vm2047, %v3191, %v3006
    %v3203 = vsel %vm2047, %v3192, %v3008
    %v3204 = vsel %vm2047, %v3193, %v3010
    %v3205 = vsel %vm2047, %v3194, %v3012
    %v3206 = vsel %vm2047, %v3195, %v3014
    %v3207 = vsel %vm2047, %v3196, %v3016
    %v3208 = vsel %vm2047, %v3197, %v3018
    %v3209 = vsel %vm2047, %v3198, %v3020
    %v3210 = vsel %vm2047, %v3199, %v3022
    %v3211 = vsel %vm2047, %v3200, %v3024
    %v3212 = vsel %vm2522, %v3201, %v3048
    %v3213 = vsel %vm2522, %v3202, %v3050
    %v3214 = vsel %vm2522, %v3203, %v3052
    %v3215 = vsel %vm2522, %v3204, %v3054
    %v3216 = vsel %vm2522, %v3205, %v3056
    %v3217 = vsel %vm2522, %v3206, %v3058
    %v3218 = vsel %vm2522, %v3207, %v3060
    %v3219 = vsel %vm2522, %v3208, %v3062
    %v3220 = vsel %vm2522, %v3209, %v3064
    %v3221 = vsel %vm2522, %v3210, %v3066
    %v3222 = vsel %vm2522, %v3211, %v3068
    %v3223 = vsel %vm2591, %v3212, %v3092
    %v3224 = vsel %vm2591, %v3213, %v3094
    %v3225 = vsel %vm2591, %v3214, %v3096
    %v3226 = vsel %vm2591, %v3215, %v3098
    %v3227 = vsel %vm2591, %v3216, %v3100
    %v3228 = vsel %vm2591, %v3217, %v3102
    %v3229 = vsel %vm2591, %v3218, %v3104
    %v3230 = vsel %vm2591, %v3219, %v3106
    %v3231 = vsel %vm2591, %v3220, %v3108
    %v3232 = vsel %vm2591, %v3221, %v3110
    %v3233 = vsel %vm2591, %v3222, %v3112
    %vm3234 = vcmask 916480
    %v3235 = vsel %vm3234, %v3223, %v3136
    %v3236 = vsel %vm3234, %v3224, %v3138
    %v3237 = vsel %vm3234, %v3225, %v3140
    %v3238 = vsel %vm3234, %v3226, %v3142
    %v3239 = vsel %vm3234, %v3227, %v3144
    %v3240 = vsel %vm3234, %v3228, %v3146
    %v3241 = vsel %vm3234, %v3229, %v3148
    %v3242 = vsel %vm3234, %v3230, %v3150
    %v3243 = vsel %vm3234, %v3231, %v3152
    %v3244 = vsel %vm3234, %v3232, %v3154
    %v3245 = vsel %vm3234, %v3233, %v3156
    %v3247 = vlaneseq
    %v3248 = vshrl.u32 %v3247, 7
    %v3249 = vsub.s32 0, %v3248
    %v3250 = vrot.slane %v2771, %v3249
    %v3263 = vcombine.low %v3235, %v3236
    %v3264 = vcombine.low %v3237, %v3238
    %v3266 = vunpack.c.l.s4 1983009808
    %v3267 = vunpack.c.0.s8 %v3266
    %v3268 = vlaneseq
    %v3269 = vshrl.u32 %v3268, 7
    %v3270 = vsub.s32 %v3267, %v3269
    %v3271 = vrot.slane %v3263, %v3270
    %v3273 = vunpack.c.l.s4 1983009808
    %v3274 = vunpack.c.0.s8 %v3273
    %v3275 = vlaneseq
    %v3276 = vshrl.u32 %v3275, 7
    %v3277 = vsub.s32 %v3274, %v3276
    %v3278 = vrot.slane %v3264, %v3277
    %v3279 = vcombine.low %v3271, %v3278
    %v3280 = vcombine.low %v3239, %v3240
    %v3281 = vcombine.low %v3241, %v3242
    %v3283 = vunpack.c.l.s4 1983009808
    %v3284 = vunpack.c.0.s8 %v3283
    %v3285 = vlaneseq
    %v3286 = vshrl.u32 %v3285, 7
    %v3287 = vsub.s32 %v3284, %v3286
    %v3288 = vrot.slane %v3280, %v3287
    %v3290 = vunpack.c.l.s4 1983009808
    %v3291 = vunpack.c.0.s8 %v3290
    %v3292 = vlaneseq
    %v3293 = vshrl.u32 %v3292, 7
    %v3294 = vsub.s32 %v3291, %v3293
    %v3295 = vrot.slane %v3281, %v3294
    %v3296 = vcombine.low %v3288, %v3295
    %v3297 = vcombine.low %v3243, %v3244
    %v3299 = vunpack.c.l.s4 1983009808
    %v3300 = vunpack.c.0.s8 %v3299
    %v3301 = vlaneseq
    %v3302 = vshrl.u32 %v3301, 7
    %v3303 = vsub.s32 %v3300, %v3302
    %v3304 = vrot.slane %v3297, %v3303
    %v3306 = vunpack.c.l.s4 1983009808
    %v3307 = vunpack.c.0.s8 %v3306
    %v3308 = vlaneseq
    %v3309 = vshrl.u32 %v3308, 7
    %v3310 = vsub.s32 %v3307, %v3309
    %v3311 = vrot.slane %v3245, %v3310
    %v3312 = vcombine.low %v3304, %v3311
    %3316 = vmatprep.subr.mxu0 0.0
    %3317 = vmatpush1.msra.mxu0 %v2755
    %3318 = vmatprep.subr.mxu0 0.0
    %3319 = vmatpush1.msra.mxu0 %v2756
    %3320 = vmatprep.subr.mxu0 0.0
    %3321 = vmatpush1.msra.mxu0 %v2757
    %3322 = vmatprep.subr.mxu0 0.0
    %3323 = vmatpush1.msra.mxu0 %v2758
    %3324 = vmatprep.subr.mxu0 0.0
    %3325 = vmatpush1.msra.mxu0 %v2759
    %3326 = vmatprep.subr.mxu0 0.0
    %3327 = vmatpush1.msra.mxu0 %v2760
    %3328 = vmatprep.subr.mxu0 0.0
    %3329 = vmatpush1.msra.mxu0 %v2761
    %3330 = vmatprep.subr.mxu0 0.0
    %3331 = vmatpush1.msra.mxu0 %v2762
    %3332 = vmatprep.subr.mxu0 0.0
    %3333 = vmatpush1.msra.mxu0 %v2763
    %3334 = vmatprep.subr.mxu0 0.0
    %3335 = vmatpush1.msra.mxu0 %v2764
    %3336 = vmatprep.subr.mxu0 0.0
    %3337 = vmatpush1.msra.mxu0 %v2765
    %3338 = vmatprep.subr.mxu0 0.0
    %3339 = vmatpush1.msra.mxu0 %v2766
    %3340 = vmatprep.subr.mxu0 0.0
    %3341 = vmatpush1.msra.mxu0 %v2767
    %3342 = vmatprep.subr.mxu0 0.0
    %3343 = vmatpush1.msra.mxu0 %v2768
    %3344 = vmatprep.subr.mxu0 0.0
    %3345 = vmatpush1.msra.mxu0 %v2769
    %3346 = vmatprep.subr.mxu0 0.0
    %3347 = vmatpush1.msra.mxu0 %v2770
    %3348 = vmatprep.subr.mxu0 0.0
    %3349 = vmatpush1.msra.mxu0 0.0
    %3350 = vmatprep.subr.mxu0 0.0
    %3351 = vmatpush1.msra.mxu0 0.0
    %3352 = vmatprep.subr.mxu0 0.0
    %3353 = vmatpush1.msra.mxu0 0.0
    %3354 = vmatprep.subr.mxu0 0.0
    %3355 = vmatpush1.msra.mxu0 0.0
    %3356 = vmatprep.subr.mxu0 0.0
    %3357 = vmatpush1.msra.mxu0 0.0
    %3358 = vmatprep.subr.mxu0 0.0
    %3359 = vmatpush1.msra.mxu0 0.0
    %3360 = vmatprep.subr.mxu0 0.0
    %3361 = vmatpush1.msra.mxu0 0.0
    %3362 = vmatprep.subr.mxu0 0.0
    %3363 = vmatpush1.msra.mxu0 0.0
    %3364 = vmatprep.subr.mxu0 0.0
    %3365 = vmatpush1.msra.mxu0 0.0
    %3366 = vmatprep.subr.mxu0 0.0
    %3367 = vmatpush1.msra.mxu0 0.0
    %3368 = vmatprep.subr.mxu0 0.0
    %3369 = vmatpush1.msra.mxu0 0.0
    %3370 = vmatprep.subr.mxu0 0.0
    %3371 = vmatpush1.msra.mxu0 0.0
    %3372 = vmatprep.subr.mxu0 0.0
    %3373 = vmatpush1.msra.mxu0 0.0
    %3374 = vmatprep.subr.mxu0 0.0
    %3375 = vmatpush1.msra.mxu0 0.0
    %3376 = vmatprep.subr.mxu0 0.0
    %3377 = vmatpush1.msra.mxu0 0.0
    %3378 = vmatprep.subr.mxu0 0.0
    %3379 = vmatpush1.msra.mxu0 0.0
    %3380 = vmatprep.mubr.f32.mxu0 0.0
    %3381 = vmatmul.mubr.f32.gmra.mrb[0].mxu0 %v3279
    %v3382 = vpop.f32.mrb[0].mxu0
    %v3383 = vadd.f32 %v3250, %v3382
    %v3384 = vpop.f32.mrb[0].mxu0
    %3385 = vmatprep.mubr.f32.mxu0 0.0
    %3386 = vmatmul.mubr.f32.gmra.mrb[0].mxu0 %v3296
    %v3387 = vpop.f32.mrb[0].mxu0
    %v3388 = vadd.f32 %v3250, %v3387
    %v3389 = vpop.f32.mrb[0].mxu0
    %3390 = vmatprep.mubr.f32.mxu0 0.0
    %3391 = vmatmul.mubr.f32.gmra.mrb[0].mxu0 %v3312
    %v3392 = vpop.f32.mrb[0].mxu0
    %v3393 = vadd.f32 %v3250, %v3392
    %v3394 = vpop.f32.mrb[0].mxu0
    %3395 = vdwg.mxu0
    %v3396 = vmax.f32 %v3383, 0.0
    %v3397 = vmax.f32 %v3388, 0.0
    %v3398 = vmax.f32 %v3393, 0.0
    %v3402 = vcombine.high %v3396, %v3396
    %v3404 = vunpack.c.l.s4 1983009808
    %v3405 = vunpack.c.0.s8 %v3404
    %v3406 = vlaneseq
    %v3407 = vshrl.u32 %v3406, 7
    %v3408 = vsub.s32 %v3405, %v3407
    %v3409 = vrot.slane %v3396, %v3408
    %v3411 = vunpack.c.l.s4 1983009808
    %v3412 = vunpack.c.0.s8 %v3411
    %v3413 = vlaneseq
    %v3414 = vshrl.u32 %v3413, 7
    %v3415 = vsub.s32 %v3412, %v3414
    %v3416 = vrot.slane %v3402, %v3415
    %v3417 = vcombine.high %v3409, %v3409
    %v3418 = vcombine.high %v3416, %v3416
    %v3419 = vcombine.high %v3397, %v3397
    %v3421 = vunpack.c.l.s4 1983009808
    %v3422 = vunpack.c.0.s8 %v3421
    %v3423 = vlaneseq
    %v3424 = vshrl.u32 %v3423, 7
    %v3425 = vsub.s32 %v3422, %v3424
    %v3426 = vrot.slane %v3397, %v3425
    %v3428 = vunpack.c.l.s4 1983009808
    %v3429 = vunpack.c.0.s8 %v3428
    %v3430 = vlaneseq
    %v3431 = vshrl.u32 %v3430, 7
    %v3432 = vsub.s32 %v3429, %v3431
    %v3433 = vrot.slane %v3419, %v3432
    %v3434 = vcombine.high %v3426, %v3426
    %v3435 = vcombine.high %v3433, %v3433
    %v3436 = vcombine.high %v3398, %v3398
    %v3438 = vunpack.c.l.s4 1983009808
    %v3439 = vunpack.c.0.s8 %v3438
    %v3440 = vlaneseq
    %v3441 = vshrl.u32 %v3440, 7
    %v3442 = vsub.s32 %v3439, %v3441
    %v3443 = vrot.slane %v3398, %v3442
    %v3445 = vunpack.c.l.s4 1983009808
    %v3446 = vunpack.c.0.s8 %v3445
    %v3447 = vlaneseq
    %v3448 = vshrl.u32 %v3447, 7
    %v3449 = vsub.s32 %v3446, %v3448
    %v3450 = vrot.slane %v3436, %v3449
    %v3451 = vcombine.high %v3443, %v3443
    %v3463 = vsel %vm208, %v3409, -inf
    %v3464 = vsel %vm208, %v3417, -inf
    %v3465 = vsel %vm208, %v3416, -inf
    %v3466 = vsel %vm208, %v3418, -inf
    %v3467 = vsel %vm208, %v3426, -inf
    %v3468 = vmax.f32 %v3463, %v3467
    %v3469 = vsel %vm208, %v3434, -inf
    %v3470 = vmax.f32 %v3464, %v3469
    %v3471 = vsel %vm208, %v3433, -inf
    %v3472 = vmax.f32 %v3465, %v3471
    %v3473 = vsel %vm208, %v3435, -inf
    %v3474 = vmax.f32 %v3466, %v3473
    %v3475 = vsel %vm208, %v3443, -inf
    %v3476 = vmax.f32 %v3468, %v3475
    %v3477 = vsel %vm208, %v3451, -inf
    %v3478 = vmax.f32 %v3470, %v3477
    %v3479 = vsel %vm208, %v3450, -inf
    %v3480 = vmax.f32 %v3472, %v3479
    %v3481 = vmax.f32 %v3476, %v3478
    %v3482 = vmax.f32 %v3480, %v3474
    %v3483 = vmax.f32 %v3481, %v3482
    %v3484 = vld [vmem:[#allocation10] sm:$0x3]
    %3486 = vrot.lane.b32.xlu0 %v1807, 16
    %v3487 = vpop.permute.xlu0 %3486
    %v3491 = vunpack.c.l.s4 1983009808
    %v3492 = vunpack.c.0.s8 %v3491
    %v3493 = vlaneseq
    %v3494 = vshrl.u32 %v3493, 7
    %v3495 = vsub.s32 %v3492, %v3494
    %v3496 = vrot.slane %v2206, %v3495
    %3497 = vrot.lane.b32.xlu0 %v3496, 32
    %v3498 = vpop.permute.xlu0 %3497
    %v3502 = vunpack.c.l.s4 1983009808
    %v3503 = vunpack.c.0.s8 %v3502
    %v3504 = vlaneseq
    %v3505 = vshrl.u32 %v3504, 7
    %v3506 = vsub.s32 %v3503, %v3505
    %v3507 = vrot.slane %v2754, %v3506
    %3508 = vrot.lane.b32.xlu0 %v3507, 48
    %v3509 = vpop.permute.xlu0 %3508
    %v3513 = vunpack.c.l.s4 1983009808
    %v3514 = vunpack.c.0.s8 %v3513
    %v3515 = vlaneseq
    %v3516 = vshrl.u32 %v3515, 7
    %v3517 = vsub.s32 %v3514, %v3516
    %v3518 = vrot.slane %v3483, %v3517
    %3519 = vrot.lane.b32.xlu0 %v3518, 64
    %v3520 = vpop.permute.xlu0 %3519
    %3523 = vrot.lane.b32.xlu0 %v3484, 80
    %v3524 = vpop.permute.xlu0 %3523
    %v3526 = vsel %vm601, %v1791, %v3487
    %v3527 = vsel %vm284, %v3526, %v3498
    %v3528 = vsel %vm1981, %v3527, %v3509
    %v3529 = vsel %vm2047, %v3528, %v3520
    %v3530 = vsel %vm2522, %v3529, %v3524
    %vm3531 = vcmask 910336
    %3532 = vst.msk [vmem:[#allocation26] sm:$0x3] %vm3531, %v3530
    // Predicated region
    $region106: #{tpu_custom_call.1} parent=1 // pred_check
      _
    $region107: #{tpu_custom_call.1} parent=1 // pred_check_branch
      %3534 = sbr.rel (0) target = $region109
    $region108: #{tpu_custom_call.1} parent=1 // pred_region
      %s3536 = ssub.s32 32, 32
      %3537 = vsyncadd [#allocation7], %s3536
      %s3539 = sshll.u32 [#allocation26], 4
      %s3540 = int_to_ptr.vmem [resolvable:$true] %s3539
      %3542 = dma.vmem_to_hbm [thread:$0]  %s3540, 32, %s13, [#allocation7]
    $region109: #{tpu_custom_call.1} parent=1 // pred_fallthru
      _
    // Predicated region
    $region110: #{tpu_custom_call.1} parent=1 // pred_check
      _
    $region111: #{tpu_custom_call.1} parent=1 // pred_check_branch
      %3544 = sbr.rel (0) target = $region113
    $region112: #{tpu_custom_call.1} parent=1 // pred_region
      %3545 = dma.done [#allocation7], 32
    $region113: #{tpu_custom_call.1} parent=1 // pred_fallthru
      _
    %3546 = vsyncpa [#allocation6], 1
    %3547 = vsyncpa [#allocation9], 1
    %3548 = vsyncpa [#allocation12], 1
    %3549 = vsyncpa [#allocation15], 1
    %3550 = vsyncpa [#allocation18], 1
    %3551 = vsyncpa [#allocation21], 1
    %3552 = vsyncpa [#allocation24], 1
    %3553 = vsyncpa [#allocation7], 1

</llo_original>
